<compile_context>
chip_gen: v6e
topology: v6e:2x2x1
jax: 0.10.0
libtpu: 0.0.40
codegen_flags: <defaults>
</compile_context>

<pallas_src>
import jax
import jax.numpy as jnp
from jax.experimental import pallas as pl
from jax.experimental.pallas import tpu as pltpu


def _make_conv3x3_kernel(has_add):
    """3x3 'same' conv + bias (+ optional fused residual add) on one batch element.

    Refs (NHWC, one batch element per grid step):
      x_ref:    (1, H, W, Cin)    unpadded input
      w_ref:    (3, 3*Cin, Cout)  weights laid out as (ky, kx*Cin + cin, cout)
      b_ref:    (1, Cout)         bias
      add_ref:  (1, H, W, Cout)   residual term (only in the has_add variant)
      o_ref:    (1, H, W, Cout)   output
      xpad_ref: (H+2, W+2, Cin)   VMEM scratch: zero-halo padded input
    """

    def kernel(*refs):
        if has_add:
            x_ref, w_ref, b_ref, add_ref, o_ref, xpad_ref = refs
        else:
            x_ref, w_ref, b_ref, o_ref, xpad_ref = refs
            add_ref = None

        _, H, W, Cin = x_ref.shape
        Cout = o_ref.shape[3]
        K = 3 * Cin

        # In-kernel zero halo (replaces the HBM-side jnp.pad of the previous version).
        # Only the 1-pixel border needs zeroing; the interior is rewritten every step.
        zrow = jnp.zeros((1, W + 2, Cin), xpad_ref.dtype)
        zcol = jnp.zeros((H + 2, 1, Cin), xpad_ref.dtype)
        xpad_ref[0:1, :, :] = zrow
        xpad_ref[H + 1:H + 2, :, :] = zrow
        xpad_ref[:, 0:1, :] = zcol
        xpad_ref[:, W + 1:W + 2, :] = zcol
        xpad_ref[1:H + 1, 1:W + 1, :] = x_ref[0]

        # 3 matmuls with contraction depth K = 3*Cin (kx folded into channels) instead of
        # 9 matmuls with K = Cin. Each tap is a fresh slice of the padded scratch ref, so
        # only one (H, W, 3*Cin) patch is live at a time.
        acc = jnp.zeros((H * W, Cout), jnp.float32)
        for ky in range(3):
            patch = jnp.concatenate(
                [xpad_ref[ky:ky + H, kx:kx + W, :] for kx in range(3)], axis=-1)
            patch = patch.reshape(H * W, K).astype(jnp.float32)
            acc = acc + jnp.dot(patch, w_ref[ky].astype(jnp.float32),
                                preferred_element_type=jnp.float32)

        acc = acc + b_ref[...].astype(jnp.float32)            # (1, Cout) broadcast
        if has_add:
            acc = acc + add_ref[0].reshape(H * W, Cout).astype(jnp.float32)
        o_ref[...] = acc.reshape(1, H, W, Cout).astype(o_ref.dtype)

    return kernel


_CONV_KERNEL = _make_conv3x3_kernel(has_add=False)
_CONV_ADD_KERNEL = _make_conv3x3_kernel(has_add=True)


def conv3x3_same_nhwc(x, w, b, add=None):
    """3x3 stride-1 'same' conv. x:(B,H,W,Cin), w:(3,3,Cin,Cout) HWIO, b:(Cout,).
    If `add` ((B,H,W,Cout)) is given, it is summed into the conv output inside the kernel."""
    B, H, W, Cin = x.shape
    Cout = w.shape[-1]
    w_k = w.reshape(3, 3 * Cin, Cout)          # fold kx into the contraction axis
    b2 = b.reshape(1, Cout)

    itemsize = jnp.dtype(x.dtype).itemsize
    block_elems = H * W * Cin + 9 * Cin * Cout + Cout + H * W * Cout
    if add is not None:
        block_elems += H * W * Cout
    bytes_per_step = block_elems * itemsize
    scratch_bytes = (H + 2) * (W + 2) * Cin * itemsize
    # 2x for double buffering + scratch + headroom; never below the 32 MiB default (so the
    # toy shapes behave identically on v5e/v6e/v7x), capped at 96 MiB for big-image blocks.
    vmem_limit = int(min(max(2 * bytes_per_step + scratch_bytes + (4 << 20), 32 << 20),
                         96 << 20))

    cost = pl.CostEstimate(
        flops=int(2 * 9 * B * H * W * Cin * Cout),
        transcendentals=0,
        bytes_accessed=int(B * bytes_per_step),
    )

    in_specs = [
        pl.BlockSpec((1, H, W, Cin), lambda i: (i, 0, 0, 0)),
        pl.BlockSpec((3, 3 * Cin, Cout), lambda i: (0, 0, 0)),
        pl.BlockSpec((1, Cout), lambda i: (0, 0)),
    ]
    args = [x, w_k, b2]
    if add is None:
        kernel = _CONV_KERNEL
    else:
        kernel = _CONV_ADD_KERNEL
        in_specs.append(pl.BlockSpec((1, H, W, Cout), lambda i: (i, 0, 0, 0)))
        args.append(add)

    return pl.pallas_call(
        kernel,
        out_shape=jax.ShapeDtypeStruct((B, H, W, Cout), x.dtype),
        grid=(B,),
        in_specs=in_specs,
        out_specs=pl.BlockSpec((1, H, W, Cout), lambda i: (i, 0, 0, 0)),
        scratch_shapes=[pltpu.VMEM((H + 2, W + 2, Cin), x.dtype)],
        compiler_params=pltpu.CompilerParams(
            dimension_semantics=("parallel",),
            vmem_limit_bytes=vmem_limit),
        cost_estimate=cost,
    )(*args)


def _avg_pool2x2_nhwc(x):
    B, H, W, C = x.shape
    return x.reshape(B, H // 2, 2, W // 2, 2, C).mean(axis=(2, 4))


def _nearest_up2_nhwc(x):
    return jnp.repeat(jnp.repeat(x, 2, axis=1), 2, axis=2)


def init_octave_conv_params(key, in_chn, out_chn, alphas=(0.5, 0.5), kernel=3):
    """Deterministic parameter init; PyTorch Conv2d shapes (OIHW), converted to HWIO."""
    alpha_in, alpha_out = alphas
    in_l = int(alpha_in * in_chn)
    in_h = in_chn - in_l
    out_l = int(alpha_out * out_chn)
    out_h = out_chn - out_l

    def mk(key, cin, cout):
        kw, kb = jax.random.split(key)
        w_oihw = jax.random.normal(kw, (cout, cin, kernel, kernel), jnp.float32) * 0.1
        b = jax.random.normal(kb, (cout,), jnp.float32) * 0.1
        return jnp.transpose(w_oihw, (2, 3, 1, 0)), b  # HWIO

    k1, k2, k3, k4 = jax.random.split(key, 4)
    params = {}
    params["w_htoh"], params["b_htoh"] = mk(k1, in_h, out_h)
    params["w_htol"], params["b_htol"] = mk(k2, in_h, out_l)
    params["w_ltol"], params["b_ltol"] = mk(k3, in_l, out_l)
    params["w_ltoh"], params["b_ltoh"] = mk(k4, in_l, out_h)
    return params


@jax.jit
def octave_conv_forward(high_nchw, low_nchw, params):
    """OctaveConv.forward with alphas=[0.5, 0.5], padding=1, kernel=3.
    Returns (high_out, low_out) in NCHW, matching the PyTorch module."""
    high = jnp.transpose(high_nchw, (0, 2, 3, 1))   # NCHW -> NHWC
    low = jnp.transpose(low_nchw, (0, 2, 3, 1))

    # low -> high: conv at low resolution, nearest-up x2, then fused as the htoh residual.
    ltoh_lo = conv3x3_same_nhwc(low, params["w_ltoh"], params["b_ltoh"])
    ltoh_up = _nearest_up2_nhwc(ltoh_lo)
    high_out = conv3x3_same_nhwc(high, params["w_htoh"], params["b_htoh"], add=ltoh_up)

    # high -> low: conv on 2x2 average-pooled high, then fused as the ltol residual.
    high_pool = _avg_pool2x2_nhwc(high)
    htol = conv3x3_same_nhwc(high_pool, params["w_htol"], params["b_htol"])
    low_out = conv3x3_same_nhwc(low, params["w_ltol"], params["b_ltol"], add=htol)

    return (jnp.transpose(high_out, (0, 3, 1, 2)),  # NHWC -> NCHW
            jnp.transpose(low_out, (0, 3, 1, 2)))


# -------------------- pure-JAX reference (NCHW, mirrors the PyTorch code) -----------
def _ref_conv_nchw(x, w_hwio, b):
    w_oihw = jnp.transpose(w_hwio, (3, 2, 0, 1))
    y = jax.lax.conv_general_dilated(
        x, w_oihw, (1, 1), ((1, 1), (1, 1)),
        dimension_numbers=("NCHW", "OIHW", "NCHW"))
    return y + b.reshape(1, -1, 1, 1)


def _ref_octave_forward(high, low, p):
    htoh = _ref_conv_nchw(high, p["w_htoh"], p["b_htoh"])
    B, C, H, W = high.shape
    high_pool = high.reshape(B, C, H // 2, 2, W // 2, 2).mean(axis=(3, 5))
    htol = _ref_conv_nchw(high_pool, p["w_htol"], p["b_htol"])
    ltol = _ref_conv_nchw(low, p["w_ltol"], p["b_ltol"])
    ltoh = _ref_conv_nchw(low, p["w_ltoh"], p["b_ltoh"])
    ltoh = jnp.repeat(jnp.repeat(ltoh, 2, axis=2), 2, axis=3)
    return htoh + ltoh, ltol + htol


if __name__ == "__main__":
    B, in_chn, out_chn, H, W = 2, 4, 4, 16, 16
    alpha_in, alpha_out = 0.5, 0.5
    in_l = int(alpha_in * in_chn)
    in_h = in_chn - in_l

    key = jax.random.PRNGKey(0)
    k_high, k_low, k_params = jax.random.split(key, 3)
    # Octave input is a (high, low) tuple: low has half the spatial resolution.
    high = jax.random.normal(k_high, (B, in_h, H, W), jnp.float32)
    low = jax.random.normal(k_low, (B, in_l, H // 2, W // 2), jnp.float32)

    params = init_octave_conv_params(k_params, in_chn, out_chn,
                                     alphas=(alpha_in, alpha_out), kernel=3)

    high_out, low_out = octave_conv_forward(high, low, params)
    jax.block_until_ready((high_out, low_out))

    ref_high, ref_low = _ref_octave_forward(high, low, params)
    assert high_out.shape == ref_high.shape and low_out.shape == ref_low.shape
    assert jnp.allclose(high_out, ref_high, atol=1e-3, rtol=1e-3)
    assert jnp.allclose(low_out, ref_low, atol=1e-3, rtol=1e-3)

    print("KERNEL_OK")
</pallas_src>

<mosaic_0001>
module attributes {stable_mosaic.version = 11 : i64} {
  func.func @kernel(%arg0: i32, %arg1: memref<1x8x8x2xf32, #tpu.memory_space<vmem>>, %arg2: memref<3x6x2xf32, #tpu.memory_space<vmem>>, %arg3: memref<1x2xf32, #tpu.memory_space<vmem>>, %arg4: memref<1x8x8x2xf32, #tpu.memory_space<vmem>>, %arg5: memref<10x10x2xf32, #tpu.memory_space<vmem>>) attributes {dimension_semantics = [#tpu.dimension_semantics<parallel>], iteration_bounds = array<i64: 2>, scalar_prefetch = 0 : i64, scratch_operands = 1 : i64, tpu.core_type = #tpu.core_type<tc>, window_params = [{transform_indices = @transform_0, window_bounds = array<i64: 1, 8, 8, 2>}, {pipeline_mode = #tpu.pipeline_mode<synchronous>, transform_indices = @transform_1, window_bounds = array<i64: 3, 6, 2>}, {pipeline_mode = #tpu.pipeline_mode<synchronous>, transform_indices = @transform_2, window_bounds = array<i64: 1, 2>}, {transform_indices = @transform_3, window_bounds = array<i64: 1, 8, 8, 2>}]} {
    %cst = arith.constant 0.000000e+00 : f32
    %0 = vector.broadcast %cst : f32 to vector<1x10x2xf32>
    %cst_0 = arith.constant 0.000000e+00 : f32
    %1 = vector.broadcast %cst_0 : f32 to vector<10x1x2xf32>
    %c0 = arith.constant 0 : index
    %c0_1 = arith.constant 0 : index
    %c0_2 = arith.constant 0 : index
    %2 = vector.load %arg5[%c0, %c0_1, %c0_2] : memref<10x10x2xf32, #tpu.memory_space<vmem>>, vector<1x10x2xf32>
    tpu.vector_store %arg5[%c0, %c0_1, %c0_2], %0 {strides = array<i32>} : memref<10x10x2xf32, #tpu.memory_space<vmem>>, vector<1x10x2xf32>,
    %c9 = arith.constant 9 : index
    %c0_3 = arith.constant 0 : index
    %c0_4 = arith.constant 0 : index
    %3 = vector.load %arg5[%c9, %c0_3, %c0_4] : memref<10x10x2xf32, #tpu.memory_space<vmem>>, vector<1x10x2xf32>
    tpu.vector_store %arg5[%c9, %c0_3, %c0_4], %0 {strides = array<i32>} : memref<10x10x2xf32, #tpu.memory_space<vmem>>, vector<1x10x2xf32>,
    %c0_5 = arith.constant 0 : index
    %c0_6 = arith.constant 0 : index
    %c0_7 = arith.constant 0 : index
    %4 = vector.load %arg5[%c0_5, %c0_6, %c0_7] : memref<10x10x2xf32, #tpu.memory_space<vmem>>, vector<10x1x2xf32>
    tpu.vector_store %arg5[%c0_5, %c0_6, %c0_7], %1 {strides = array<i32>} : memref<10x10x2xf32, #tpu.memory_space<vmem>>, vector<10x1x2xf32>,
    %c0_8 = arith.constant 0 : index
    %c9_9 = arith.constant 9 : index
    %c0_10 = arith.constant 0 : index
    %5 = vector.load %arg5[%c0_8, %c9_9, %c0_10] : memref<10x10x2xf32, #tpu.memory_space<vmem>>, vector<10x1x2xf32>
    tpu.vector_store %arg5[%c0_8, %c9_9, %c0_10], %1 {strides = array<i32>} : memref<10x10x2xf32, #tpu.memory_space<vmem>>, vector<10x1x2xf32>,
    %c0_11 = arith.constant 0 : index
    %c0_12 = arith.constant 0 : index
    %c0_13 = arith.constant 0 : index
    %c0_14 = arith.constant 0 : index
    %6 = vector.load %arg1[%c0_11, %c0_12, %c0_13, %c0_14] : memref<1x8x8x2xf32, #tpu.memory_space<vmem>>, vector<1x8x8x2xf32>
    %7 = vector.shape_cast %6 : vector<1x8x8x2xf32> to vector<8x8x2xf32>
    %c1 = arith.constant 1 : index
    %c1_15 = arith.constant 1 : index
    %c0_16 = arith.constant 0 : index
    %8 = vector.load %arg5[%c1, %c1_15, %c0_16] : memref<10x10x2xf32, #tpu.memory_space<vmem>>, vector<8x8x2xf32>
    tpu.vector_store %arg5[%c1, %c1_15, %c0_16], %7 {strides = array<i32>} : memref<10x10x2xf32, #tpu.memory_space<vmem>>, vector<8x8x2xf32>,
    %cst_17 = arith.constant 0.000000e+00 : f32
    %9 = vector.broadcast %cst_17 : f32 to vector<64x2xf32>
    %c0_18 = arith.constant 0 : index
    %c0_19 = arith.constant 0 : index
    %c0_20 = arith.constant 0 : index
    %10 = vector.load %arg5[%c0_18, %c0_19, %c0_20] : memref<10x10x2xf32, #tpu.memory_space<vmem>>, vector<8x8x2xf32>
    %c0_21 = arith.constant 0 : index
    %c1_22 = arith.constant 1 : index
    %c0_23 = arith.constant 0 : index
    %11 = vector.load %arg5[%c0_21, %c1_22, %c0_23] : memref<10x10x2xf32, #tpu.memory_space<vmem>>, vector<8x8x2xf32>
    %c0_24 = arith.constant 0 : index
    %c2 = arith.constant 2 : index
    %c0_25 = arith.constant 0 : index
    %12 = vector.load %arg5[%c0_24, %c2, %c0_25] : memref<10x10x2xf32, #tpu.memory_space<vmem>>, vector<8x8x2xf32>
    %13 = tpu.concatenate %10, %11, %12 in 2 : vector<8x8x2xf32>, vector<8x8x2xf32>, vector<8x8x2xf32> -> vector<8x8x6xf32>
    %14 = vector.shape_cast %13 : vector<8x8x6xf32> to vector<64x6xf32>
    %c0_26 = arith.constant 0 : index
    %c0_27 = arith.constant 0 : index
    %c0_28 = arith.constant 0 : index
    %15 = vector.load %arg2[%c0_26, %c0_27, %c0_28] : memref<3x6x2xf32, #tpu.memory_space<vmem>>, vector<1x6x2xf32>
    %16 = vector.shape_cast %15 : vector<1x6x2xf32> to vector<6x2xf32>
    %cst_29 = arith.constant dense<0.000000e+00> : vector<64x2xf32>
    %17 = tpu.matmul %14, %16, %cst_29 {dimension_numbers = #tpu.dot_dimension_numbers<[1], [0], [0], [1], [0, 0, 1, 1], [], []>} : vector<64x6xf32>, vector<6x2xf32>, vector<64x2xf32> -> vector<64x2xf32>
    %18 = arith.addf %9, %17 : vector<64x2xf32>
    %c1_30 = arith.constant 1 : index
    %c0_31 = arith.constant 0 : index
    %c0_32 = arith.constant 0 : index
    %19 = vector.load %arg5[%c1_30, %c0_31, %c0_32] : memref<10x10x2xf32, #tpu.memory_space<vmem>>, vector<8x8x2xf32>
    %c1_33 = arith.constant 1 : index
    %c1_34 = arith.constant 1 : index
    %c0_35 = arith.constant 0 : index
    %20 = vector.load %arg5[%c1_33, %c1_34, %c0_35] : memref<10x10x2xf32, #tpu.memory_space<vmem>>, vector<8x8x2xf32>
    %c1_36 = arith.constant 1 : index
    %c2_37 = arith.constant 2 : index
    %c0_38 = arith.constant 0 : index
    %21 = vector.load %arg5[%c1_36, %c2_37, %c0_38] : memref<10x10x2xf32, #tpu.memory_space<vmem>>, vector<8x8x2xf32>
    %22 = tpu.concatenate %19, %20, %21 in 2 : vector<8x8x2xf32>, vector<8x8x2xf32>, vector<8x8x2xf32> -> vector<8x8x6xf32>
    %23 = vector.shape_cast %22 : vector<8x8x6xf32> to vector<64x6xf32>
    %c1_39 = arith.constant 1 : index
    %c0_40 = arith.constant 0 : index
    %c0_41 = arith.constant 0 : index
    %24 = vector.load %arg2[%c1_39, %c0_40, %c0_41] : memref<3x6x2xf32, #tpu.memory_space<vmem>>, vector<1x6x2xf32>
    %25 = vector.shape_cast %24 : vector<1x6x2xf32> to vector<6x2xf32>
    %cst_42 = arith.constant dense<0.000000e+00> : vector<64x2xf32>
    %26 = tpu.matmul %23, %25, %cst_42 {dimension_numbers = #tpu.dot_dimension_numbers<[1], [0], [0], [1], [0, 0, 1, 1], [], []>} : vector<64x6xf32>, vector<6x2xf32>, vector<64x2xf32> -> vector<64x2xf32>
    %27 = arith.addf %18, %26 : vector<64x2xf32>
    %c2_43 = arith.constant 2 : index
    %c0_44 = arith.constant 0 : index
    %c0_45 = arith.constant 0 : index
    %28 = vector.load %arg5[%c2_43, %c0_44, %c0_45] : memref<10x10x2xf32, #tpu.memory_space<vmem>>, vector<8x8x2xf32>
    %c2_46 = arith.constant 2 : index
    %c1_47 = arith.constant 1 : index
    %c0_48 = arith.constant 0 : index
    %29 = vector.load %arg5[%c2_46, %c1_47, %c0_48] : memref<10x10x2xf32, #tpu.memory_space<vmem>>, vector<8x8x2xf32>
    %c2_49 = arith.constant 2 : index
    %c2_50 = arith.constant 2 : index
    %c0_51 = arith.constant 0 : index
    %30 = vector.load %arg5[%c2_49, %c2_50, %c0_51] : memref<10x10x2xf32, #tpu.memory_space<vmem>>, vector<8x8x2xf32>
    %31 = tpu.concatenate %28, %29, %30 in 2 : vector<8x8x2xf32>, vector<8x8x2xf32>, vector<8x8x2xf32> -> vector<8x8x6xf32>
    %32 = vector.shape_cast %31 : vector<8x8x6xf32> to vector<64x6xf32>
    %c2_52 = arith.constant 2 : index
    %c0_53 = arith.constant 0 : index
    %c0_54 = arith.constant 0 : index
    %33 = vector.load %arg2[%c2_52, %c0_53, %c0_54] : memref<3x6x2xf32, #tpu.memory_space<vmem>>, vector<1x6x2xf32>
    %34 = vector.shape_cast %33 : vector<1x6x2xf32> to vector<6x2xf32>
    %cst_55 = arith.constant dense<0.000000e+00> : vector<64x2xf32>
    %35 = tpu.matmul %32, %34, %cst_55 {dimension_numbers = #tpu.dot_dimension_numbers<[1], [0], [0], [1], [0, 0, 1, 1], [], []>} : vector<64x6xf32>, vector<6x2xf32>, vector<64x2xf32> -> vector<64x2xf32>
    %36 = arith.addf %27, %35 : vector<64x2xf32>
    %c0_56 = arith.constant 0 : index
    %c0_57 = arith.constant 0 : index
    %37 = vector.load %arg3[%c0_56, %c0_57] : memref<1x2xf32, #tpu.memory_space<vmem>>, vector<1x2xf32>
    %38 = vector.broadcast %37 : vector<1x2xf32> to vector<64x2xf32>
    %39 = arith.addf %36, %38 : vector<64x2xf32>
    %40 = vector.shape_cast %39 : vector<64x2xf32> to vector<1x8x8x2xf32>
    %c0_58 = arith.constant 0 : index
    %c0_59 = arith.constant 0 : index
    %c0_60 = arith.constant 0 : index
    %c0_61 = arith.constant 0 : index
    %41 = vector.load %arg4[%c0_58, %c0_59, %c0_60, %c0_61] : memref<1x8x8x2xf32, #tpu.memory_space<vmem>>, vector<1x8x8x2xf32>
    tpu.vector_store %arg4[%c0_58, %c0_59, %c0_60, %c0_61], %40 {strides = array<i32>} : memref<1x8x8x2xf32, #tpu.memory_space<vmem>>, vector<1x8x8x2xf32>,
    return
  }
  func.func @transform_0(%arg0: i32) -> (i32, i32, i32, i32) {
    %c0_i32 = arith.constant 0 : i32
    %c0_i32_0 = arith.constant 0 : i32
    %c0_i32_1 = arith.constant 0 : i32
    %c0_i32_2 = arith.constant 0 : i32
    return %arg0, %c0_i32, %c0_i32_0, %c0_i32_1 : i32, i32, i32, i32
  }
  func.func @transform_1(%arg0: i32) -> (i32, i32, i32) {
    %c0_i32 = arith.constant 0 : i32
    %c0_i32_0 = arith.constant 0 : i32
    %c0_i32_1 = arith.constant 0 : i32
    %c0_i32_2 = arith.constant 0 : i32
    return %c0_i32, %c0_i32_0, %c0_i32_1 : i32, i32, i32
  }
  func.func @transform_2(%arg0: i32) -> (i32, i32) {
    %c0_i32 = arith.constant 0 : i32
    %c0_i32_0 = arith.constant 0 : i32
    %c0_i32_1 = arith.constant 0 : i32
    return %c0_i32, %c0_i32_0 : i32, i32
  }
  func.func @transform_3(%arg0: i32) -> (i32, i32, i32, i32) {
    %c0_i32 = arith.constant 0 : i32
    %c0_i32_0 = arith.constant 0 : i32
    %c0_i32_1 = arith.constant 0 : i32
    %c0_i32_2 = arith.constant 0 : i32
    return %arg0, %c0_i32, %c0_i32_0, %c0_i32_1 : i32, i32, i32, i32
  }
}

module attributes {stable_mosaic.version = 11 : i64} {
  func.func @kernel(%arg0: i32, %arg1: memref<1x16x16x2xf32, #tpu.memory_space<vmem>>, %arg2: memref<3x6x2xf32, #tpu.memory_space<vmem>>, %arg3: memref<1x2xf32, #tpu.memory_space<vmem>>, %arg4: memref<1x16x16x2xf32, #tpu.memory_space<vmem>>, %arg5: memref<1x16x16x2xf32, #tpu.memory_space<vmem>>, %arg6: memref<18x18x2xf32, #tpu.memory_space<vmem>>) attributes {dimension_semantics = [#tpu.dimension_semantics<parallel>], iteration_bounds = array<i64: 2>, scalar_prefetch = 0 : i64, scratch_operands = 1 : i64, tpu.core_type = #tpu.core_type<tc>, window_params = [{transform_indices = @transform_0, window_bounds = array<i64: 1, 16, 16, 2>}, {pipeline_mode = #tpu.pipeline_mode<synchronous>, transform_indices = @transform_1, window_bounds = array<i64: 3, 6, 2>}, {pipeline_mode = #tpu.pipeline_mode<synchronous>, transform_indices = @transform_2, window_bounds = array<i64: 1, 2>}, {transform_indices = @transform_3, window_bounds = array<i64: 1, 16, 16, 2>}, {transform_indices = @transform_4, window_bounds = array<i64: 1, 16, 16, 2>}]} {
    %cst = arith.constant 0.000000e+00 : f32
    %0 = vector.broadcast %cst : f32 to vector<1x18x2xf32>
    %cst_0 = arith.constant 0.000000e+00 : f32
    %1 = vector.broadcast %cst_0 : f32 to vector<18x1x2xf32>
    %c0 = arith.constant 0 : index
    %c0_1 = arith.constant 0 : index
    %c0_2 = arith.constant 0 : index
    %2 = vector.load %arg6[%c0, %c0_1, %c0_2] : memref<18x18x2xf32, #tpu.memory_space<vmem>>, vector<1x18x2xf32>
    tpu.vector_store %arg6[%c0, %c0_1, %c0_2], %0 {strides = array<i32>} : memref<18x18x2xf32, #tpu.memory_space<vmem>>, vector<1x18x2xf32>,
    %c17 = arith.constant 17 : index
    %c0_3 = arith.constant 0 : index
    %c0_4 = arith.constant 0 : index
    %3 = vector.load %arg6[%c17, %c0_3, %c0_4] : memref<18x18x2xf32, #tpu.memory_space<vmem>>, vector<1x18x2xf32>
    tpu.vector_store %arg6[%c17, %c0_3, %c0_4], %0 {strides = array<i32>} : memref<18x18x2xf32, #tpu.memory_space<vmem>>, vector<1x18x2xf32>,
    %c0_5 = arith.constant 0 : index
    %c0_6 = arith.constant 0 : index
    %c0_7 = arith.constant 0 : index
    %4 = vector.load %arg6[%c0_5, %c0_6, %c0_7] : memref<18x18x2xf32, #tpu.memory_space<vmem>>, vector<18x1x2xf32>
    tpu.vector_store %arg6[%c0_5, %c0_6, %c0_7], %1 {strides = array<i32>} : memref<18x18x2xf32, #tpu.memory_space<vmem>>, vector<18x1x2xf32>,
    %c0_8 = arith.constant 0 : index
    %c17_9 = arith.constant 17 : index
    %c0_10 = arith.constant 0 : index
    %5 = vector.load %arg6[%c0_8, %c17_9, %c0_10] : memref<18x18x2xf32, #tpu.memory_space<vmem>>, vector<18x1x2xf32>
    tpu.vector_store %arg6[%c0_8, %c17_9, %c0_10], %1 {strides = array<i32>} : memref<18x18x2xf32, #tpu.memory_space<vmem>>, vector<18x1x2xf32>,
    %c0_11 = arith.constant 0 : index
    %c0_12 = arith.constant 0 : index
    %c0_13 = arith.constant 0 : index
    %c0_14 = arith.constant 0 : index
    %6 = vector.load %arg1[%c0_11, %c0_12, %c0_13, %c0_14] : memref<1x16x16x2xf32, #tpu.memory_space<vmem>>, vector<1x16x16x2xf32>
    %7 = vector.shape_cast %6 : vector<1x16x16x2xf32> to vector<16x16x2xf32>
    %c1 = arith.constant 1 : index
    %c1_15 = arith.constant 1 : index
    %c0_16 = arith.constant 0 : index
    %8 = vector.load %arg6[%c1, %c1_15, %c0_16] : memref<18x18x2xf32, #tpu.memory_space<vmem>>, vector<16x16x2xf32>
    tpu.vector_store %arg6[%c1, %c1_15, %c0_16], %7 {strides = array<i32>} : memref<18x18x2xf32, #tpu.memory_space<vmem>>, vector<16x16x2xf32>,
    %cst_17 = arith.constant 0.000000e+00 : f32
    %9 = vector.broadcast %cst_17 : f32 to vector<256x2xf32>
    %c0_18 = arith.constant 0 : index
    %c0_19 = arith.constant 0 : index
    %c0_20 = arith.constant 0 : index
    %10 = vector.load %arg6[%c0_18, %c0_19, %c0_20] : memref<18x18x2xf32, #tpu.memory_space<vmem>>, vector<16x16x2xf32>
    %c0_21 = arith.constant 0 : index
    %c1_22 = arith.constant 1 : index
    %c0_23 = arith.constant 0 : index
    %11 = vector.load %arg6[%c0_21, %c1_22, %c0_23] : memref<18x18x2xf32, #tpu.memory_space<vmem>>, vector<16x16x2xf32>
    %c0_24 = arith.constant 0 : index
    %c2 = arith.constant 2 : index
    %c0_25 = arith.constant 0 : index
    %12 = vector.load %arg6[%c0_24, %c2, %c0_25] : memref<18x18x2xf32, #tpu.memory_space<vmem>>, vector<16x16x2xf32>
    %13 = tpu.concatenate %10, %11, %12 in 2 : vector<16x16x2xf32>, vector<16x16x2xf32>, vector<16x16x2xf32> -> vector<16x16x6xf32>
    %14 = vector.shape_cast %13 : vector<16x16x6xf32> to vector<256x6xf32>
    %c0_26 = arith.constant 0 : index
    %c0_27 = arith.constant 0 : index
    %c0_28 = arith.constant 0 : index
    %15 = vector.load %arg2[%c0_26, %c0_27, %c0_28] : memref<3x6x2xf32, #tpu.memory_space<vmem>>, vector<1x6x2xf32>
    %16 = vector.shape_cast %15 : vector<1x6x2xf32> to vector<6x2xf32>
    %cst_29 = arith.constant dense<0.000000e+00> : vector<256x2xf32>
    %17 = tpu.matmul %14, %16, %cst_29 {dimension_numbers = #tpu.dot_dimension_numbers<[1], [0], [0], [1], [0, 0, 1, 1], [], []>} : vector<256x6xf32>, vector<6x2xf32>, vector<256x2xf32> -> vector<256x2xf32>
    %18 = arith.addf %9, %17 : vector<256x2xf32>
    %c1_30 = arith.constant 1 : index
    %c0_31 = arith.constant 0 : index
    %c0_32 = arith.constant 0 : index
    %19 = vector.load %arg6[%c1_30, %c0_31, %c0_32] : memref<18x18x2xf32, #tpu.memory_space<vmem>>, vector<16x16x2xf32>
    %c1_33 = arith.constant 1 : index
    %c1_34 = arith.constant 1 : index
    %c0_35 = arith.constant 0 : index
    %20 = vector.load %arg6[%c1_33, %c1_34, %c0_35] : memref<18x18x2xf32, #tpu.memory_space<vmem>>, vector<16x16x2xf32>
    %c1_36 = arith.constant 1 : index
    %c2_37 = arith.constant 2 : index
    %c0_38 = arith.constant 0 : index
    %21 = vector.load %arg6[%c1_36, %c2_37, %c0_38] : memref<18x18x2xf32, #tpu.memory_space<vmem>>, vector<16x16x2xf32>
    %22 = tpu.concatenate %19, %20, %21 in 2 : vector<16x16x2xf32>, vector<16x16x2xf32>, vector<16x16x2xf32> -> vector<16x16x6xf32>
    %23 = vector.shape_cast %22 : vector<16x16x6xf32> to vector<256x6xf32>
    %c1_39 = arith.constant 1 : index
    %c0_40 = arith.constant 0 : index
    %c0_41 = arith.constant 0 : index
    %24 = vector.load %arg2[%c1_39, %c0_40, %c0_41] : memref<3x6x2xf32, #tpu.memory_space<vmem>>, vector<1x6x2xf32>
    %25 = vector.shape_cast %24 : vector<1x6x2xf32> to vector<6x2xf32>
    %cst_42 = arith.constant dense<0.000000e+00> : vector<256x2xf32>
    %26 = tpu.matmul %23, %25, %cst_42 {dimension_numbers = #tpu.dot_dimension_numbers<[1], [0], [0], [1], [0, 0, 1, 1], [], []>} : vector<256x6xf32>, vector<6x2xf32>, vector<256x2xf32> -> vector<256x2xf32>
    %27 = arith.addf %18, %26 : vector<256x2xf32>
    %c2_43 = arith.constant 2 : index
    %c0_44 = arith.constant 0 : index
    %c0_45 = arith.constant 0 : index
    %28 = vector.load %arg6[%c2_43, %c0_44, %c0_45] : memref<18x18x2xf32, #tpu.memory_space<vmem>>, vector<16x16x2xf32>
    %c2_46 = arith.constant 2 : index
    %c1_47 = arith.constant 1 : index
    %c0_48 = arith.constant 0 : index
    %29 = vector.load %arg6[%c2_46, %c1_47, %c0_48] : memref<18x18x2xf32, #tpu.memory_space<vmem>>, vector<16x16x2xf32>
    %c2_49 = arith.constant 2 : index
    %c2_50 = arith.constant 2 : index
    %c0_51 = arith.constant 0 : index
    %30 = vector.load %arg6[%c2_49, %c2_50, %c0_51] : memref<18x18x2xf32, #tpu.memory_space<vmem>>, vector<16x16x2xf32>
    %31 = tpu.concatenate %28, %29, %30 in 2 : vector<16x16x2xf32>, vector<16x16x2xf32>, vector<16x16x2xf32> -> vector<16x16x6xf32>
    %32 = vector.shape_cast %31 : vector<16x16x6xf32> to vector<256x6xf32>
    %c2_52 = arith.constant 2 : index
    %c0_53 = arith.constant 0 : index
    %c0_54 = arith.constant 0 : index
    %33 = vector.load %arg2[%c2_52, %c0_53, %c0_54] : memref<3x6x2xf32, #tpu.memory_space<vmem>>, vector<1x6x2xf32>
    %34 = vector.shape_cast %33 : vector<1x6x2xf32> to vector<6x2xf32>
    %cst_55 = arith.constant dense<0.000000e+00> : vector<256x2xf32>
    %35 = tpu.matmul %32, %34, %cst_55 {dimension_numbers = #tpu.dot_dimension_numbers<[1], [0], [0], [1], [0, 0, 1, 1], [], []>} : vector<256x6xf32>, vector<6x2xf32>, vector<256x2xf32> -> vector<256x2xf32>
    %36 = arith.addf %27, %35 : vector<256x2xf32>
    %c0_56 = arith.constant 0 : index
    %c0_57 = arith.constant 0 : index
    %37 = vector.load %arg3[%c0_56, %c0_57] : memref<1x2xf32, #tpu.memory_space<vmem>>, vector<1x2xf32>
    %38 = vector.broadcast %37 : vector<1x2xf32> to vector<256x2xf32>
    %39 = arith.addf %36, %38 : vector<256x2xf32>
    %c0_58 = arith.constant 0 : index
    %c0_59 = arith.constant 0 : index
    %c0_60 = arith.constant 0 : index
    %c0_61 = arith.constant 0 : index
    %40 = vector.load %arg4[%c0_58, %c0_59, %c0_60, %c0_61] : memref<1x16x16x2xf32, #tpu.memory_space<vmem>>, vector<1x16x16x2xf32>
    %41 = vector.shape_cast %40 : vector<1x16x16x2xf32> to vector<16x16x2xf32>
    %42 = vector.shape_cast %41 : vector<16x16x2xf32> to vector<256x2xf32>
    %43 = arith.addf %39, %42 : vector<256x2xf32>
    %44 = vector.shape_cast %43 : vector<256x2xf32> to vector<1x16x16x2xf32>
    %c0_62 = arith.constant 0 : index
    %c0_63 = arith.constant 0 : index
    %c0_64 = arith.constant 0 : index
    %c0_65 = arith.constant 0 : index
    %45 = vector.load %arg5[%c0_62, %c0_63, %c0_64, %c0_65] : memref<1x16x16x2xf32, #tpu.memory_space<vmem>>, vector<1x16x16x2xf32>
    tpu.vector_store %arg5[%c0_62, %c0_63, %c0_64, %c0_65], %44 {strides = array<i32>} : memref<1x16x16x2xf32, #tpu.memory_space<vmem>>, vector<1x16x16x2xf32>,
    return
  }
  func.func @transform_0(%arg0: i32) -> (i32, i32, i32, i32) {
    %c0_i32 = arith.constant 0 : i32
    %c0_i32_0 = arith.constant 0 : i32
    %c0_i32_1 = arith.constant 0 : i32
    %c0_i32_2 = arith.constant 0 : i32
    return %arg0, %c0_i32, %c0_i32_0, %c0_i32_1 : i32, i32, i32, i32
  }
  func.func @transform_1(%arg0: i32) -> (i32, i32, i32) {
    %c0_i32 = arith.constant 0 : i32
    %c0_i32_0 = arith.constant 0 : i32
    %c0_i32_1 = arith.constant 0 : i32
    %c0_i32_2 = arith.constant 0 : i32
    return %c0_i32, %c0_i32_0, %c0_i32_1 : i32, i32, i32
  }
  func.func @transform_2(%arg0: i32) -> (i32, i32) {
    %c0_i32 = arith.constant 0 : i32
    %c0_i32_0 = arith.constant 0 : i32
    %c0_i32_1 = arith.constant 0 : i32
    return %c0_i32, %c0_i32_0 : i32, i32
  }
  func.func @transform_3(%arg0: i32) -> (i32, i32, i32, i32) {
    %c0_i32 = arith.constant 0 : i32
    %c0_i32_0 = arith.constant 0 : i32
    %c0_i32_1 = arith.constant 0 : i32
    %c0_i32_2 = arith.constant 0 : i32
    return %arg0, %c0_i32, %c0_i32_0, %c0_i32_1 : i32, i32, i32, i32
  }
  func.func @transform_4(%arg0: i32) -> (i32, i32, i32, i32) {
    %c0_i32 = arith.constant 0 : i32
    %c0_i32_0 = arith.constant 0 : i32
    %c0_i32_1 = arith.constant 0 : i32
    %c0_i32_2 = arith.constant 0 : i32
    return %arg0, %c0_i32, %c0_i32_0, %c0_i32_1 : i32, i32, i32, i32
  }
}

module attributes {stable_mosaic.version = 11 : i64} {
  func.func @kernel(%arg0: i32, %arg1: memref<1x8x8x2xf32, #tpu.memory_space<vmem>>, %arg2: memref<3x6x2xf32, #tpu.memory_space<vmem>>, %arg3: memref<1x2xf32, #tpu.memory_space<vmem>>, %arg4: memref<1x8x8x2xf32, #tpu.memory_space<vmem>>, %arg5: memref<1x8x8x2xf32, #tpu.memory_space<vmem>>, %arg6: memref<10x10x2xf32, #tpu.memory_space<vmem>>) attributes {dimension_semantics = [#tpu.dimension_semantics<parallel>], iteration_bounds = array<i64: 2>, scalar_prefetch = 0 : i64, scratch_operands = 1 : i64, tpu.core_type = #tpu.core_type<tc>, window_params = [{transform_indices = @transform_0, window_bounds = array<i64: 1, 8, 8, 2>}, {pipeline_mode = #tpu.pipeline_mode<synchronous>, transform_indices = @transform_1, window_bounds = array<i64: 3, 6, 2>}, {pipeline_mode = #tpu.pipeline_mode<synchronous>, transform_indices = @transform_2, window_bounds = array<i64: 1, 2>}, {transform_indices = @transform_3, window_bounds = array<i64: 1, 8, 8, 2>}, {transform_indices = @transform_4, window_bounds = array<i64: 1, 8, 8, 2>}]} {
    %cst = arith.constant 0.000000e+00 : f32
    %0 = vector.broadcast %cst : f32 to vector<1x10x2xf32>
    %cst_0 = arith.constant 0.000000e+00 : f32
    %1 = vector.broadcast %cst_0 : f32 to vector<10x1x2xf32>
    %c0 = arith.constant 0 : index
    %c0_1 = arith.constant 0 : index
    %c0_2 = arith.constant 0 : index
    %2 = vector.load %arg6[%c0, %c0_1, %c0_2] : memref<10x10x2xf32, #tpu.memory_space<vmem>>, vector<1x10x2xf32>
    tpu.vector_store %arg6[%c0, %c0_1, %c0_2], %0 {strides = array<i32>} : memref<10x10x2xf32, #tpu.memory_space<vmem>>, vector<1x10x2xf32>,
    %c9 = arith.constant 9 : index
    %c0_3 = arith.constant 0 : index
    %c0_4 = arith.constant 0 : index
    %3 = vector.load %arg6[%c9, %c0_3, %c0_4] : memref<10x10x2xf32, #tpu.memory_space<vmem>>, vector<1x10x2xf32>
    tpu.vector_store %arg6[%c9, %c0_3, %c0_4], %0 {strides = array<i32>} : memref<10x10x2xf32, #tpu.memory_space<vmem>>, vector<1x10x2xf32>,
    %c0_5 = arith.constant 0 : index
    %c0_6 = arith.constant 0 : index
    %c0_7 = arith.constant 0 : index
    %4 = vector.load %arg6[%c0_5, %c0_6, %c0_7] : memref<10x10x2xf32, #tpu.memory_space<vmem>>, vector<10x1x2xf32>
    tpu.vector_store %arg6[%c0_5, %c0_6, %c0_7], %1 {strides = array<i32>} : memref<10x10x2xf32, #tpu.memory_space<vmem>>, vector<10x1x2xf32>,
    %c0_8 = arith.constant 0 : index
    %c9_9 = arith.constant 9 : index
    %c0_10 = arith.constant 0 : index
    %5 = vector.load %arg6[%c0_8, %c9_9, %c0_10] : memref<10x10x2xf32, #tpu.memory_space<vmem>>, vector<10x1x2xf32>
    tpu.vector_store %arg6[%c0_8, %c9_9, %c0_10], %1 {strides = array<i32>} : memref<10x10x2xf32, #tpu.memory_space<vmem>>, vector<10x1x2xf32>,
    %c0_11 = arith.constant 0 : index
    %c0_12 = arith.constant 0 : index
    %c0_13 = arith.constant 0 : index
    %c0_14 = arith.constant 0 : index
    %6 = vector.load %arg1[%c0_11, %c0_12, %c0_13, %c0_14] : memref<1x8x8x2xf32, #tpu.memory_space<vmem>>, vector<1x8x8x2xf32>
    %7 = vector.shape_cast %6 : vector<1x8x8x2xf32> to vector<8x8x2xf32>
    %c1 = arith.constant 1 : index
    %c1_15 = arith.constant 1 : index
    %c0_16 = arith.constant 0 : index
    %8 = vector.load %arg6[%c1, %c1_15, %c0_16] : memref<10x10x2xf32, #tpu.memory_space<vmem>>, vector<8x8x2xf32>
    tpu.vector_store %arg6[%c1, %c1_15, %c0_16], %7 {strides = array<i32>} : memref<10x10x2xf32, #tpu.memory_space<vmem>>, vector<8x8x2xf32>,
    %cst_17 = arith.constant 0.000000e+00 : f32
    %9 = vector.broadcast %cst_17 : f32 to vector<64x2xf32>
    %c0_18 = arith.constant 0 : index
    %c0_19 = arith.constant 0 : index
    %c0_20 = arith.constant 0 : index
    %10 = vector.load %arg6[%c0_18, %c0_19, %c0_20] : memref<10x10x2xf32, #tpu.memory_space<vmem>>, vector<8x8x2xf32>
    %c0_21 = arith.constant 0 : index
    %c1_22 = arith.constant 1 : index
    %c0_23 = arith.constant 0 : index
    %11 = vector.load %arg6[%c0_21, %c1_22, %c0_23] : memref<10x10x2xf32, #tpu.memory_space<vmem>>, vector<8x8x2xf32>
    %c0_24 = arith.constant 0 : index
    %c2 = arith.constant 2 : index
    %c0_25 = arith.constant 0 : index
    %12 = vector.load %arg6[%c0_24, %c2, %c0_25] : memref<10x10x2xf32, #tpu.memory_space<vmem>>, vector<8x8x2xf32>
    %13 = tpu.concatenate %10, %11, %12 in 2 : vector<8x8x2xf32>, vector<8x8x2xf32>, vector<8x8x2xf32> -> vector<8x8x6xf32>
    %14 = vector.shape_cast %13 : vector<8x8x6xf32> to vector<64x6xf32>
    %c0_26 = arith.constant 0 : index
    %c0_27 = arith.constant 0 : index
    %c0_28 = arith.constant 0 : index
    %15 = vector.load %arg2[%c0_26, %c0_27, %c0_28] : memref<3x6x2xf32, #tpu.memory_space<vmem>>, vector<1x6x2xf32>
    %16 = vector.shape_cast %15 : vector<1x6x2xf32> to vector<6x2xf32>
    %cst_29 = arith.constant dense<0.000000e+00> : vector<64x2xf32>
    %17 = tpu.matmul %14, %16, %cst_29 {dimension_numbers = #tpu.dot_dimension_numbers<[1], [0], [0], [1], [0, 0, 1, 1], [], []>} : vector<64x6xf32>, vector<6x2xf32>, vector<64x2xf32> -> vector<64x2xf32>
    %18 = arith.addf %9, %17 : vector<64x2xf32>
    %c1_30 = arith.constant 1 : index
    %c0_31 = arith.constant 0 : index
    %c0_32 = arith.constant 0 : index
    %19 = vector.load %arg6[%c1_30, %c0_31, %c0_32] : memref<10x10x2xf32, #tpu.memory_space<vmem>>, vector<8x8x2xf32>
    %c1_33 = arith.constant 1 : index
    %c1_34 = arith.constant 1 : index
    %c0_35 = arith.constant 0 : index
    %20 = vector.load %arg6[%c1_33, %c1_34, %c0_35] : memref<10x10x2xf32, #tpu.memory_space<vmem>>, vector<8x8x2xf32>
    %c1_36 = arith.constant 1 : index
    %c2_37 = arith.constant 2 : index
    %c0_38 = arith.constant 0 : index
    %21 = vector.load %arg6[%c1_36, %c2_37, %c0_38] : memref<10x10x2xf32, #tpu.memory_space<vmem>>, vector<8x8x2xf32>
    %22 = tpu.concatenate %19, %20, %21 in 2 : vector<8x8x2xf32>, vector<8x8x2xf32>, vector<8x8x2xf32> -> vector<8x8x6xf32>
    %23 = vector.shape_cast %22 : vector<8x8x6xf32> to vector<64x6xf32>
    %c1_39 = arith.constant 1 : index
    %c0_40 = arith.constant 0 : index
    %c0_41 = arith.constant 0 : index
    %24 = vector.load %arg2[%c1_39, %c0_40, %c0_41] : memref<3x6x2xf32, #tpu.memory_space<vmem>>, vector<1x6x2xf32>
    %25 = vector.shape_cast %24 : vector<1x6x2xf32> to vector<6x2xf32>
    %cst_42 = arith.constant dense<0.000000e+00> : vector<64x2xf32>
    %26 = tpu.matmul %23, %25, %cst_42 {dimension_numbers = #tpu.dot_dimension_numbers<[1], [0], [0], [1], [0, 0, 1, 1], [], []>} : vector<64x6xf32>, vector<6x2xf32>, vector<64x2xf32> -> vector<64x2xf32>
    %27 = arith.addf %18, %26 : vector<64x2xf32>
    %c2_43 = arith.constant 2 : index
    %c0_44 = arith.constant 0 : index
    %c0_45 = arith.constant 0 : index
    %28 = vector.load %arg6[%c2_43, %c0_44, %c0_45] : memref<10x10x2xf32, #tpu.memory_space<vmem>>, vector<8x8x2xf32>
    %c2_46 = arith.constant 2 : index
    %c1_47 = arith.constant 1 : index
    %c0_48 = arith.constant 0 : index
    %29 = vector.load %arg6[%c2_46, %c1_47, %c0_48] : memref<10x10x2xf32, #tpu.memory_space<vmem>>, vector<8x8x2xf32>
    %c2_49 = arith.constant 2 : index
    %c2_50 = arith.constant 2 : index
    %c0_51 = arith.constant 0 : index
    %30 = vector.load %arg6[%c2_49, %c2_50, %c0_51] : memref<10x10x2xf32, #tpu.memory_space<vmem>>, vector<8x8x2xf32>
    %31 = tpu.concatenate %28, %29, %30 in 2 : vector<8x8x2xf32>, vector<8x8x2xf32>, vector<8x8x2xf32> -> vector<8x8x6xf32>
    %32 = vector.shape_cast %31 : vector<8x8x6xf32> to vector<64x6xf32>
    %c2_52 = arith.constant 2 : index
    %c0_53 = arith.constant 0 : index
    %c0_54 = arith.constant 0 : index
    %33 = vector.load %arg2[%c2_52, %c0_53, %c0_54] : memref<3x6x2xf32, #tpu.memory_space<vmem>>, vector<1x6x2xf32>
    %34 = vector.shape_cast %33 : vector<1x6x2xf32> to vector<6x2xf32>
    %cst_55 = arith.constant dense<0.000000e+00> : vector<64x2xf32>
    %35 = tpu.matmul %32, %34, %cst_55 {dimension_numbers = #tpu.dot_dimension_numbers<[1], [0], [0], [1], [0, 0, 1, 1], [], []>} : vector<64x6xf32>, vector<6x2xf32>, vector<64x2xf32> -> vector<64x2xf32>
    %36 = arith.addf %27, %35 : vector<64x2xf32>
    %c0_56 = arith.constant 0 : index
    %c0_57 = arith.constant 0 : index
    %37 = vector.load %arg3[%c0_56, %c0_57] : memref<1x2xf32, #tpu.memory_space<vmem>>, vector<1x2xf32>
    %38 = vector.broadcast %37 : vector<1x2xf32> to vector<64x2xf32>
    %39 = arith.addf %36, %38 : vector<64x2xf32>
    %c0_58 = arith.constant 0 : index
    %c0_59 = arith.constant 0 : index
    %c0_60 = arith.constant 0 : index
    %c0_61 = arith.constant 0 : index
    %40 = vector.load %arg4[%c0_58, %c0_59, %c0_60, %c0_61] : memref<1x8x8x2xf32, #tpu.memory_space<vmem>>, vector<1x8x8x2xf32>
    %41 = vector.shape_cast %40 : vector<1x8x8x2xf32> to vector<8x8x2xf32>
    %42 = vector.shape_cast %41 : vector<8x8x2xf32> to vector<64x2xf32>
    %43 = arith.addf %39, %42 : vector<64x2xf32>
    %44 = vector.shape_cast %43 : vector<64x2xf32> to vector<1x8x8x2xf32>
    %c0_62 = arith.constant 0 : index
    %c0_63 = arith.constant 0 : index
    %c0_64 = arith.constant 0 : index
    %c0_65 = arith.constant 0 : index
    %45 = vector.load %arg5[%c0_62, %c0_63, %c0_64, %c0_65] : memref<1x8x8x2xf32, #tpu.memory_space<vmem>>, vector<1x8x8x2xf32>
    tpu.vector_store %arg5[%c0_62, %c0_63, %c0_64, %c0_65], %44 {strides = array<i32>} : memref<1x8x8x2xf32, #tpu.memory_space<vmem>>, vector<1x8x8x2xf32>,
    return
  }
  func.func @transform_0(%arg0: i32) -> (i32, i32, i32, i32) {
    %c0_i32 = arith.constant 0 : i32
    %c0_i32_0 = arith.constant 0 : i32
    %c0_i32_1 = arith.constant 0 : i32
    %c0_i32_2 = arith.constant 0 : i32
    return %arg0, %c0_i32, %c0_i32_0, %c0_i32_1 : i32, i32, i32, i32
  }
  func.func @transform_1(%arg0: i32) -> (i32, i32, i32) {
    %c0_i32 = arith.constant 0 : i32
    %c0_i32_0 = arith.constant 0 : i32
    %c0_i32_1 = arith.constant 0 : i32
    %c0_i32_2 = arith.constant 0 : i32
    return %c0_i32, %c0_i32_0, %c0_i32_1 : i32, i32, i32
  }
  func.func @transform_2(%arg0: i32) -> (i32, i32) {
    %c0_i32 = arith.constant 0 : i32
    %c0_i32_0 = arith.constant 0 : i32
    %c0_i32_1 = arith.constant 0 : i32
    return %c0_i32, %c0_i32_0 : i32, i32
  }
  func.func @transform_3(%arg0: i32) -> (i32, i32, i32, i32) {
    %c0_i32 = arith.constant 0 : i32
    %c0_i32_0 = arith.constant 0 : i32
    %c0_i32_1 = arith.constant 0 : i32
    %c0_i32_2 = arith.constant 0 : i32
    return %arg0, %c0_i32, %c0_i32_0, %c0_i32_1 : i32, i32, i32, i32
  }
  func.func @transform_4(%arg0: i32) -> (i32, i32, i32, i32) {
    %c0_i32 = arith.constant 0 : i32
    %c0_i32_0 = arith.constant 0 : i32
    %c0_i32_1 = arith.constant 0 : i32
    %c0_i32_2 = arith.constant 0 : i32
    return %arg0, %c0_i32, %c0_i32_0, %c0_i32_1 : i32, i32, i32, i32
  }
}

</mosaic_0001>

<llo_original>
// kernel: octave_conv_forward.4
$region0: #{octave_conv_forward.4}
  #allocation0 [shape = 'u32[]', space=smem, size = 0x4, offset = 0x4, fixed_abs, tag = 'smem constant byte address 0x4 - core index']
  #allocation1 [shape = 'u32[144,128]{1,0:T(1,128)}', space=vmem, size = 0x12000, scoped, tag = 'internal scratch']
  #allocation2 [shape = 'f32[10,10,2]{2,1,0:T(8,128)}', space=vmem, size = 0x14000, scoped, tag = 'scratch operand']
  %s0 = inlined_call_operand.vmem [shape: f32[2,8,8,2], index: 0, kind: input, shape index: {}]
  %s1 = inlined_call_operand.vmem [shape: f32[3,6,2], index: 1, kind: input, shape index: {}]
  %s2 = inlined_call_operand.vmem [shape: f32[1,2], index: 2, kind: input, shape index: {}]
  %s3 = inlined_call_operand.vmem [shape: f32[2,8,8,2], index: 3, kind: output, shape index: {}]
  %s4 = sld [smem:[#allocation0]]
  $region45: #{octave_conv_forward.4} parent=0
    _
  %s6 = ssub.s32 1, %s4
  %s7 = scalar_select 0, %s6, %s4
  loop: start=0, step=1, limit=4
  $region2: #{octave_conv_forward.4} parent=0 // loop_pre_header
    _
  $region3: #{octave_conv_forward.4} parent=0 // loop_header
    %s9 = sphi 0, %s13
    %p10 = scmp.ge.s32.totalorder %s9, 4
    %s19 = sphi 0, %s21
    %s22 = sphi 0, %s19
    %s23 = sphi 0, %s22
    %s39 = sphi 0, %s23
    %s43 = sphi 0, %s43
    %s45 = sphi 0, %s43
    %s46 = sphi 0, %s45
    %s60 = sphi 0, %s46
    %s64 = sphi 0, %s64
    %s66 = sphi 0, %s64
    %s67 = sphi 0, %s66
    %s81 = sphi 0, %s67
    %s87 = sphi 0, %s89
    %s90 = sphi 0, %s87
    %s91 = sphi 0, %s90
    %s107 = sphi 0, %s91
  $region4: #{octave_conv_forward.4} parent=0 // loop_header_branch
    %12 = sbr.rel (%p10) target = $region8
  $region5: #{octave_conv_forward.4} parent=0 // loop_body
    %s14 = ssub.s32 %s9, 1
    %s15 = ssub.s32 %s9, 2
    %s16 = sadd.s32 %s9, 1
    %s17 = ssub.s32 %s9, %s16
    %p18 = scmp.eq.s32.totalorder %s17, 0
    %s20 = sadd.s32 %s19, 1
    %s21 = scalar_select %p18, %s19, %s20
    %p24 = pneg %p18
    %p25 = scmp.eq.s32.totalorder %s9, 1
    %p26 = por %p24, %p25
    %p27 = scmp.ne.s32.totalorder %s19, %s22
    %p28 = scmp.eq.s32.totalorder %s9, 0
    %p29 = por %p27, %p28
    %p30 = scmp.ne.s32.totalorder %s19, %s22
    %p31 = scmp.eq.s32.totalorder %s14, 1
    %p32 = por %p30, %p31
    %p33 = scmp.ne.s32.totalorder %s22, %s23
    %p34 = scmp.eq.s32.totalorder %s14, 0
    %p35 = por %p33, %p34
    %p36 = scmp.ne.s32.totalorder %s22, %s23
    %p37 = scmp.eq.s32.totalorder %s15, 1
    %p38 = por %p36, %p37
    %p40 = scmp.ne.s32.totalorder %s23, %s39
    %p41 = scmp.eq.s32.totalorder %s15, 0
    %p42 = por %p40, %p41
    %s44 = sadd.s32 %s43, 1
    %p47 = scmp.eq.s32.totalorder %s9, 1
    %p48 = scmp.ne.s32.totalorder %s43, %s45
    %p49 = scmp.eq.s32.totalorder %s9, 0
    %p50 = por %p48, %p49
    %p51 = scmp.ne.s32.totalorder %s43, %s45
    %p52 = scmp.eq.s32.totalorder %s14, 1
    %p53 = por %p51, %p52
    %p54 = scmp.ne.s32.totalorder %s45, %s46
    %p55 = scmp.eq.s32.totalorder %s14, 0
    %p56 = por %p54, %p55
    %p57 = scmp.ne.s32.totalorder %s45, %s46
    %p58 = scmp.eq.s32.totalorder %s15, 1
    %p59 = por %p57, %p58
    %p61 = scmp.ne.s32.totalorder %s46, %s60
    %p62 = scmp.eq.s32.totalorder %s15, 0
    %p63 = por %p61, %p62
    %s65 = sadd.s32 %s64, 1
    %p68 = scmp.eq.s32.totalorder %s9, 1
    %p69 = scmp.ne.s32.totalorder %s64, %s66
    %p70 = scmp.eq.s32.totalorder %s9, 0
    %p71 = por %p69, %p70
    %p72 = scmp.ne.s32.totalorder %s64, %s66
    %p73 = scmp.eq.s32.totalorder %s14, 1
    %p74 = por %p72, %p73
    %p75 = scmp.ne.s32.totalorder %s66, %s67
    %p76 = scmp.eq.s32.totalorder %s14, 0
    %p77 = por %p75, %p76
    %p78 = scmp.ne.s32.totalorder %s66, %s67
    %p79 = scmp.eq.s32.totalorder %s15, 1
    %p80 = por %p78, %p79
    %p82 = scmp.ne.s32.totalorder %s67, %s81
    %p83 = scmp.eq.s32.totalorder %s15, 0
    %p84 = por %p82, %p83
    %s85 = ssub.s32 %s9, %s16
    %p86 = scmp.eq.s32.totalorder %s85, 0
    %s88 = sadd.s32 %s87, 1
    %s89 = scalar_select %p86, %s87, %s88
    %p92 = pneg %p86
    %p93 = scmp.eq.s32.totalorder %s9, 1
    %p94 = por %p92, %p93
    %p95 = scmp.ne.s32.totalorder %s87, %s90
    %p96 = scmp.eq.s32.totalorder %s9, 0
    %p97 = por %p95, %p96
    %p98 = scmp.ne.s32.totalorder %s87, %s90
    %p99 = scmp.eq.s32.totalorder %s14, 1
    %p100 = por %p98, %p99
    %p101 = scmp.ne.s32.totalorder %s90, %s91
    %p102 = scmp.eq.s32.totalorder %s14, 0
    %p103 = por %p101, %p102
    %p104 = scmp.ne.s32.totalorder %s90, %s91
    %p105 = scmp.eq.s32.totalorder %s15, 1
    %p106 = por %p104, %p105
    %p108 = scmp.ne.s32.totalorder %s91, %s107
    %p109 = scmp.eq.s32.totalorder %s15, 0
    %p110 = por %p108, %p109
    %p111 = scmp.le.s32.totalorder 1, %s9
    %p112 = scmp.lt.s32.totalorder %s9, 3
    %p113 = pnand %p111, %p112
    %p114 = pneg %p113
    // Predicated region
    $region9: #{octave_conv_forward.4} parent=5 // pred_check
      _
    $region10: #{octave_conv_forward.4} parent=5 // pred_check_branch
      %116 = sbr.rel (%p113) target = $region12
    $region11: #{octave_conv_forward.4} parent=5 // pred_region
      %s117 = ssub.s32 %s9, 1
      // Predicated region
      $region13: #{octave_conv_forward.4} parent=11 // pred_check
        %p118 = pneg %p56
      $region14: #{octave_conv_forward.4} parent=11 // pred_check_branch
        %120 = sbr.rel (%p118) target = $region16
      $region15: #{octave_conv_forward.4} parent=11 // pred_region
        _
      $region16: #{octave_conv_forward.4} parent=11 // pred_fallthru
        _
      // Predicated region
      $region17: #{octave_conv_forward.4} parent=11 // pred_check
        %p121 = pneg %p77
      $region18: #{octave_conv_forward.4} parent=11 // pred_check_branch
        %123 = sbr.rel (%p121) target = $region20
      $region19: #{octave_conv_forward.4} parent=11 // pred_region
        _
      $region20: #{octave_conv_forward.4} parent=11 // pred_fallthru
        _
    $region12: #{octave_conv_forward.4} parent=5 // pred_fallthru
      _
    %p124 = scmp.lt.s32.totalorder %s9, 2
    // Predicated region
    $region21: #{octave_conv_forward.4} parent=5 // pred_check
      %p125 = pneg %p124
    $region22: #{octave_conv_forward.4} parent=5 // pred_check_branch
      %127 = sbr.rel (%p125) target = $region24
    $region23: #{octave_conv_forward.4} parent=5 // pred_region
      // Predicated region
      $region25: #{octave_conv_forward.4} parent=23 // pred_check
        %p128 = pneg %p29
      $region26: #{octave_conv_forward.4} parent=23 // pred_check_branch
        %130 = sbr.rel (%p128) target = $region28
      $region27: #{octave_conv_forward.4} parent=23 // pred_region
        %p131 = scmp.lt.s32.totalorder %s9, 1
        %s132 = scalar_select %p131, %s9, 1
        %s133 = smul.addr %s132, 8
        %s134 = smul.addr %s133, 8
        %s135 = scalar_lea.vmem %s0, %s134
      $region28: #{octave_conv_forward.4} parent=23 // pred_fallthru
        _
    $region24: #{octave_conv_forward.4} parent=5 // pred_fallthru
      _
    %p136 = scmp.le.s32.totalorder 1, %s9
    %p137 = scmp.lt.s32.totalorder %s9, 3
    %p138 = pnand %p136, %p137
    %p139 = pneg %p138
    // Predicated region
    $region29: #{octave_conv_forward.4} parent=5 // pred_check
      _
    $region30: #{octave_conv_forward.4} parent=5 // pred_check_branch
      %141 = sbr.rel (%p138) target = $region32
    $region31: #{octave_conv_forward.4} parent=5 // pred_region
      %s142 = ssub.s32 %s9, 1
      %p143 = scmp.lt.s32.totalorder %s14, 1
      %s144 = scalar_select %p143, %s14, 1
      %s145 = smul.addr %s144, 8
      %s146 = smul.addr %s145, 8
      %s147 = scalar_lea.vmem %s0, %s146
      %p148 = pneg %p35
      %p149 = pneg %p32
      %p150 = pneg %p56
      %p151 = pneg %p53
      %p152 = pneg %p77
      %p153 = pneg %p74
      %p154 = pneg %p103
      %p155 = pneg %p100
      %p156 = scmp.lt.s32.totalorder %s14, 1
      %s157 = scalar_select %p156, %s14, 1
      %s158 = smul.addr %s157, 8
      %s159 = smul.addr %s158, 8
      %s160 = scalar_lea.vmem %s3, %s159
      %p161 = scmp.lt.s32.totalorder %s14, 1
      %s162 = scalar_select %p161, %s14, 1
      %s163 = smul.addr %s162, 8
      %s164 = smul.addr %s163, 8
      %s165 = scalar_lea.vmem %s0, %s164
      %p166 = scmp.lt.s32.totalorder %s14, 1
      %s167 = scalar_select %p166, %s14, 1
      %s168 = smul.addr %s167, 8
      %s169 = smul.addr %s168, 8
      %s170 = scalar_lea.vmem %s3, %s169
      %vm171 = vcmask 15360
      %172 = vst.msk [vmem:[#allocation2] sm:$0xff] %vm171, 0.0
      %vm173 = vcmask 9216
      %174 = vst.msk [vmem:[#allocation2 + $0x8] sm:$0x3] %vm173, 0.0
      %s175 = scalar_lea.vmem [#allocation2], 144
      %176 = vst.msk [vmem:[%s175] sm:$0xff] %vm171, 0.0
      %177 = vst.msk [vmem:[%s175 + $0x8] sm:$0x3] %vm173, 0.0
      %vm178 = vcmask 8192
      %179 = vst.msk [vmem:[#allocation2] sm:$0x1] %vm178, 0.0
      %180 = vst.msk [vmem:[#allocation2 + $0x10] sm:$0x1] %vm178, 0.0
      %181 = vst.msk [vmem:[#allocation2 + $0x20] sm:$0x1] %vm178, 0.0
      %182 = vst.msk [vmem:[#allocation2 + $0x30] sm:$0x1] %vm178, 0.0
      %183 = vst.msk [vmem:[#allocation2 + $0x40] sm:$0x1] %vm178, 0.0
      %184 = vst.msk [vmem:[#allocation2 + $0x50] sm:$0x1] %vm178, 0.0
      %185 = vst.msk [vmem:[#allocation2 + $0x60] sm:$0x1] %vm178, 0.0
      %186 = vst.msk [vmem:[#allocation2 + $0x70] sm:$0x1] %vm178, 0.0
      %187 = vst.msk [vmem:[#allocation2 + $0x80] sm:$0x1] %vm178, 0.0
      %188 = vst.msk [vmem:[#allocation2 + $0x90] sm:$0x1] %vm178, 0.0
      %189 = vst.msk [vmem:[#allocation2 + $0x9] sm:$0x1] %vm178, 0.0
      %190 = vst.msk [vmem:[#allocation2 + $0x19] sm:$0x1] %vm178, 0.0
      %191 = vst.msk [vmem:[#allocation2 + $0x29] sm:$0x1] %vm178, 0.0
      %192 = vst.msk [vmem:[#allocation2 + $0x39] sm:$0x1] %vm178, 0.0
      %193 = vst.msk [vmem:[#allocation2 + $0x49] sm:$0x1] %vm178, 0.0
      %194 = vst.msk [vmem:[#allocation2 + $0x59] sm:$0x1] %vm178, 0.0
      %195 = vst.msk [vmem:[#allocation2 + $0x69] sm:$0x1] %vm178, 0.0
      %196 = vst.msk [vmem:[#allocation2 + $0x79] sm:$0x1] %vm178, 0.0
      %197 = vst.msk [vmem:[#allocation2 + $0x89] sm:$0x1] %vm178, 0.0
      %198 = vst.msk [vmem:[#allocation2 + $0x99] sm:$0x1] %vm178, 0.0
      %v199 = vld [vmem:[%s165] sm:$0xff]
      %v200 = vld [vmem:[%s165 + $0x8] sm:$0xff]
      %v201 = vld [vmem:[%s165 + $0x10] sm:$0xff]
      %v202 = vld [vmem:[%s165 + $0x18] sm:$0xff]
      %v203 = vld [vmem:[%s165 + $0x20] sm:$0xff]
      %v204 = vld [vmem:[%s165 + $0x28] sm:$0xff]
      %v205 = vld [vmem:[%s165 + $0x30] sm:$0xff]
      %v206 = vld [vmem:[%s165 + $0x38] sm:$0xff]
      %s207 = scalar_lea.vmem [#allocation2], 16
      %208 = vst.msk [vmem:[%s207 + $0x1] sm:$0xff] %vm171, %v199
      %209 = vst.msk [vmem:[%s207 + $0x11] sm:$0xff] %vm171, %v200
      %210 = vst.msk [vmem:[%s207 + $0x21] sm:$0xff] %vm171, %v201
      %211 = vst.msk [vmem:[%s207 + $0x31] sm:$0xff] %vm171, %v202
      %212 = vst.msk [vmem:[%s207 + $0x41] sm:$0xff] %vm171, %v203
      %213 = vst.msk [vmem:[%s207 + $0x51] sm:$0xff] %vm171, %v204
      %214 = vst.msk [vmem:[%s207 + $0x61] sm:$0xff] %vm171, %v205
      %215 = vst.msk [vmem:[%s207 + $0x71] sm:$0xff] %vm171, %v206
      %v216 = vld [vmem:[#allocation2] sm:$0xff]
      %v217 = vld [vmem:[#allocation2 + $0x10] sm:$0xff]
      %v218 = vld [vmem:[#allocation2 + $0x20] sm:$0xff]
      %v219 = vld [vmem:[#allocation2 + $0x30] sm:$0xff]
      %v220 = vld [vmem:[#allocation2 + $0x40] sm:$0xff]
      %v221 = vld [vmem:[#allocation2 + $0x50] sm:$0xff]
      %v222 = vld [vmem:[#allocation2 + $0x60] sm:$0xff]
      %v223 = vld [vmem:[#allocation2 + $0x70] sm:$0xff]
      %v224 = vld [vmem:[#allocation2 + $0x1] sm:$0xff]
      %v225 = vld [vmem:[#allocation2 + $0x11] sm:$0xff]
      %v226 = vld [vmem:[#allocation2 + $0x21] sm:$0xff]
      %v227 = vld [vmem:[#allocation2 + $0x31] sm:$0xff]
      %v228 = vld [vmem:[#allocation2 + $0x41] sm:$0xff]
      %v229 = vld [vmem:[#allocation2 + $0x51] sm:$0xff]
      %v230 = vld [vmem:[#allocation2 + $0x61] sm:$0xff]
      %v231 = vld [vmem:[#allocation2 + $0x71] sm:$0xff]
      %v232 = vld [vmem:[#allocation2 + $0x2] sm:$0xff]
      %v233 = vld [vmem:[#allocation2 + $0x12] sm:$0xff]
      %v234 = vld [vmem:[#allocation2 + $0x22] sm:$0xff]
      %v235 = vld [vmem:[#allocation2 + $0x32] sm:$0xff]
      %v236 = vld [vmem:[#allocation2 + $0x42] sm:$0xff]
      %v237 = vld [vmem:[#allocation2 + $0x52] sm:$0xff]
      %v238 = vld [vmem:[#allocation2 + $0x62] sm:$0xff]
      %v239 = vld [vmem:[#allocation2 + $0x72] sm:$0xff]
      %248 = vrot.lane.b32.xlu0 %v224, 2
      %v249 = vpop.permute.xlu0 %248
      %250 = vrot.lane.b32.xlu0 %v225, 2
      %v251 = vpop.permute.xlu0 %250
      %252 = vrot.lane.b32.xlu0 %v226, 2
      %v253 = vpop.permute.xlu0 %252
      %254 = vrot.lane.b32.xlu0 %v227, 2
      %v255 = vpop.permute.xlu0 %254
      %256 = vrot.lane.b32.xlu0 %v228, 2
      %v257 = vpop.permute.xlu0 %256
      %258 = vrot.lane.b32.xlu0 %v229, 2
      %v259 = vpop.permute.xlu0 %258
      %260 = vrot.lane.b32.xlu0 %v230, 2
      %v261 = vpop.permute.xlu0 %260
      %262 = vrot.lane.b32.xlu0 %v231, 2
      %v263 = vpop.permute.xlu0 %262
      %280 = vrot.lane.b32.xlu0 %v232, 4
      %v281 = vpop.permute.xlu0 %280
      %282 = vrot.lane.b32.xlu0 %v233, 4
      %v283 = vpop.permute.xlu0 %282
      %284 = vrot.lane.b32.xlu0 %v234, 4
      %v285 = vpop.permute.xlu0 %284
      %286 = vrot.lane.b32.xlu0 %v235, 4
      %v287 = vpop.permute.xlu0 %286
      %288 = vrot.lane.b32.xlu0 %v236, 4
      %v289 = vpop.permute.xlu0 %288
      %290 = vrot.lane.b32.xlu0 %v237, 4
      %v291 = vpop.permute.xlu0 %290
      %292 = vrot.lane.b32.xlu0 %v238, 4
      %v293 = vpop.permute.xlu0 %292
      %294 = vrot.lane.b32.xlu0 %v239, 4
      %v295 = vpop.permute.xlu0 %294
      %v304 = vsel %vm171, %v216, %v249
      %v305 = vsel %vm171, %v217, %v251
      %v306 = vsel %vm171, %v218, %v253
      %v307 = vsel %vm171, %v219, %v255
      %v308 = vsel %vm171, %v220, %v257
      %v309 = vsel %vm171, %v221, %v259
      %v310 = vsel %vm171, %v222, %v261
      %v311 = vsel %vm171, %v223, %v263
      %vm312 = vcmask 31744
      %v313 = vsel %vm312, %v304, %v281
      %v314 = vsel %vm312, %v305, %v283
      %v315 = vsel %vm312, %v306, %v285
      %v316 = vsel %vm312, %v307, %v287
      %v317 = vsel %vm312, %v308, %v289
      %v318 = vsel %vm312, %v309, %v291
      %v319 = vsel %vm312, %v310, %v293
      %v320 = vsel %vm312, %v311, %v295
      %v321 = vld [vmem:[%s1] sm:$0x3f]
      %v322 = vld [vmem:[%s207] sm:$0xff]
      %v323 = vld [vmem:[%s207 + $0x10] sm:$0xff]
      %v324 = vld [vmem:[%s207 + $0x20] sm:$0xff]
      %v325 = vld [vmem:[%s207 + $0x30] sm:$0xff]
      %v326 = vld [vmem:[%s207 + $0x40] sm:$0xff]
      %v327 = vld [vmem:[%s207 + $0x50] sm:$0xff]
      %v328 = vld [vmem:[%s207 + $0x60] sm:$0xff]
      %v329 = vld [vmem:[%s207 + $0x70] sm:$0xff]
      %v330 = vld [vmem:[%s207 + $0x1] sm:$0xff]
      %v331 = vld [vmem:[%s207 + $0x11] sm:$0xff]
      %v332 = vld [vmem:[%s207 + $0x21] sm:$0xff]
      %v333 = vld [vmem:[%s207 + $0x31] sm:$0xff]
      %v334 = vld [vmem:[%s207 + $0x41] sm:$0xff]
      %v335 = vld [vmem:[%s207 + $0x51] sm:$0xff]
      %v336 = vld [vmem:[%s207 + $0x61] sm:$0xff]
      %v337 = vld [vmem:[%s207 + $0x71] sm:$0xff]
      %v338 = vld [vmem:[%s207 + $0x2] sm:$0xff]
      %v339 = vld [vmem:[%s207 + $0x12] sm:$0xff]
      %v340 = vld [vmem:[%s207 + $0x22] sm:$0xff]
      %v341 = vld [vmem:[%s207 + $0x32] sm:$0xff]
      %v342 = vld [vmem:[%s207 + $0x42] sm:$0xff]
      %v343 = vld [vmem:[%s207 + $0x52] sm:$0xff]
      %v344 = vld [vmem:[%s207 + $0x62] sm:$0xff]
      %v345 = vld [vmem:[%s207 + $0x72] sm:$0xff]
      %354 = vrot.lane.b32.xlu0 %v330, 2
      %v355 = vpop.permute.xlu0 %354
      %356 = vrot.lane.b32.xlu0 %v331, 2
      %v357 = vpop.permute.xlu0 %356
      %358 = vrot.lane.b32.xlu0 %v332, 2
      %v359 = vpop.permute.xlu0 %358
      %360 = vrot.lane.b32.xlu0 %v333, 2
      %v361 = vpop.permute.xlu0 %360
      %362 = vrot.lane.b32.xlu0 %v334, 2
      %v363 = vpop.permute.xlu0 %362
      %364 = vrot.lane.b32.xlu0 %v335, 2
      %v365 = vpop.permute.xlu0 %364
      %366 = vrot.lane.b32.xlu0 %v336, 2
      %v367 = vpop.permute.xlu0 %366
      %368 = vrot.lane.b32.xlu0 %v337, 2
      %v369 = vpop.permute.xlu0 %368
      %386 = vrot.lane.b32.xlu0 %v338, 4
      %v387 = vpop.permute.xlu0 %386
      %388 = vrot.lane.b32.xlu0 %v339, 4
      %v389 = vpop.permute.xlu0 %388
      %390 = vrot.lane.b32.xlu0 %v340, 4
      %v391 = vpop.permute.xlu0 %390
      %392 = vrot.lane.b32.xlu0 %v341, 4
      %v393 = vpop.permute.xlu0 %392
      %394 = vrot.lane.b32.xlu0 %v342, 4
      %v395 = vpop.permute.xlu0 %394
      %396 = vrot.lane.b32.xlu0 %v343, 4
      %v397 = vpop.permute.xlu0 %396
      %398 = vrot.lane.b32.xlu0 %v344, 4
      %v399 = vpop.permute.xlu0 %398
      %400 = vrot.lane.b32.xlu0 %v345, 4
      %v401 = vpop.permute.xlu0 %400
      %v410 = vsel %vm171, %v322, %v355
      %v411 = vsel %vm171, %v323, %v357
      %v412 = vsel %vm171, %v324, %v359
      %v413 = vsel %vm171, %v325, %v361
      %v414 = vsel %vm171, %v326, %v363
      %v415 = vsel %vm171, %v327, %v365
      %v416 = vsel %vm171, %v328, %v367
      %v417 = vsel %vm171, %v329, %v369
      %v418 = vsel %vm312, %v410, %v387
      %v419 = vsel %vm312, %v411, %v389
      %v420 = vsel %vm312, %v412, %v391
      %v421 = vsel %vm312, %v413, %v393
      %v422 = vsel %vm312, %v414, %v395
      %v423 = vsel %vm312, %v415, %v397
      %v424 = vsel %vm312, %v416, %v399
      %v425 = vsel %vm312, %v417, %v401
      %s426 = scalar_lea.vmem %s1, 8
      %v427 = vld [vmem:[%s426] sm:$0x3f]
      %vm428 = vcmask 48128
      %v430 = vsel %vm428, %v418, 0
      %v433 = vsel %vm428, %v419, 0
      %v436 = vsel %vm428, %v420, 0
      %v439 = vsel %vm428, %v421, 0
      %v442 = vsel %vm428, %v422, 0
      %v445 = vsel %vm428, %v423, 0
      %v448 = vsel %vm428, %v424, 0
      %v451 = vsel %vm428, %v425, 0
      %vm453 = vcmask 1045504
      %v455 = vsel %vm453, %v427, 0
      %457 = vmatprep.subr.mxu0 0.0
      %458 = vmatpush1.msra.mxu0 0.0
      %459 = vmatprep.subr.mxu0 0.0
      %460 = vmatpush1.msra.mxu0 0.0
      %461 = vmatprep.subr.mxu0 0.0
      %462 = vmatpush1.msra.mxu0 0.0
      %463 = vmatprep.subr.mxu0 0.0
      %464 = vmatpush1.msra.mxu0 0.0
      %465 = vmatprep.subr.mxu0 0.0
      %466 = vmatpush1.msra.mxu0 0.0
      %467 = vmatprep.subr.mxu0 0.0
      %468 = vmatpush1.msra.mxu0 0.0
      %469 = vmatprep.subr.mxu0 0.0
      %470 = vmatpush1.msra.mxu0 0.0
      %471 = vmatprep.subr.mxu0 0.0
      %472 = vmatpush1.msra.mxu0 0.0
      %473 = vmatprep.subr.mxu0 0.0
      %474 = vmatpush1.msra.mxu0 0.0
      %475 = vmatprep.subr.mxu0 0.0
      %476 = vmatpush1.msra.mxu0 0.0
      %477 = vmatprep.subr.mxu0 0.0
      %478 = vmatpush1.msra.mxu0 0.0
      %479 = vmatprep.subr.mxu0 0.0
      %480 = vmatpush1.msra.mxu0 0.0
      %481 = vmatprep.subr.mxu0 0.0
      %482 = vmatpush1.msra.mxu0 0.0
      %483 = vmatprep.subr.mxu0 0.0
      %484 = vmatpush1.msra.mxu0 0.0
      %485 = vmatprep.subr.mxu0 0.0
      %486 = vmatpush1.msra.mxu0 0.0
      %487 = vmatprep.subr.mxu0 0.0
      %488 = vmatpush1.msra.mxu0 %v455
      %489 = vmatprep.subr.mxu0 0.0
      %490 = vmatpush2.msra.mxu0 0.0
      %491 = vmatprep.subr.mxu0 0.0
      %492 = vmatpush2.msra.mxu0 0.0
      %493 = vmatprep.subr.mxu0 0.0
      %494 = vmatpush2.msra.mxu0 0.0
      %495 = vmatprep.subr.mxu0 0.0
      %496 = vmatpush2.msra.mxu0 0.0
      %497 = vmatprep.subr.mxu0 0.0
      %498 = vmatpush2.msra.mxu0 0.0
      %499 = vmatprep.subr.mxu0 0.0
      %500 = vmatpush2.msra.mxu0 0.0
      %501 = vmatprep.subr.mxu0 0.0
      %502 = vmatpush2.msra.mxu0 0.0
      %503 = vmatprep.subr.mxu0 0.0
      %504 = vmatpush2.msra.mxu0 0.0
      %505 = vmatprep.subr.mxu0 0.0
      %506 = vmatpush2.msra.mxu0 0.0
      %507 = vmatprep.subr.mxu0 0.0
      %508 = vmatpush2.msra.mxu0 0.0
      %509 = vmatprep.subr.mxu0 0.0
      %510 = vmatpush2.msra.mxu0 0.0
      %511 = vmatprep.subr.mxu0 0.0
      %512 = vmatpush2.msra.mxu0 0.0
      %513 = vmatprep.subr.mxu0 0.0
      %514 = vmatpush2.msra.mxu0 0.0
      %515 = vmatprep.subr.mxu0 0.0
      %516 = vmatpush2.msra.mxu0 0.0
      %517 = vmatprep.subr.mxu0 0.0
      %518 = vmatpush2.msra.mxu0 0.0
      %519 = vmatprep.subr.mxu0 0.0
      %520 = vmatpush2.msra.mxu0 0.0
      %521 = vmatprep.mubr.f32.mxu0 0.0
      %522 = vmatmul.mubr.f32.gmra.mxu0 %v430
      %v523 = vpop.f32.mrf.mxu0
      %v524 = vadd.f32 0.0, %v523
      %v525 = vpop.f32.mrf.mxu0
      %526 = vmatprep.mubr.f32.mxu0 0.0
      %527 = vmatmul.mubr.f32.gmra.mxu0 %v433
      %v528 = vpop.f32.mrf.mxu0
      %v529 = vadd.f32 0.0, %v528
      %v530 = vpop.f32.mrf.mxu0
      %531 = vmatprep.mubr.f32.mxu0 0.0
      %532 = vmatmul.mubr.f32.gmra.mxu0 %v436
      %v533 = vpop.f32.mrf.mxu0
      %v534 = vadd.f32 0.0, %v533
      %v535 = vpop.f32.mrf.mxu0
      %536 = vmatprep.mubr.f32.mxu0 0.0
      %537 = vmatmul.mubr.f32.gmra.mxu0 %v439
      %v538 = vpop.f32.mrf.mxu0
      %v539 = vadd.f32 0.0, %v538
      %v540 = vpop.f32.mrf.mxu0
      %541 = vmatprep.mubr.f32.mxu0 0.0
      %542 = vmatmul.mubr.f32.gmra.mxu0 %v442
      %v543 = vpop.f32.mrf.mxu0
      %v544 = vadd.f32 0.0, %v543
      %v545 = vpop.f32.mrf.mxu0
      %546 = vmatprep.mubr.f32.mxu0 0.0
      %547 = vmatmul.mubr.f32.gmra.mxu0 %v445
      %v548 = vpop.f32.mrf.mxu0
      %v549 = vadd.f32 0.0, %v548
      %v550 = vpop.f32.mrf.mxu0
      %551 = vmatprep.mubr.f32.mxu0 0.0
      %552 = vmatmul.mubr.f32.gmra.mxu0 %v448
      %v553 = vpop.f32.mrf.mxu0
      %v554 = vadd.f32 0.0, %v553
      %v555 = vpop.f32.mrf.mxu0
      %556 = vmatprep.mubr.f32.mxu0 0.0
      %557 = vmatmul.mubr.f32.gmra.mxu0 %v451
      %v558 = vpop.f32.mrf.mxu0
      %v559 = vadd.f32 0.0, %v558
      %v560 = vpop.f32.mrf.mxu0
      %561 = vdwg.mxu0
      %v563 = vsel %vm428, %v313, 0
      %v566 = vsel %vm428, %v314, 0
      %v569 = vsel %vm428, %v315, 0
      %v572 = vsel %vm428, %v316, 0
      %v575 = vsel %vm428, %v317, 0
      %v578 = vsel %vm428, %v318, 0
      %v581 = vsel %vm428, %v319, 0
      %v584 = vsel %vm428, %v320, 0
      %v587 = vsel %vm453, %v321, 0
      %589 = vmatprep.subr.mxu0 0.0
      %590 = vmatpush1.msra.mxu0 0.0
      %591 = vmatprep.subr.mxu0 0.0
      %592 = vmatpush1.msra.mxu0 0.0
      %593 = vmatprep.subr.mxu0 0.0
      %594 = vmatpush1.msra.mxu0 0.0
      %595 = vmatprep.subr.mxu0 0.0
      %596 = vmatpush1.msra.mxu0 0.0
      %597 = vmatprep.subr.mxu0 0.0
      %598 = vmatpush1.msra.mxu0 0.0
      %599 = vmatprep.subr.mxu0 0.0
      %600 = vmatpush1.msra.mxu0 0.0
      %601 = vmatprep.subr.mxu0 0.0
      %602 = vmatpush1.msra.mxu0 0.0
      %603 = vmatprep.subr.mxu0 0.0
      %604 = vmatpush1.msra.mxu0 0.0
      %605 = vmatprep.subr.mxu0 0.0
      %606 = vmatpush1.msra.mxu0 0.0
      %607 = vmatprep.subr.mxu0 0.0
      %608 = vmatpush1.msra.mxu0 0.0
      %609 = vmatprep.subr.mxu0 0.0
      %610 = vmatpush1.msra.mxu0 0.0
      %611 = vmatprep.subr.mxu0 0.0
      %612 = vmatpush1.msra.mxu0 0.0
      %613 = vmatprep.subr.mxu0 0.0
      %614 = vmatpush1.msra.mxu0 0.0
      %615 = vmatprep.subr.mxu0 0.0
      %616 = vmatpush1.msra.mxu0 0.0
      %617 = vmatprep.subr.mxu0 0.0
      %618 = vmatpush1.msra.mxu0 0.0
      %619 = vmatprep.subr.mxu0 0.0
      %620 = vmatpush1.msra.mxu0 %v587
      %621 = vmatprep.subr.mxu0 0.0
      %622 = vmatpush2.msra.mxu0 0.0
      %623 = vmatprep.subr.mxu0 0.0
      %624 = vmatpush2.msra.mxu0 0.0
      %625 = vmatprep.subr.mxu0 0.0
      %626 = vmatpush2.msra.mxu0 0.0
      %627 = vmatprep.subr.mxu0 0.0
      %628 = vmatpush2.msra.mxu0 0.0
      %629 = vmatprep.subr.mxu0 0.0
      %630 = vmatpush2.msra.mxu0 0.0
      %631 = vmatprep.subr.mxu0 0.0
      %632 = vmatpush2.msra.mxu0 0.0
      %633 = vmatprep.subr.mxu0 0.0
      %634 = vmatpush2.msra.mxu0 0.0
      %635 = vmatprep.subr.mxu0 0.0
      %636 = vmatpush2.msra.mxu0 0.0
      %637 = vmatprep.subr.mxu0 0.0
      %638 = vmatpush2.msra.mxu0 0.0
      %639 = vmatprep.subr.mxu0 0.0
      %640 = vmatpush2.msra.mxu0 0.0
      %641 = vmatprep.subr.mxu0 0.0
      %642 = vmatpush2.msra.mxu0 0.0
      %643 = vmatprep.subr.mxu0 0.0
      %644 = vmatpush2.msra.mxu0 0.0
      %645 = vmatprep.subr.mxu0 0.0
      %646 = vmatpush2.msra.mxu0 0.0
      %647 = vmatprep.subr.mxu0 0.0
      %648 = vmatpush2.msra.mxu0 0.0
      %649 = vmatprep.subr.mxu0 0.0
      %650 = vmatpush2.msra.mxu0 0.0
      %651 = vmatprep.subr.mxu0 0.0
      %652 = vmatpush2.msra.mxu0 0.0
      %653 = vmatprep.mubr.f32.mxu0 0.0
      %654 = vmatmul.mubr.f32.gmra.mxu0 %v563
      %v655 = vpop.f32.mrf.mxu0
      %v656 = vadd.f32 %v524, %v655
      %v657 = vpop.f32.mrf.mxu0
      %658 = vmatprep.mubr.f32.mxu0 0.0
      %659 = vmatmul.mubr.f32.gmra.mxu0 %v566
      %v660 = vpop.f32.mrf.mxu0
      %v661 = vadd.f32 %v529, %v660
      %v662 = vpop.f32.mrf.mxu0
      %663 = vmatprep.mubr.f32.mxu0 0.0
      %664 = vmatmul.mubr.f32.gmra.mxu0 %v569
      %v665 = vpop.f32.mrf.mxu0
      %v666 = vadd.f32 %v534, %v665
      %v667 = vpop.f32.mrf.mxu0
      %668 = vmatprep.mubr.f32.mxu0 0.0
      %669 = vmatmul.mubr.f32.gmra.mxu0 %v572
      %v670 = vpop.f32.mrf.mxu0
      %v671 = vadd.f32 %v539, %v670
      %v672 = vpop.f32.mrf.mxu0
      %673 = vmatprep.mubr.f32.mxu0 0.0
      %674 = vmatmul.mubr.f32.gmra.mxu0 %v575
      %v675 = vpop.f32.mrf.mxu0
      %v676 = vadd.f32 %v544, %v675
      %v677 = vpop.f32.mrf.mxu0
      %678 = vmatprep.mubr.f32.mxu0 0.0
      %679 = vmatmul.mubr.f32.gmra.mxu0 %v578
      %v680 = vpop.f32.mrf.mxu0
      %v681 = vadd.f32 %v549, %v680
      %v682 = vpop.f32.mrf.mxu0
      %683 = vmatprep.mubr.f32.mxu0 0.0
      %684 = vmatmul.mubr.f32.gmra.mxu0 %v581
      %v685 = vpop.f32.mrf.mxu0
      %v686 = vadd.f32 %v554, %v685
      %v687 = vpop.f32.mrf.mxu0
      %688 = vmatprep.mubr.f32.mxu0 0.0
      %689 = vmatmul.mubr.f32.gmra.mxu0 %v584
      %v690 = vpop.f32.mrf.mxu0
      %v691 = vadd.f32 %v559, %v690
      %v692 = vpop.f32.mrf.mxu0
      %693 = vdwg.mxu0
      %s694 = scalar_lea.vmem [#allocation2], 32
      %v695 = vld [vmem:[%s694] sm:$0xff]
      %v696 = vld [vmem:[%s694 + $0x10] sm:$0xff]
      %v697 = vld [vmem:[%s694 + $0x20] sm:$0xff]
      %v698 = vld [vmem:[%s694 + $0x30] sm:$0xff]
      %v699 = vld [vmem:[%s694 + $0x40] sm:$0xff]
      %v700 = vld [vmem:[%s694 + $0x50] sm:$0xff]
      %v701 = vld [vmem:[%s694 + $0x60] sm:$0xff]
      %v702 = vld [vmem:[%s694 + $0x70] sm:$0xff]
      %v703 = vld [vmem:[%s694 + $0x1] sm:$0xff]
      %v704 = vld [vmem:[%s694 + $0x11] sm:$0xff]
      %v705 = vld [vmem:[%s694 + $0x21] sm:$0xff]
      %v706 = vld [vmem:[%s694 + $0x31] sm:$0xff]
      %v707 = vld [vmem:[%s694 + $0x41] sm:$0xff]
      %v708 = vld [vmem:[%s694 + $0x51] sm:$0xff]
      %v709 = vld [vmem:[%s694 + $0x61] sm:$0xff]
      %v710 = vld [vmem:[%s694 + $0x71] sm:$0xff]
      %v711 = vld [vmem:[%s694 + $0x2] sm:$0xff]
      %v712 = vld [vmem:[%s694 + $0x12] sm:$0xff]
      %v713 = vld [vmem:[%s694 + $0x22] sm:$0xff]
      %v714 = vld [vmem:[%s694 + $0x32] sm:$0xff]
      %v715 = vld [vmem:[%s694 + $0x42] sm:$0xff]
      %v716 = vld [vmem:[%s694 + $0x52] sm:$0xff]
      %v717 = vld [vmem:[%s694 + $0x62] sm:$0xff]
      %v718 = vld [vmem:[%s694 + $0x72] sm:$0xff]
      %727 = vrot.lane.b32.xlu0 %v703, 2
      %v728 = vpop.permute.xlu0 %727
      %729 = vrot.lane.b32.xlu0 %v704, 2
      %v730 = vpop.permute.xlu0 %729
      %731 = vrot.lane.b32.xlu0 %v705, 2
      %v732 = vpop.permute.xlu0 %731
      %733 = vrot.lane.b32.xlu0 %v706, 2
      %v734 = vpop.permute.xlu0 %733
      %735 = vrot.lane.b32.xlu0 %v707, 2
      %v736 = vpop.permute.xlu0 %735
      %737 = vrot.lane.b32.xlu0 %v708, 2
      %v738 = vpop.permute.xlu0 %737
      %739 = vrot.lane.b32.xlu0 %v709, 2
      %v740 = vpop.permute.xlu0 %739
      %741 = vrot.lane.b32.xlu0 %v710, 2
      %v742 = vpop.permute.xlu0 %741
      %759 = vrot.lane.b32.xlu0 %v711, 4
      %v760 = vpop.permute.xlu0 %759
      %761 = vrot.lane.b32.xlu0 %v712, 4
      %v762 = vpop.permute.xlu0 %761
      %763 = vrot.lane.b32.xlu0 %v713, 4
      %v764 = vpop.permute.xlu0 %763
      %765 = vrot.lane.b32.xlu0 %v714, 4
      %v766 = vpop.permute.xlu0 %765
      %767 = vrot.lane.b32.xlu0 %v715, 4
      %v768 = vpop.permute.xlu0 %767
      %769 = vrot.lane.b32.xlu0 %v716, 4
      %v770 = vpop.permute.xlu0 %769
      %771 = vrot.lane.b32.xlu0 %v717, 4
      %v772 = vpop.permute.xlu0 %771
      %773 = vrot.lane.b32.xlu0 %v718, 4
      %v774 = vpop.permute.xlu0 %773
      %v783 = vsel %vm171, %v695, %v728
      %v784 = vsel %vm171, %v696, %v730
      %v785 = vsel %vm171, %v697, %v732
      %v786 = vsel %vm171, %v698, %v734
      %v787 = vsel %vm171, %v699, %v736
      %v788 = vsel %vm171, %v700, %v738
      %v789 = vsel %vm171, %v701, %v740
      %v790 = vsel %vm171, %v702, %v742
      %v791 = vsel %vm312, %v783, %v760
      %v792 = vsel %vm312, %v784, %v762
      %v793 = vsel %vm312, %v785, %v764
      %v794 = vsel %vm312, %v786, %v766
      %v795 = vsel %vm312, %v787, %v768
      %v796 = vsel %vm312, %v788, %v770
      %v797 = vsel %vm312, %v789, %v772
      %v798 = vsel %vm312, %v790, %v774
      %s799 = scalar_lea.vmem %s1, 16
      %v800 = vld [vmem:[%s799] sm:$0x3f]
      %v802 = vsel %vm428, %v791, 0
      %v805 = vsel %vm428, %v792, 0
      %v808 = vsel %vm428, %v793, 0
      %v811 = vsel %vm428, %v794, 0
      %v814 = vsel %vm428, %v795, 0
      %v817 = vsel %vm428, %v796, 0
      %v820 = vsel %vm428, %v797, 0
      %v823 = vsel %vm428, %v798, 0
      %v826 = vsel %vm453, %v800, 0
      %828 = vmatprep.subr.mxu0 0.0
      %829 = vmatpush1.msra.mxu0 0.0
      %830 = vmatprep.subr.mxu0 0.0
      %831 = vmatpush1.msra.mxu0 0.0
      %832 = vmatprep.subr.mxu0 0.0
      %833 = vmatpush1.msra.mxu0 0.0
      %834 = vmatprep.subr.mxu0 0.0
      %835 = vmatpush1.msra.mxu0 0.0
      %836 = vmatprep.subr.mxu0 0.0
      %837 = vmatpush1.msra.mxu0 0.0
      %838 = vmatprep.subr.mxu0 0.0
      %839 = vmatpush1.msra.mxu0 0.0
      %840 = vmatprep.subr.mxu0 0.0
      %841 = vmatpush1.msra.mxu0 0.0
      %842 = vmatprep.subr.mxu0 0.0
      %843 = vmatpush1.msra.mxu0 0.0
      %844 = vmatprep.subr.mxu0 0.0
      %845 = vmatpush1.msra.mxu0 0.0
      %846 = vmatprep.subr.mxu0 0.0
      %847 = vmatpush1.msra.mxu0 0.0
      %848 = vmatprep.subr.mxu0 0.0
      %849 = vmatpush1.msra.mxu0 0.0
      %850 = vmatprep.subr.mxu0 0.0
      %851 = vmatpush1.msra.mxu0 0.0
      %852 = vmatprep.subr.mxu0 0.0
      %853 = vmatpush1.msra.mxu0 0.0
      %854 = vmatprep.subr.mxu0 0.0
      %855 = vmatpush1.msra.mxu0 0.0
      %856 = vmatprep.subr.mxu0 0.0
      %857 = vmatpush1.msra.mxu0 0.0
      %858 = vmatprep.subr.mxu0 0.0
      %859 = vmatpush1.msra.mxu0 %v826
      %860 = vmatprep.subr.mxu0 0.0
      %861 = vmatpush2.msra.mxu0 0.0
      %862 = vmatprep.subr.mxu0 0.0
      %863 = vmatpush2.msra.mxu0 0.0
      %864 = vmatprep.subr.mxu0 0.0
      %865 = vmatpush2.msra.mxu0 0.0
      %866 = vmatprep.subr.mxu0 0.0
      %867 = vmatpush2.msra.mxu0 0.0
      %868 = vmatprep.subr.mxu0 0.0
      %869 = vmatpush2.msra.mxu0 0.0
      %870 = vmatprep.subr.mxu0 0.0
      %871 = vmatpush2.msra.mxu0 0.0
      %872 = vmatprep.subr.mxu0 0.0
      %873 = vmatpush2.msra.mxu0 0.0
      %874 = vmatprep.subr.mxu0 0.0
      %875 = vmatpush2.msra.mxu0 0.0
      %876 = vmatprep.subr.mxu0 0.0
      %877 = vmatpush2.msra.mxu0 0.0
      %878 = vmatprep.subr.mxu0 0.0
      %879 = vmatpush2.msra.mxu0 0.0
      %880 = vmatprep.subr.mxu0 0.0
      %881 = vmatpush2.msra.mxu0 0.0
      %882 = vmatprep.subr.mxu0 0.0
      %883 = vmatpush2.msra.mxu0 0.0
      %884 = vmatprep.subr.mxu0 0.0
      %885 = vmatpush2.msra.mxu0 0.0
      %886 = vmatprep.subr.mxu0 0.0
      %887 = vmatpush2.msra.mxu0 0.0
      %888 = vmatprep.subr.mxu0 0.0
      %889 = vmatpush2.msra.mxu0 0.0
      %890 = vmatprep.subr.mxu0 0.0
      %891 = vmatpush2.msra.mxu0 0.0
      %892 = vmatprep.mubr.f32.mxu0 0.0
      %893 = vmatmul.mubr.f32.gmra.mxu0 %v802
      %v894 = vpop.f32.mrf.mxu0
      %v895 = vadd.f32 0.0, %v894
      %v896 = vpop.f32.mrf.mxu0
      %897 = vmatprep.mubr.f32.mxu0 0.0
      %898 = vmatmul.mubr.f32.gmra.mxu0 %v805
      %v899 = vpop.f32.mrf.mxu0
      %v900 = vadd.f32 0.0, %v899
      %v901 = vpop.f32.mrf.mxu0
      %902 = vmatprep.mubr.f32.mxu0 0.0
      %903 = vmatmul.mubr.f32.gmra.mxu0 %v808
      %v904 = vpop.f32.mrf.mxu0
      %v905 = vadd.f32 0.0, %v904
      %v906 = vpop.f32.mrf.mxu0
      %907 = vmatprep.mubr.f32.mxu0 0.0
      %908 = vmatmul.mubr.f32.gmra.mxu0 %v811
      %v909 = vpop.f32.mrf.mxu0
      %v910 = vadd.f32 0.0, %v909
      %v911 = vpop.f32.mrf.mxu0
      %912 = vmatprep.mubr.f32.mxu0 0.0
      %913 = vmatmul.mubr.f32.gmra.mxu0 %v814
      %v914 = vpop.f32.mrf.mxu0
      %v915 = vadd.f32 0.0, %v914
      %v916 = vpop.f32.mrf.mxu0
      %917 = vmatprep.mubr.f32.mxu0 0.0
      %918 = vmatmul.mubr.f32.gmra.mxu0 %v817
      %v919 = vpop.f32.mrf.mxu0
      %v920 = vadd.f32 0.0, %v919
      %v921 = vpop.f32.mrf.mxu0
      %922 = vmatprep.mubr.f32.mxu0 0.0
      %923 = vmatmul.mubr.f32.gmra.mxu0 %v820
      %v924 = vpop.f32.mrf.mxu0
      %v925 = vadd.f32 0.0, %v924
      %v926 = vpop.f32.mrf.mxu0
      %927 = vmatprep.mubr.f32.mxu0 0.0
      %928 = vmatmul.mubr.f32.gmra.mxu0 %v823
      %v929 = vpop.f32.mrf.mxu0
      %v930 = vadd.f32 0.0, %v929
      %v931 = vpop.f32.mrf.mxu0
      %932 = vdwg.mxu0
      %v933 = vadd.f32 %v656, %v895
      %v934 = vadd.f32 %v661, %v900
      %v935 = vadd.f32 %v666, %v905
      %v936 = vadd.f32 %v671, %v910
      %v937 = vadd.f32 %v676, %v915
      %v938 = vadd.f32 %v681, %v920
      %v939 = vadd.f32 %v686, %v925
      %v940 = vadd.f32 %v691, %v930
      %v941 = vld [vmem:[%s2] sm:$0x1]
      %v943 = vlaneseq
      %v944 = vshrl.u32 %v943, 7
      %v945 = vsub.s32 0, %v944
      %v946 = vrot.slane %v941, %v945
      %v948 = vadd.f32 %v933, %v946
      %v949 = vadd.f32 %v934, %v946
      %v950 = vadd.f32 %v935, %v946
      %v951 = vadd.f32 %v936, %v946
      %v952 = vadd.f32 %v937, %v946
      %v953 = vadd.f32 %v938, %v946
      %v954 = vadd.f32 %v939, %v946
      %v955 = vadd.f32 %v940, %v946
      %956 = vst.msk [vmem:[%s170] sm:$0xff] %vm171, %v948
      %957 = vst.msk [vmem:[%s170 + $0x8] sm:$0xff] %vm171, %v949
      %958 = vst.msk [vmem:[%s170 + $0x10] sm:$0xff] %vm171, %v950
      %959 = vst.msk [vmem:[%s170 + $0x18] sm:$0xff] %vm171, %v951
      %960 = vst.msk [vmem:[%s170 + $0x20] sm:$0xff] %vm171, %v952
      %961 = vst.msk [vmem:[%s170 + $0x28] sm:$0xff] %vm171, %v953
      %962 = vst.msk [vmem:[%s170 + $0x30] sm:$0xff] %vm171, %v954
      %963 = vst.msk [vmem:[%s170 + $0x38] sm:$0xff] %vm171, %v955
      %p964 = scmp.lt.s32.totalorder %s14, 1
      %s965 = scalar_select %p964, %s14, 1
      %s966 = smul.addr %s965, 8
      %s967 = smul.addr %s966, 8
      %s968 = scalar_lea.vmem %s3, %s967
      // Predicated region
      $region33: #{octave_conv_forward.4} parent=31 // pred_check
        %p969 = pneg %p100
      $region34: #{octave_conv_forward.4} parent=31 // pred_check_branch
        %971 = sbr.rel (%p969) target = $region36
      $region35: #{octave_conv_forward.4} parent=31 // pred_region
        _
      $region36: #{octave_conv_forward.4} parent=31 // pred_fallthru
        _
    $region32: #{octave_conv_forward.4} parent=5 // pred_fallthru
      _
    %p972 = scmp.le.s32.totalorder 2, %s9
    // Predicated region
    $region37: #{octave_conv_forward.4} parent=5 // pred_check
      %p973 = pneg %p972
    $region38: #{octave_conv_forward.4} parent=5 // pred_check_branch
      %975 = sbr.rel (%p973) target = $region40
    $region39: #{octave_conv_forward.4} parent=5 // pred_region
      %s976 = ssub.s32 %s9, 2
      // Predicated region
      $region41: #{octave_conv_forward.4} parent=39 // pred_check
        %p977 = pneg %p106
      $region42: #{octave_conv_forward.4} parent=39 // pred_check_branch
        %979 = sbr.rel (%p977) target = $region44
      $region43: #{octave_conv_forward.4} parent=39 // pred_region
        %p980 = scmp.lt.s32.totalorder %s15, 1
        %s981 = scalar_select %p980, %s15, 1
        %s982 = smul.addr %s981, 8
        %s983 = smul.addr %s982, 8
        %s984 = scalar_lea.vmem %s3, %s983
      $region44: #{octave_conv_forward.4} parent=39 // pred_fallthru
        _
    $region40: #{octave_conv_forward.4} parent=5 // pred_fallthru
      _
  $region6: #{octave_conv_forward.4} parent=0 // loop_footer
    %s13 = sadd.s32 1, %s9
  $region7: #{octave_conv_forward.4} parent=0 // loop_footer_branch
    %8 = sbr.rel target = $region3
  $region8: #{octave_conv_forward.4} parent=0 // loop_exit
    _

// kernel: octave_conv_forward.5
$region0: #{octave_conv_forward.5}
  #allocation0 [shape = 'u32[]', space=smem, size = 0x4, offset = 0x4, fixed_abs, tag = 'smem constant byte address 0x4 - core index']
  #allocation1 [shape = 'u32[144,128]{1,0:T(1,128)}', space=vmem, size = 0x12000, scoped, tag = 'internal scratch']
  #allocation2 [shape = 'f32[18,18,2]{2,1,0:T(8,128)}', space=vmem, size = 0x36000, scoped, tag = 'scratch operand']
  %s0 = inlined_call_operand.vmem [shape: f32[2,16,16,2], index: 0, kind: input, shape index: {}]
  %s1 = inlined_call_operand.vmem [shape: f32[3,6,2], index: 1, kind: input, shape index: {}]
  %s2 = inlined_call_operand.vmem [shape: f32[1,2], index: 2, kind: input, shape index: {}]
  %s3 = inlined_call_operand.vmem [shape: f32[2,16,16,2], index: 3, kind: input, shape index: {}]
  %s4 = inlined_call_operand.vmem [shape: f32[2,16,16,2], index: 4, kind: output, shape index: {}]
  %s5 = sld [smem:[#allocation0]]
  $region49: #{octave_conv_forward.5} parent=0
    _
  %s7 = ssub.s32 1, %s5
  %s8 = scalar_select 0, %s7, %s5
  loop: start=0, step=1, limit=4
  $region2: #{octave_conv_forward.5} parent=0 // loop_pre_header
    _
  $region3: #{octave_conv_forward.5} parent=0 // loop_header
    %s10 = sphi 0, %s14
    %p11 = scmp.ge.s32.totalorder %s10, 4
    %s20 = sphi 0, %s22
    %s23 = sphi 0, %s20
    %s24 = sphi 0, %s23
    %s40 = sphi 0, %s24
    %s44 = sphi 0, %s44
    %s46 = sphi 0, %s44
    %s47 = sphi 0, %s46
    %s61 = sphi 0, %s47
    %s65 = sphi 0, %s65
    %s67 = sphi 0, %s65
    %s68 = sphi 0, %s67
    %s82 = sphi 0, %s68
    %s88 = sphi 0, %s90
    %s91 = sphi 0, %s88
    %s92 = sphi 0, %s91
    %s108 = sphi 0, %s92
    %s114 = sphi 0, %s116
    %s117 = sphi 0, %s114
    %s118 = sphi 0, %s117
    %s134 = sphi 0, %s118
  $region4: #{octave_conv_forward.5} parent=0 // loop_header_branch
    %13 = sbr.rel (%p11) target = $region8
  $region5: #{octave_conv_forward.5} parent=0 // loop_body
    %s15 = ssub.s32 %s10, 1
    %s16 = ssub.s32 %s10, 2
    %s17 = sadd.s32 %s10, 1
    %s18 = ssub.s32 %s10, %s17
    %p19 = scmp.eq.s32.totalorder %s18, 0
    %s21 = sadd.s32 %s20, 1
    %s22 = scalar_select %p19, %s20, %s21
    %p25 = pneg %p19
    %p26 = scmp.eq.s32.totalorder %s10, 1
    %p27 = por %p25, %p26
    %p28 = scmp.ne.s32.totalorder %s20, %s23
    %p29 = scmp.eq.s32.totalorder %s10, 0
    %p30 = por %p28, %p29
    %p31 = scmp.ne.s32.totalorder %s20, %s23
    %p32 = scmp.eq.s32.totalorder %s15, 1
    %p33 = por %p31, %p32
    %p34 = scmp.ne.s32.totalorder %s23, %s24
    %p35 = scmp.eq.s32.totalorder %s15, 0
    %p36 = por %p34, %p35
    %p37 = scmp.ne.s32.totalorder %s23, %s24
    %p38 = scmp.eq.s32.totalorder %s16, 1
    %p39 = por %p37, %p38
    %p41 = scmp.ne.s32.totalorder %s24, %s40
    %p42 = scmp.eq.s32.totalorder %s16, 0
    %p43 = por %p41, %p42
    %s45 = sadd.s32 %s44, 1
    %p48 = scmp.eq.s32.totalorder %s10, 1
    %p49 = scmp.ne.s32.totalorder %s44, %s46
    %p50 = scmp.eq.s32.totalorder %s10, 0
    %p51 = por %p49, %p50
    %p52 = scmp.ne.s32.totalorder %s44, %s46
    %p53 = scmp.eq.s32.totalorder %s15, 1
    %p54 = por %p52, %p53
    %p55 = scmp.ne.s32.totalorder %s46, %s47
    %p56 = scmp.eq.s32.totalorder %s15, 0
    %p57 = por %p55, %p56
    %p58 = scmp.ne.s32.totalorder %s46, %s47
    %p59 = scmp.eq.s32.totalorder %s16, 1
    %p60 = por %p58, %p59
    %p62 = scmp.ne.s32.totalorder %s47, %s61
    %p63 = scmp.eq.s32.totalorder %s16, 0
    %p64 = por %p62, %p63
    %s66 = sadd.s32 %s65, 1
    %p69 = scmp.eq.s32.totalorder %s10, 1
    %p70 = scmp.ne.s32.totalorder %s65, %s67
    %p71 = scmp.eq.s32.totalorder %s10, 0
    %p72 = por %p70, %p71
    %p73 = scmp.ne.s32.totalorder %s65, %s67
    %p74 = scmp.eq.s32.totalorder %s15, 1
    %p75 = por %p73, %p74
    %p76 = scmp.ne.s32.totalorder %s67, %s68
    %p77 = scmp.eq.s32.totalorder %s15, 0
    %p78 = por %p76, %p77
    %p79 = scmp.ne.s32.totalorder %s67, %s68
    %p80 = scmp.eq.s32.totalorder %s16, 1
    %p81 = por %p79, %p80
    %p83 = scmp.ne.s32.totalorder %s68, %s82
    %p84 = scmp.eq.s32.totalorder %s16, 0
    %p85 = por %p83, %p84
    %s86 = ssub.s32 %s10, %s17
    %p87 = scmp.eq.s32.totalorder %s86, 0
    %s89 = sadd.s32 %s88, 1
    %s90 = scalar_select %p87, %s88, %s89
    %p93 = pneg %p87
    %p94 = scmp.eq.s32.totalorder %s10, 1
    %p95 = por %p93, %p94
    %p96 = scmp.ne.s32.totalorder %s88, %s91
    %p97 = scmp.eq.s32.totalorder %s10, 0
    %p98 = por %p96, %p97
    %p99 = scmp.ne.s32.totalorder %s88, %s91
    %p100 = scmp.eq.s32.totalorder %s15, 1
    %p101 = por %p99, %p100
    %p102 = scmp.ne.s32.totalorder %s91, %s92
    %p103 = scmp.eq.s32.totalorder %s15, 0
    %p104 = por %p102, %p103
    %p105 = scmp.ne.s32.totalorder %s91, %s92
    %p106 = scmp.eq.s32.totalorder %s16, 1
    %p107 = por %p105, %p106
    %p109 = scmp.ne.s32.totalorder %s92, %s108
    %p110 = scmp.eq.s32.totalorder %s16, 0
    %p111 = por %p109, %p110
    %s112 = ssub.s32 %s10, %s17
    %p113 = scmp.eq.s32.totalorder %s112, 0
    %s115 = sadd.s32 %s114, 1
    %s116 = scalar_select %p113, %s114, %s115
    %p119 = pneg %p113
    %p120 = scmp.eq.s32.totalorder %s10, 1
    %p121 = por %p119, %p120
    %p122 = scmp.ne.s32.totalorder %s114, %s117
    %p123 = scmp.eq.s32.totalorder %s10, 0
    %p124 = por %p122, %p123
    %p125 = scmp.ne.s32.totalorder %s114, %s117
    %p126 = scmp.eq.s32.totalorder %s15, 1
    %p127 = por %p125, %p126
    %p128 = scmp.ne.s32.totalorder %s117, %s118
    %p129 = scmp.eq.s32.totalorder %s15, 0
    %p130 = por %p128, %p129
    %p131 = scmp.ne.s32.totalorder %s117, %s118
    %p132 = scmp.eq.s32.totalorder %s16, 1
    %p133 = por %p131, %p132
    %p135 = scmp.ne.s32.totalorder %s118, %s134
    %p136 = scmp.eq.s32.totalorder %s16, 0
    %p137 = por %p135, %p136
    %p138 = scmp.le.s32.totalorder 1, %s10
    %p139 = scmp.lt.s32.totalorder %s10, 3
    %p140 = pnand %p138, %p139
    %p141 = pneg %p140
    // Predicated region
    $region9: #{octave_conv_forward.5} parent=5 // pred_check
      _
    $region10: #{octave_conv_forward.5} parent=5 // pred_check_branch
      %143 = sbr.rel (%p140) target = $region12
    $region11: #{octave_conv_forward.5} parent=5 // pred_region
      %s144 = ssub.s32 %s10, 1
      // Predicated region
      $region13: #{octave_conv_forward.5} parent=11 // pred_check
        %p145 = pneg %p57
      $region14: #{octave_conv_forward.5} parent=11 // pred_check_branch
        %147 = sbr.rel (%p145) target = $region16
      $region15: #{octave_conv_forward.5} parent=11 // pred_region
        _
      $region16: #{octave_conv_forward.5} parent=11 // pred_fallthru
        _
      // Predicated region
      $region17: #{octave_conv_forward.5} parent=11 // pred_check
        %p148 = pneg %p78
      $region18: #{octave_conv_forward.5} parent=11 // pred_check_branch
        %150 = sbr.rel (%p148) target = $region20
      $region19: #{octave_conv_forward.5} parent=11 // pred_region
        _
      $region20: #{octave_conv_forward.5} parent=11 // pred_fallthru
        _
    $region12: #{octave_conv_forward.5} parent=5 // pred_fallthru
      _
    %p151 = scmp.lt.s32.totalorder %s10, 2
    // Predicated region
    $region21: #{octave_conv_forward.5} parent=5 // pred_check
      %p152 = pneg %p151
    $region22: #{octave_conv_forward.5} parent=5 // pred_check_branch
      %154 = sbr.rel (%p152) target = $region24
    $region23: #{octave_conv_forward.5} parent=5 // pred_region
      // Predicated region
      $region25: #{octave_conv_forward.5} parent=23 // pred_check
        %p155 = pneg %p30
      $region26: #{octave_conv_forward.5} parent=23 // pred_check_branch
        %157 = sbr.rel (%p155) target = $region28
      $region27: #{octave_conv_forward.5} parent=23 // pred_region
        %p158 = scmp.lt.s32.totalorder %s10, 1
        %s159 = scalar_select %p158, %s10, 1
        %s160 = smul.addr %s159, 32
        %s161 = smul.addr %s160, 8
        %s162 = scalar_lea.vmem %s0, %s161
      $region28: #{octave_conv_forward.5} parent=23 // pred_fallthru
        _
      // Predicated region
      $region29: #{octave_conv_forward.5} parent=23 // pred_check
        %p163 = pneg %p98
      $region30: #{octave_conv_forward.5} parent=23 // pred_check_branch
        %165 = sbr.rel (%p163) target = $region32
      $region31: #{octave_conv_forward.5} parent=23 // pred_region
        %p166 = scmp.lt.s32.totalorder %s10, 1
        %s167 = scalar_select %p166, %s10, 1
        %s168 = smul.addr %s167, 32
        %s169 = smul.addr %s168, 8
        %s170 = scalar_lea.vmem %s3, %s169
      $region32: #{octave_conv_forward.5} parent=23 // pred_fallthru
        _
    $region24: #{octave_conv_forward.5} parent=5 // pred_fallthru
      _
    %p171 = scmp.le.s32.totalorder 1, %s10
    %p172 = scmp.lt.s32.totalorder %s10, 3
    %p173 = pnand %p171, %p172
    %p174 = pneg %p173
    // Predicated region
    $region33: #{octave_conv_forward.5} parent=5 // pred_check
      _
    $region34: #{octave_conv_forward.5} parent=5 // pred_check_branch
      %176 = sbr.rel (%p173) target = $region36
    $region35: #{octave_conv_forward.5} parent=5 // pred_region
      %s177 = ssub.s32 %s10, 1
      %p178 = scmp.lt.s32.totalorder %s15, 1
      %s179 = scalar_select %p178, %s15, 1
      %s180 = smul.addr %s179, 32
      %s181 = smul.addr %s180, 8
      %s182 = scalar_lea.vmem %s0, %s181
      %p183 = pneg %p36
      %p184 = pneg %p33
      %p185 = pneg %p57
      %p186 = pneg %p54
      %p187 = pneg %p78
      %p188 = pneg %p75
      %p189 = scmp.lt.s32.totalorder %s15, 1
      %s190 = scalar_select %p189, %s15, 1
      %s191 = smul.addr %s190, 32
      %s192 = smul.addr %s191, 8
      %s193 = scalar_lea.vmem %s3, %s192
      %p194 = pneg %p104
      %p195 = pneg %p101
      %p196 = pneg %p130
      %p197 = pneg %p127
      %p198 = scmp.lt.s32.totalorder %s15, 1
      %s199 = scalar_select %p198, %s15, 1
      %s200 = smul.addr %s199, 32
      %s201 = smul.addr %s200, 8
      %s202 = scalar_lea.vmem %s4, %s201
      %p203 = scmp.lt.s32.totalorder %s15, 1
      %s204 = scalar_select %p203, %s15, 1
      %s205 = smul.addr %s204, 32
      %s206 = smul.addr %s205, 8
      %s207 = scalar_lea.vmem %s0, %s206
      %p208 = scmp.lt.s32.totalorder %s15, 1
      %s209 = scalar_select %p208, %s15, 1
      %s210 = smul.addr %s209, 32
      %s211 = smul.addr %s210, 8
      %s212 = scalar_lea.vmem %s3, %s211
      %p213 = scmp.lt.s32.totalorder %s15, 1
      %s214 = scalar_select %p213, %s15, 1
      %s215 = smul.addr %s214, 32
      %s216 = smul.addr %s215, 8
      %s217 = scalar_lea.vmem %s4, %s216
      %vm218 = vcmask 15360
      %219 = vst.msk [vmem:[#allocation2] sm:$0xff] %vm218, 0.0
      %220 = vst.msk [vmem:[#allocation2 + $0x8] sm:$0xff] %vm218, 0.0
      %vm221 = vcmask 9216
      %222 = vst.msk [vmem:[#allocation2 + $0x10] sm:$0x3] %vm221, 0.0
      %s223 = scalar_lea.vmem [#allocation2], 408
      %224 = vst.msk [vmem:[%s223] sm:$0xff] %vm218, 0.0
      %225 = vst.msk [vmem:[%s223 + $0x8] sm:$0xff] %vm218, 0.0
      %226 = vst.msk [vmem:[%s223 + $0x10] sm:$0x3] %vm221, 0.0
      %vm227 = vcmask 8192
      %228 = vst.msk [vmem:[#allocation2] sm:$0x1] %vm227, 0.0
      %229 = vst.msk [vmem:[#allocation2 + $0x18] sm:$0x1] %vm227, 0.0
      %230 = vst.msk [vmem:[#allocation2 + $0x30] sm:$0x1] %vm227, 0.0
      %231 = vst.msk [vmem:[#allocation2 + $0x48] sm:$0x1] %vm227, 0.0
      %232 = vst.msk [vmem:[#allocation2 + $0x60] sm:$0x1] %vm227, 0.0
      %233 = vst.msk [vmem:[#allocation2 + $0x78] sm:$0x1] %vm227, 0.0
      %234 = vst.msk [vmem:[#allocation2 + $0x90] sm:$0x1] %vm227, 0.0
      %235 = vst.msk [vmem:[#allocation2 + $0xa8] sm:$0x1] %vm227, 0.0
      %236 = vst.msk [vmem:[#allocation2 + $0xc0] sm:$0x1] %vm227, 0.0
      %237 = vst.msk [vmem:[#allocation2 + $0xd8] sm:$0x1] %vm227, 0.0
      %238 = vst.msk [vmem:[#allocation2 + $0xf0] sm:$0x1] %vm227, 0.0
      %239 = vst.msk [vmem:[#allocation2 + $0x108] sm:$0x1] %vm227, 0.0
      %240 = vst.msk [vmem:[#allocation2 + $0x120] sm:$0x1] %vm227, 0.0
      %241 = vst.msk [vmem:[#allocation2 + $0x138] sm:$0x1] %vm227, 0.0
      %242 = vst.msk [vmem:[#allocation2 + $0x150] sm:$0x1] %vm227, 0.0
      %243 = vst.msk [vmem:[#allocation2 + $0x168] sm:$0x1] %vm227, 0.0
      %244 = vst.msk [vmem:[#allocation2 + $0x180] sm:$0x1] %vm227, 0.0
      %245 = vst.msk [vmem:[#allocation2 + $0x198] sm:$0x1] %vm227, 0.0
      %246 = vst.msk [vmem:[#allocation2 + $0x11] sm:$0x1] %vm227, 0.0
      %247 = vst.msk [vmem:[#allocation2 + $0x29] sm:$0x1] %vm227, 0.0
      %248 = vst.msk [vmem:[#allocation2 + $0x41] sm:$0x1] %vm227, 0.0
      %249 = vst.msk [vmem:[#allocation2 + $0x59] sm:$0x1] %vm227, 0.0
      %250 = vst.msk [vmem:[#allocation2 + $0x71] sm:$0x1] %vm227, 0.0
      %251 = vst.msk [vmem:[#allocation2 + $0x89] sm:$0x1] %vm227, 0.0
      %252 = vst.msk [vmem:[#allocation2 + $0xa1] sm:$0x1] %vm227, 0.0
      %253 = vst.msk [vmem:[#allocation2 + $0xb9] sm:$0x1] %vm227, 0.0
      %254 = vst.msk [vmem:[#allocation2 + $0xd1] sm:$0x1] %vm227, 0.0
      %255 = vst.msk [vmem:[#allocation2 + $0xe9] sm:$0x1] %vm227, 0.0
      %256 = vst.msk [vmem:[#allocation2 + $0x101] sm:$0x1] %vm227, 0.0
      %257 = vst.msk [vmem:[#allocation2 + $0x119] sm:$0x1] %vm227, 0.0
      %258 = vst.msk [vmem:[#allocation2 + $0x131] sm:$0x1] %vm227, 0.0
      %259 = vst.msk [vmem:[#allocation2 + $0x149] sm:$0x1] %vm227, 0.0
      %260 = vst.msk [vmem:[#allocation2 + $0x161] sm:$0x1] %vm227, 0.0
      %261 = vst.msk [vmem:[#allocation2 + $0x179] sm:$0x1] %vm227, 0.0
      %262 = vst.msk [vmem:[#allocation2 + $0x191] sm:$0x1] %vm227, 0.0
      %263 = vst.msk [vmem:[#allocation2 + $0x1a9] sm:$0x1] %vm227, 0.0
      %v264 = vld [vmem:[%s207] sm:$0xff]
      %v265 = vld [vmem:[%s207 + $0x8] sm:$0xff]
      %v266 = vld [vmem:[%s207 + $0x10] sm:$0xff]
      %v267 = vld [vmem:[%s207 + $0x18] sm:$0xff]
      %v268 = vld [vmem:[%s207 + $0x20] sm:$0xff]
      %v269 = vld [vmem:[%s207 + $0x28] sm:$0xff]
      %v270 = vld [vmem:[%s207 + $0x30] sm:$0xff]
      %v271 = vld [vmem:[%s207 + $0x38] sm:$0xff]
      %v272 = vld [vmem:[%s207 + $0x40] sm:$0xff]
      %v273 = vld [vmem:[%s207 + $0x48] sm:$0xff]
      %v274 = vld [vmem:[%s207 + $0x50] sm:$0xff]
      %v275 = vld [vmem:[%s207 + $0x58] sm:$0xff]
      %v276 = vld [vmem:[%s207 + $0x60] sm:$0xff]
      %v277 = vld [vmem:[%s207 + $0x68] sm:$0xff]
      %v278 = vld [vmem:[%s207 + $0x70] sm:$0xff]
      %v279 = vld [vmem:[%s207 + $0x78] sm:$0xff]
      %v280 = vld [vmem:[%s207 + $0x80] sm:$0xff]
      %v281 = vld [vmem:[%s207 + $0x88] sm:$0xff]
      %v282 = vld [vmem:[%s207 + $0x90] sm:$0xff]
      %v283 = vld [vmem:[%s207 + $0x98] sm:$0xff]
      %v284 = vld [vmem:[%s207 + $0xa0] sm:$0xff]
      %v285 = vld [vmem:[%s207 + $0xa8] sm:$0xff]
      %v286 = vld [vmem:[%s207 + $0xb0] sm:$0xff]
      %v287 = vld [vmem:[%s207 + $0xb8] sm:$0xff]
      %v288 = vld [vmem:[%s207 + $0xc0] sm:$0xff]
      %v289 = vld [vmem:[%s207 + $0xc8] sm:$0xff]
      %v290 = vld [vmem:[%s207 + $0xd0] sm:$0xff]
      %v291 = vld [vmem:[%s207 + $0xd8] sm:$0xff]
      %v292 = vld [vmem:[%s207 + $0xe0] sm:$0xff]
      %v293 = vld [vmem:[%s207 + $0xe8] sm:$0xff]
      %v294 = vld [vmem:[%s207 + $0xf0] sm:$0xff]
      %v295 = vld [vmem:[%s207 + $0xf8] sm:$0xff]
      %s296 = scalar_lea.vmem [#allocation2], 24
      %297 = vst.msk [vmem:[%s296 + $0x1] sm:$0xff] %vm218, %v264
      %298 = vst.msk [vmem:[%s296 + $0x9] sm:$0xff] %vm218, %v265
      %299 = vst.msk [vmem:[%s296 + $0x19] sm:$0xff] %vm218, %v266
      %300 = vst.msk [vmem:[%s296 + $0x21] sm:$0xff] %vm218, %v267
      %301 = vst.msk [vmem:[%s296 + $0x31] sm:$0xff] %vm218, %v268
      %302 = vst.msk [vmem:[%s296 + $0x39] sm:$0xff] %vm218, %v269
      %303 = vst.msk [vmem:[%s296 + $0x49] sm:$0xff] %vm218, %v270
      %304 = vst.msk [vmem:[%s296 + $0x51] sm:$0xff] %vm218, %v271
      %305 = vst.msk [vmem:[%s296 + $0x61] sm:$0xff] %vm218, %v272
      %306 = vst.msk [vmem:[%s296 + $0x69] sm:$0xff] %vm218, %v273
      %307 = vst.msk [vmem:[%s296 + $0x79] sm:$0xff] %vm218, %v274
      %308 = vst.msk [vmem:[%s296 + $0x81] sm:$0xff] %vm218, %v275
      %309 = vst.msk [vmem:[%s296 + $0x91] sm:$0xff] %vm218, %v276
      %310 = vst.msk [vmem:[%s296 + $0x99] sm:$0xff] %vm218, %v277
      %311 = vst.msk [vmem:[%s296 + $0xa9] sm:$0xff] %vm218, %v278
      %312 = vst.msk [vmem:[%s296 + $0xb1] sm:$0xff] %vm218, %v279
      %313 = vst.msk [vmem:[%s296 + $0xc1] sm:$0xff] %vm218, %v280
      %314 = vst.msk [vmem:[%s296 + $0xc9] sm:$0xff] %vm218, %v281
      %315 = vst.msk [vmem:[%s296 + $0xd9] sm:$0xff] %vm218, %v282
      %316 = vst.msk [vmem:[%s296 + $0xe1] sm:$0xff] %vm218, %v283
      %317 = vst.msk [vmem:[%s296 + $0xf1] sm:$0xff] %vm218, %v284
      %318 = vst.msk [vmem:[%s296 + $0xf9] sm:$0xff] %vm218, %v285
      %319 = vst.msk [vmem:[%s296 + $0x109] sm:$0xff] %vm218, %v286
      %320 = vst.msk [vmem:[%s296 + $0x111] sm:$0xff] %vm218, %v287
      %321 = vst.msk [vmem:[%s296 + $0x121] sm:$0xff] %vm218, %v288
      %322 = vst.msk [vmem:[%s296 + $0x129] sm:$0xff] %vm218, %v289
      %323 = vst.msk [vmem:[%s296 + $0x139] sm:$0xff] %vm218, %v290
      %324 = vst.msk [vmem:[%s296 + $0x141] sm:$0xff] %vm218, %v291
      %325 = vst.msk [vmem:[%s296 + $0x151] sm:$0xff] %vm218, %v292
      %326 = vst.msk [vmem:[%s296 + $0x159] sm:$0xff] %vm218, %v293
      %327 = vst.msk [vmem:[%s296 + $0x169] sm:$0xff] %vm218, %v294
      %328 = vst.msk [vmem:[%s296 + $0x171] sm:$0xff] %vm218, %v295
      %v329 = vld [vmem:[#allocation2] sm:$0xff]
      %v330 = vld [vmem:[#allocation2 + $0x8] sm:$0xff]
      %v331 = vld [vmem:[#allocation2 + $0x18] sm:$0xff]
      %v332 = vld [vmem:[#allocation2 + $0x20] sm:$0xff]
      %v333 = vld [vmem:[#allocation2 + $0x30] sm:$0xff]
      %v334 = vld [vmem:[#allocation2 + $0x38] sm:$0xff]
      %v335 = vld [vmem:[#allocation2 + $0x48] sm:$0xff]
      %v336 = vld [vmem:[#allocation2 + $0x50] sm:$0xff]
      %v337 = vld [vmem:[#allocation2 + $0x60] sm:$0xff]
      %v338 = vld [vmem:[#allocation2 + $0x68] sm:$0xff]
      %v339 = vld [vmem:[#allocation2 + $0x78] sm:$0xff]
      %v340 = vld [vmem:[#allocation2 + $0x80] sm:$0xff]
      %v341 = vld [vmem:[#allocation2 + $0x90] sm:$0xff]
      %v342 = vld [vmem:[#allocation2 + $0x98] sm:$0xff]
      %v343 = vld [vmem:[#allocation2 + $0xa8] sm:$0xff]
      %v344 = vld [vmem:[#allocation2 + $0xb0] sm:$0xff]
      %v345 = vld [vmem:[#allocation2 + $0xc0] sm:$0xff]
      %v346 = vld [vmem:[#allocation2 + $0xc8] sm:$0xff]
      %v347 = vld [vmem:[#allocation2 + $0xd8] sm:$0xff]
      %v348 = vld [vmem:[#allocation2 + $0xe0] sm:$0xff]
      %v349 = vld [vmem:[#allocation2 + $0xf0] sm:$0xff]
      %v350 = vld [vmem:[#allocation2 + $0xf8] sm:$0xff]
      %v351 = vld [vmem:[#allocation2 + $0x108] sm:$0xff]
      %v352 = vld [vmem:[#allocation2 + $0x110] sm:$0xff]
      %v353 = vld [vmem:[#allocation2 + $0x120] sm:$0xff]
      %v354 = vld [vmem:[#allocation2 + $0x128] sm:$0xff]
      %v355 = vld [vmem:[#allocation2 + $0x138] sm:$0xff]
      %v356 = vld [vmem:[#allocation2 + $0x140] sm:$0xff]
      %v357 = vld [vmem:[#allocation2 + $0x150] sm:$0xff]
      %v358 = vld [vmem:[#allocation2 + $0x158] sm:$0xff]
      %v359 = vld [vmem:[#allocation2 + $0x168] sm:$0xff]
      %v360 = vld [vmem:[#allocation2 + $0x170] sm:$0xff]
      %v361 = vld [vmem:[#allocation2 + $0x1] sm:$0xff]
      %v362 = vld [vmem:[#allocation2 + $0x9] sm:$0xff]
      %v363 = vld [vmem:[#allocation2 + $0x19] sm:$0xff]
      %v364 = vld [vmem:[#allocation2 + $0x21] sm:$0xff]
      %v365 = vld [vmem:[#allocation2 + $0x31] sm:$0xff]
      %v366 = vld [vmem:[#allocation2 + $0x39] sm:$0xff]
      %v367 = vld [vmem:[#allocation2 + $0x49] sm:$0xff]
      %v368 = vld [vmem:[#allocation2 + $0x51] sm:$0xff]
      %v369 = vld [vmem:[#allocation2 + $0x61] sm:$0xff]
      %v370 = vld [vmem:[#allocation2 + $0x69] sm:$0xff]
      %v371 = vld [vmem:[#allocation2 + $0x79] sm:$0xff]
      %v372 = vld [vmem:[#allocation2 + $0x81] sm:$0xff]
      %v373 = vld [vmem:[#allocation2 + $0x91] sm:$0xff]
      %v374 = vld [vmem:[#allocation2 + $0x99] sm:$0xff]
      %v375 = vld [vmem:[#allocation2 + $0xa9] sm:$0xff]
      %v376 = vld [vmem:[#allocation2 + $0xb1] sm:$0xff]
      %v377 = vld [vmem:[#allocation2 + $0xc1] sm:$0xff]
      %v378 = vld [vmem:[#allocation2 + $0xc9] sm:$0xff]
      %v379 = vld [vmem:[#allocation2 + $0xd9] sm:$0xff]
      %v380 = vld [vmem:[#allocation2 + $0xe1] sm:$0xff]
      %v381 = vld [vmem:[#allocation2 + $0xf1] sm:$0xff]
      %v382 = vld [vmem:[#allocation2 + $0xf9] sm:$0xff]
      %v383 = vld [vmem:[#allocation2 + $0x109] sm:$0xff]
      %v384 = vld [vmem:[#allocation2 + $0x111] sm:$0xff]
      %v385 = vld [vmem:[#allocation2 + $0x121] sm:$0xff]
      %v386 = vld [vmem:[#allocation2 + $0x129] sm:$0xff]
      %v387 = vld [vmem:[#allocation2 + $0x139] sm:$0xff]
      %v388 = vld [vmem:[#allocation2 + $0x141] sm:$0xff]
      %v389 = vld [vmem:[#allocation2 + $0x151] sm:$0xff]
      %v390 = vld [vmem:[#allocation2 + $0x159] sm:$0xff]
      %v391 = vld [vmem:[#allocation2 + $0x169] sm:$0xff]
      %v392 = vld [vmem:[#allocation2 + $0x171] sm:$0xff]
      %v393 = vld [vmem:[#allocation2 + $0x2] sm:$0xff]
      %v394 = vld [vmem:[#allocation2 + $0xa] sm:$0xff]
      %v395 = vld [vmem:[#allocation2 + $0x1a] sm:$0xff]
      %v396 = vld [vmem:[#allocation2 + $0x22] sm:$0xff]
      %v397 = vld [vmem:[#allocation2 + $0x32] sm:$0xff]
      %v398 = vld [vmem:[#allocation2 + $0x3a] sm:$0xff]
      %v399 = vld [vmem:[#allocation2 + $0x4a] sm:$0xff]
      %v400 = vld [vmem:[#allocation2 + $0x52] sm:$0xff]
      %v401 = vld [vmem:[#allocation2 + $0x62] sm:$0xff]
      %v402 = vld [vmem:[#allocation2 + $0x6a] sm:$0xff]
      %v403 = vld [vmem:[#allocation2 + $0x7a] sm:$0xff]
      %v404 = vld [vmem:[#allocation2 + $0x82] sm:$0xff]
      %v405 = vld [vmem:[#allocation2 + $0x92] sm:$0xff]
      %v406 = vld [vmem:[#allocation2 + $0x9a] sm:$0xff]
      %v407 = vld [vmem:[#allocation2 + $0xaa] sm:$0xff]
      %v408 = vld [vmem:[#allocation2 + $0xb2] sm:$0xff]
      %v409 = vld [vmem:[#allocation2 + $0xc2] sm:$0xff]
      %v410 = vld [vmem:[#allocation2 + $0xca] sm:$0xff]
      %v411 = vld [vmem:[#allocation2 + $0xda] sm:$0xff]
      %v412 = vld [vmem:[#allocation2 + $0xe2] sm:$0xff]
      %v413 = vld [vmem:[#allocation2 + $0xf2] sm:$0xff]
      %v414 = vld [vmem:[#allocation2 + $0xfa] sm:$0xff]
      %v415 = vld [vmem:[#allocation2 + $0x10a] sm:$0xff]
      %v416 = vld [vmem:[#allocation2 + $0x112] sm:$0xff]
      %v417 = vld [vmem:[#allocation2 + $0x122] sm:$0xff]
      %v418 = vld [vmem:[#allocation2 + $0x12a] sm:$0xff]
      %v419 = vld [vmem:[#allocation2 + $0x13a] sm:$0xff]
      %v420 = vld [vmem:[#allocation2 + $0x142] sm:$0xff]
      %v421 = vld [vmem:[#allocation2 + $0x152] sm:$0xff]
      %v422 = vld [vmem:[#allocation2 + $0x15a] sm:$0xff]
      %v423 = vld [vmem:[#allocation2 + $0x16a] sm:$0xff]
      %v424 = vld [vmem:[#allocation2 + $0x172] sm:$0xff]
      %457 = vrot.lane.b32.xlu0 %v361, 2
      %v458 = vpop.permute.xlu0 %457
      %459 = vrot.lane.b32.xlu0 %v362, 2
      %v460 = vpop.permute.xlu0 %459
      %461 = vrot.lane.b32.xlu0 %v363, 2
      %v462 = vpop.permute.xlu0 %461
      %463 = vrot.lane.b32.xlu0 %v364, 2
      %v464 = vpop.permute.xlu0 %463
      %465 = vrot.lane.b32.xlu0 %v365, 2
      %v466 = vpop.permute.xlu0 %465
      %467 = vrot.lane.b32.xlu0 %v366, 2
      %v468 = vpop.permute.xlu0 %467
      %469 = vrot.lane.b32.xlu0 %v367, 2
      %v470 = vpop.permute.xlu0 %469
      %471 = vrot.lane.b32.xlu0 %v368, 2
      %v472 = vpop.permute.xlu0 %471
      %473 = vrot.lane.b32.xlu0 %v369, 2
      %v474 = vpop.permute.xlu0 %473
      %475 = vrot.lane.b32.xlu0 %v370, 2
      %v476 = vpop.permute.xlu0 %475
      %477 = vrot.lane.b32.xlu0 %v371, 2
      %v478 = vpop.permute.xlu0 %477
      %479 = vrot.lane.b32.xlu0 %v372, 2
      %v480 = vpop.permute.xlu0 %479
      %481 = vrot.lane.b32.xlu0 %v373, 2
      %v482 = vpop.permute.xlu0 %481
      %483 = vrot.lane.b32.xlu0 %v374, 2
      %v484 = vpop.permute.xlu0 %483
      %485 = vrot.lane.b32.xlu0 %v375, 2
      %v486 = vpop.permute.xlu0 %485
      %487 = vrot.lane.b32.xlu0 %v376, 2
      %v488 = vpop.permute.xlu0 %487
      %489 = vrot.lane.b32.xlu0 %v377, 2
      %v490 = vpop.permute.xlu0 %489
      %491 = vrot.lane.b32.xlu0 %v378, 2
      %v492 = vpop.permute.xlu0 %491
      %493 = vrot.lane.b32.xlu0 %v379, 2
      %v494 = vpop.permute.xlu0 %493
      %495 = vrot.lane.b32.xlu0 %v380, 2
      %v496 = vpop.permute.xlu0 %495
      %497 = vrot.lane.b32.xlu0 %v381, 2
      %v498 = vpop.permute.xlu0 %497
      %499 = vrot.lane.b32.xlu0 %v382, 2
      %v500 = vpop.permute.xlu0 %499
      %501 = vrot.lane.b32.xlu0 %v383, 2
      %v502 = vpop.permute.xlu0 %501
      %503 = vrot.lane.b32.xlu0 %v384, 2
      %v504 = vpop.permute.xlu0 %503
      %505 = vrot.lane.b32.xlu0 %v385, 2
      %v506 = vpop.permute.xlu0 %505
      %507 = vrot.lane.b32.xlu0 %v386, 2
      %v508 = vpop.permute.xlu0 %507
      %509 = vrot.lane.b32.xlu0 %v387, 2
      %v510 = vpop.permute.xlu0 %509
      %511 = vrot.lane.b32.xlu0 %v388, 2
      %v512 = vpop.permute.xlu0 %511
      %513 = vrot.lane.b32.xlu0 %v389, 2
      %v514 = vpop.permute.xlu0 %513
      %515 = vrot.lane.b32.xlu0 %v390, 2
      %v516 = vpop.permute.xlu0 %515
      %517 = vrot.lane.b32.xlu0 %v391, 2
      %v518 = vpop.permute.xlu0 %517
      %519 = vrot.lane.b32.xlu0 %v392, 2
      %v520 = vpop.permute.xlu0 %519
      %585 = vrot.lane.b32.xlu0 %v393, 4
      %v586 = vpop.permute.xlu0 %585
      %587 = vrot.lane.b32.xlu0 %v394, 4
      %v588 = vpop.permute.xlu0 %587
      %589 = vrot.lane.b32.xlu0 %v395, 4
      %v590 = vpop.permute.xlu0 %589
      %591 = vrot.lane.b32.xlu0 %v396, 4
      %v592 = vpop.permute.xlu0 %591
      %593 = vrot.lane.b32.xlu0 %v397, 4
      %v594 = vpop.permute.xlu0 %593
      %595 = vrot.lane.b32.xlu0 %v398, 4
      %v596 = vpop.permute.xlu0 %595
      %597 = vrot.lane.b32.xlu0 %v399, 4
      %v598 = vpop.permute.xlu0 %597
      %599 = vrot.lane.b32.xlu0 %v400, 4
      %v600 = vpop.permute.xlu0 %599
      %601 = vrot.lane.b32.xlu0 %v401, 4
      %v602 = vpop.permute.xlu0 %601
      %603 = vrot.lane.b32.xlu0 %v402, 4
      %v604 = vpop.permute.xlu0 %603
      %605 = vrot.lane.b32.xlu0 %v403, 4
      %v606 = vpop.permute.xlu0 %605
      %607 = vrot.lane.b32.xlu0 %v404, 4
      %v608 = vpop.permute.xlu0 %607
      %609 = vrot.lane.b32.xlu0 %v405, 4
      %v610 = vpop.permute.xlu0 %609
      %611 = vrot.lane.b32.xlu0 %v406, 4
      %v612 = vpop.permute.xlu0 %611
      %613 = vrot.lane.b32.xlu0 %v407, 4
      %v614 = vpop.permute.xlu0 %613
      %615 = vrot.lane.b32.xlu0 %v408, 4
      %v616 = vpop.permute.xlu0 %615
      %617 = vrot.lane.b32.xlu0 %v409, 4
      %v618 = vpop.permute.xlu0 %617
      %619 = vrot.lane.b32.xlu0 %v410, 4
      %v620 = vpop.permute.xlu0 %619
      %621 = vrot.lane.b32.xlu0 %v411, 4
      %v622 = vpop.permute.xlu0 %621
      %623 = vrot.lane.b32.xlu0 %v412, 4
      %v624 = vpop.permute.xlu0 %623
      %625 = vrot.lane.b32.xlu0 %v413, 4
      %v626 = vpop.permute.xlu0 %625
      %627 = vrot.lane.b32.xlu0 %v414, 4
      %v628 = vpop.permute.xlu0 %627
      %629 = vrot.lane.b32.xlu0 %v415, 4
      %v630 = vpop.permute.xlu0 %629
      %631 = vrot.lane.b32.xlu0 %v416, 4
      %v632 = vpop.permute.xlu0 %631
      %633 = vrot.lane.b32.xlu0 %v417, 4
      %v634 = vpop.permute.xlu0 %633
      %635 = vrot.lane.b32.xlu0 %v418, 4
      %v636 = vpop.permute.xlu0 %635
      %637 = vrot.lane.b32.xlu0 %v419, 4
      %v638 = vpop.permute.xlu0 %637
      %639 = vrot.lane.b32.xlu0 %v420, 4
      %v640 = vpop.permute.xlu0 %639
      %641 = vrot.lane.b32.xlu0 %v421, 4
      %v642 = vpop.permute.xlu0 %641
      %643 = vrot.lane.b32.xlu0 %v422, 4
      %v644 = vpop.permute.xlu0 %643
      %645 = vrot.lane.b32.xlu0 %v423, 4
      %v646 = vpop.permute.xlu0 %645
      %647 = vrot.lane.b32.xlu0 %v424, 4
      %v648 = vpop.permute.xlu0 %647
      %v681 = vsel %vm218, %v329, %v458
      %v682 = vsel %vm218, %v330, %v460
      %v683 = vsel %vm218, %v331, %v462
      %v684 = vsel %vm218, %v332, %v464
      %v685 = vsel %vm218, %v333, %v466
      %v686 = vsel %vm218, %v334, %v468
      %v687 = vsel %vm218, %v335, %v470
      %v688 = vsel %vm218, %v336, %v472
      %v689 = vsel %vm218, %v337, %v474
      %v690 = vsel %vm218, %v338, %v476
      %v691 = vsel %vm218, %v339, %v478
      %v692 = vsel %vm218, %v340, %v480
      %v693 = vsel %vm218, %v341, %v482
      %v694 = vsel %vm218, %v342, %v484
      %v695 = vsel %vm218, %v343, %v486
      %v696 = vsel %vm218, %v344, %v488
      %v697 = vsel %vm218, %v345, %v490
      %v698 = vsel %vm218, %v346, %v492
      %v699 = vsel %vm218, %v347, %v494
      %v700 = vsel %vm218, %v348, %v496
      %v701 = vsel %vm218, %v349, %v498
      %v702 = vsel %vm218, %v350, %v500
      %v703 = vsel %vm218, %v351, %v502
      %v704 = vsel %vm218, %v352, %v504
      %v705 = vsel %vm218, %v353, %v506
      %v706 = vsel %vm218, %v354, %v508
      %v707 = vsel %vm218, %v355, %v510
      %v708 = vsel %vm218, %v356, %v512
      %v709 = vsel %vm218, %v357, %v514
      %v710 = vsel %vm218, %v358, %v516
      %v711 = vsel %vm218, %v359, %v518
      %v712 = vsel %vm218, %v360, %v520
      %vm713 = vcmask 31744
      %v714 = vsel %vm713, %v681, %v586
      %v715 = vsel %vm713, %v682, %v588
      %v716 = vsel %vm713, %v683, %v590
      %v717 = vsel %vm713, %v684, %v592
      %v718 = vsel %vm713, %v685, %v594
      %v719 = vsel %vm713, %v686, %v596
      %v720 = vsel %vm713, %v687, %v598
      %v721 = vsel %vm713, %v688, %v600
      %v722 = vsel %vm713, %v689, %v602
      %v723 = vsel %vm713, %v690, %v604
      %v724 = vsel %vm713, %v691, %v606
      %v725 = vsel %vm713, %v692, %v608
      %v726 = vsel %vm713, %v693, %v610
      %v727 = vsel %vm713, %v694, %v612
      %v728 = vsel %vm713, %v695, %v614
      %v729 = vsel %vm713, %v696, %v616
      %v730 = vsel %vm713, %v697, %v618
      %v731 = vsel %vm713, %v698, %v620
      %v732 = vsel %vm713, %v699, %v622
      %v733 = vsel %vm713, %v700, %v624
      %v734 = vsel %vm713, %v701, %v626
      %v735 = vsel %vm713, %v702, %v628
      %v736 = vsel %vm713, %v703, %v630
      %v737 = vsel %vm713, %v704, %v632
      %v738 = vsel %vm713, %v705, %v634
      %v739 = vsel %vm713, %v706, %v636
      %v740 = vsel %vm713, %v707, %v638
      %v741 = vsel %vm713, %v708, %v640
      %v742 = vsel %vm713, %v709, %v642
      %v743 = vsel %vm713, %v710, %v644
      %v744 = vsel %vm713, %v711, %v646
      %v745 = vsel %vm713, %v712, %v648
      %v746 = vld [vmem:[%s1] sm:$0x3f]
      %v747 = vld [vmem:[%s296] sm:$0xff]
      %v748 = vld [vmem:[%s296 + $0x8] sm:$0xff]
      %v749 = vld [vmem:[%s296 + $0x18] sm:$0xff]
      %v750 = vld [vmem:[%s296 + $0x20] sm:$0xff]
      %v751 = vld [vmem:[%s296 + $0x30] sm:$0xff]
      %v752 = vld [vmem:[%s296 + $0x38] sm:$0xff]
      %v753 = vld [vmem:[%s296 + $0x48] sm:$0xff]
      %v754 = vld [vmem:[%s296 + $0x50] sm:$0xff]
      %v755 = vld [vmem:[%s296 + $0x60] sm:$0xff]
      %v756 = vld [vmem:[%s296 + $0x68] sm:$0xff]
      %v757 = vld [vmem:[%s296 + $0x78] sm:$0xff]
      %v758 = vld [vmem:[%s296 + $0x80] sm:$0xff]
      %v759 = vld [vmem:[%s296 + $0x90] sm:$0xff]
      %v760 = vld [vmem:[%s296 + $0x98] sm:$0xff]
      %v761 = vld [vmem:[%s296 + $0xa8] sm:$0xff]
      %v762 = vld [vmem:[%s296 + $0xb0] sm:$0xff]
      %v763 = vld [vmem:[%s296 + $0xc0] sm:$0xff]
      %v764 = vld [vmem:[%s296 + $0xc8] sm:$0xff]
      %v765 = vld [vmem:[%s296 + $0xd8] sm:$0xff]
      %v766 = vld [vmem:[%s296 + $0xe0] sm:$0xff]
      %v767 = vld [vmem:[%s296 + $0xf0] sm:$0xff]
      %v768 = vld [vmem:[%s296 + $0xf8] sm:$0xff]
      %v769 = vld [vmem:[%s296 + $0x108] sm:$0xff]
      %v770 = vld [vmem:[%s296 + $0x110] sm:$0xff]
      %v771 = vld [vmem:[%s296 + $0x120] sm:$0xff]
      %v772 = vld [vmem:[%s296 + $0x128] sm:$0xff]
      %v773 = vld [vmem:[%s296 + $0x138] sm:$0xff]
      %v774 = vld [vmem:[%s296 + $0x140] sm:$0xff]
      %v775 = vld [vmem:[%s296 + $0x150] sm:$0xff]
      %v776 = vld [vmem:[%s296 + $0x158] sm:$0xff]
      %v777 = vld [vmem:[%s296 + $0x168] sm:$0xff]
      %v778 = vld [vmem:[%s296 + $0x170] sm:$0xff]
      %v779 = vld [vmem:[%s296 + $0x1] sm:$0xff]
      %v780 = vld [vmem:[%s296 + $0x9] sm:$0xff]
      %v781 = vld [vmem:[%s296 + $0x19] sm:$0xff]
      %v782 = vld [vmem:[%s296 + $0x21] sm:$0xff]
      %v783 = vld [vmem:[%s296 + $0x31] sm:$0xff]
      %v784 = vld [vmem:[%s296 + $0x39] sm:$0xff]
      %v785 = vld [vmem:[%s296 + $0x49] sm:$0xff]
      %v786 = vld [vmem:[%s296 + $0x51] sm:$0xff]
      %v787 = vld [vmem:[%s296 + $0x61] sm:$0xff]
      %v788 = vld [vmem:[%s296 + $0x69] sm:$0xff]
      %v789 = vld [vmem:[%s296 + $0x79] sm:$0xff]
      %v790 = vld [vmem:[%s296 + $0x81] sm:$0xff]
      %v791 = vld [vmem:[%s296 + $0x91] sm:$0xff]
      %v792 = vld [vmem:[%s296 + $0x99] sm:$0xff]
      %v793 = vld [vmem:[%s296 + $0xa9] sm:$0xff]
      %v794 = vld [vmem:[%s296 + $0xb1] sm:$0xff]
      %v795 = vld [vmem:[%s296 + $0xc1] sm:$0xff]
      %v796 = vld [vmem:[%s296 + $0xc9] sm:$0xff]
      %v797 = vld [vmem:[%s296 + $0xd9] sm:$0xff]
      %v798 = vld [vmem:[%s296 + $0xe1] sm:$0xff]
      %v799 = vld [vmem:[%s296 + $0xf1] sm:$0xff]
      %v800 = vld [vmem:[%s296 + $0xf9] sm:$0xff]
      %v801 = vld [vmem:[%s296 + $0x109] sm:$0xff]
      %v802 = vld [vmem:[%s296 + $0x111] sm:$0xff]
      %v803 = vld [vmem:[%s296 + $0x121] sm:$0xff]
      %v804 = vld [vmem:[%s296 + $0x129] sm:$0xff]
      %v805 = vld [vmem:[%s296 + $0x139] sm:$0xff]
      %v806 = vld [vmem:[%s296 + $0x141] sm:$0xff]
      %v807 = vld [vmem:[%s296 + $0x151] sm:$0xff]
      %v808 = vld [vmem:[%s296 + $0x159] sm:$0xff]
      %v809 = vld [vmem:[%s296 + $0x169] sm:$0xff]
      %v810 = vld [vmem:[%s296 + $0x171] sm:$0xff]
      %v811 = vld [vmem:[%s296 + $0x2] sm:$0xff]
      %v812 = vld [vmem:[%s296 + $0xa] sm:$0xff]
      %v813 = vld [vmem:[%s296 + $0x1a] sm:$0xff]
      %v814 = vld [vmem:[%s296 + $0x22] sm:$0xff]
      %v815 = vld [vmem:[%s296 + $0x32] sm:$0xff]
      %v816 = vld [vmem:[%s296 + $0x3a] sm:$0xff]
      %v817 = vld [vmem:[%s296 + $0x4a] sm:$0xff]
      %v818 = vld [vmem:[%s296 + $0x52] sm:$0xff]
      %v819 = vld [vmem:[%s296 + $0x62] sm:$0xff]
      %v820 = vld [vmem:[%s296 + $0x6a] sm:$0xff]
      %v821 = vld [vmem:[%s296 + $0x7a] sm:$0xff]
      %v822 = vld [vmem:[%s296 + $0x82] sm:$0xff]
      %v823 = vld [vmem:[%s296 + $0x92] sm:$0xff]
      %v824 = vld [vmem:[%s296 + $0x9a] sm:$0xff]
      %v825 = vld [vmem:[%s296 + $0xaa] sm:$0xff]
      %v826 = vld [vmem:[%s296 + $0xb2] sm:$0xff]
      %v827 = vld [vmem:[%s296 + $0xc2] sm:$0xff]
      %v828 = vld [vmem:[%s296 + $0xca] sm:$0xff]
      %v829 = vld [vmem:[%s296 + $0xda] sm:$0xff]
      %v830 = vld [vmem:[%s296 + $0xe2] sm:$0xff]
      %v831 = vld [vmem:[%s296 + $0xf2] sm:$0xff]
      %v832 = vld [vmem:[%s296 + $0xfa] sm:$0xff]
      %v833 = vld [vmem:[%s296 + $0x10a] sm:$0xff]
      %v834 = vld [vmem:[%s296 + $0x112] sm:$0xff]
      %v835 = vld [vmem:[%s296 + $0x122] sm:$0xff]
      %v836 = vld [vmem:[%s296 + $0x12a] sm:$0xff]
      %v837 = vld [vmem:[%s296 + $0x13a] sm:$0xff]
      %v838 = vld [vmem:[%s296 + $0x142] sm:$0xff]
      %v839 = vld [vmem:[%s296 + $0x152] sm:$0xff]
      %v840 = vld [vmem:[%s296 + $0x15a] sm:$0xff]
      %v841 = vld [vmem:[%s296 + $0x16a] sm:$0xff]
      %v842 = vld [vmem:[%s296 + $0x172] sm:$0xff]
      %875 = vrot.lane.b32.xlu0 %v779, 2
      %v876 = vpop.permute.xlu0 %875
      %877 = vrot.lane.b32.xlu0 %v780, 2
      %v878 = vpop.permute.xlu0 %877
      %879 = vrot.lane.b32.xlu0 %v781, 2
      %v880 = vpop.permute.xlu0 %879
      %881 = vrot.lane.b32.xlu0 %v782, 2
      %v882 = vpop.permute.xlu0 %881
      %883 = vrot.lane.b32.xlu0 %v783, 2
      %v884 = vpop.permute.xlu0 %883
      %885 = vrot.lane.b32.xlu0 %v784, 2
      %v886 = vpop.permute.xlu0 %885
      %887 = vrot.lane.b32.xlu0 %v785, 2
      %v888 = vpop.permute.xlu0 %887
      %889 = vrot.lane.b32.xlu0 %v786, 2
      %v890 = vpop.permute.xlu0 %889
      %891 = vrot.lane.b32.xlu0 %v787, 2
      %v892 = vpop.permute.xlu0 %891
      %893 = vrot.lane.b32.xlu0 %v788, 2
      %v894 = vpop.permute.xlu0 %893
      %895 = vrot.lane.b32.xlu0 %v789, 2
      %v896 = vpop.permute.xlu0 %895
      %897 = vrot.lane.b32.xlu0 %v790, 2
      %v898 = vpop.permute.xlu0 %897
      %899 = vrot.lane.b32.xlu0 %v791, 2
      %v900 = vpop.permute.xlu0 %899
      %901 = vrot.lane.b32.xlu0 %v792, 2
      %v902 = vpop.permute.xlu0 %901
      %903 = vrot.lane.b32.xlu0 %v793, 2
      %v904 = vpop.permute.xlu0 %903
      %905 = vrot.lane.b32.xlu0 %v794, 2
      %v906 = vpop.permute.xlu0 %905
      %907 = vrot.lane.b32.xlu0 %v795, 2
      %v908 = vpop.permute.xlu0 %907
      %909 = vrot.lane.b32.xlu0 %v796, 2
      %v910 = vpop.permute.xlu0 %909
      %911 = vrot.lane.b32.xlu0 %v797, 2
      %v912 = vpop.permute.xlu0 %911
      %913 = vrot.lane.b32.xlu0 %v798, 2
      %v914 = vpop.permute.xlu0 %913
      %915 = vrot.lane.b32.xlu0 %v799, 2
      %v916 = vpop.permute.xlu0 %915
      %917 = vrot.lane.b32.xlu0 %v800, 2
      %v918 = vpop.permute.xlu0 %917
      %919 = vrot.lane.b32.xlu0 %v801, 2
      %v920 = vpop.permute.xlu0 %919
      %921 = vrot.lane.b32.xlu0 %v802, 2
      %v922 = vpop.permute.xlu0 %921
      %923 = vrot.lane.b32.xlu0 %v803, 2
      %v924 = vpop.permute.xlu0 %923
      %925 = vrot.lane.b32.xlu0 %v804, 2
      %v926 = vpop.permute.xlu0 %925
      %927 = vrot.lane.b32.xlu0 %v805, 2
      %v928 = vpop.permute.xlu0 %927
      %929 = vrot.lane.b32.xlu0 %v806, 2
      %v930 = vpop.permute.xlu0 %929
      %931 = vrot.lane.b32.xlu0 %v807, 2
      %v932 = vpop.permute.xlu0 %931
      %933 = vrot.lane.b32.xlu0 %v808, 2
      %v934 = vpop.permute.xlu0 %933
      %935 = vrot.lane.b32.xlu0 %v809, 2
      %v936 = vpop.permute.xlu0 %935
      %937 = vrot.lane.b32.xlu0 %v810, 2
      %v938 = vpop.permute.xlu0 %937
      %1003 = vrot.lane.b32.xlu0 %v811, 4
      %v1004 = vpop.permute.xlu0 %1003
      %1005 = vrot.lane.b32.xlu0 %v812, 4
      %v1006 = vpop.permute.xlu0 %1005
      %1007 = vrot.lane.b32.xlu0 %v813, 4
      %v1008 = vpop.permute.xlu0 %1007
      %1009 = vrot.lane.b32.xlu0 %v814, 4
      %v1010 = vpop.permute.xlu0 %1009
      %1011 = vrot.lane.b32.xlu0 %v815, 4
      %v1012 = vpop.permute.xlu0 %1011
      %1013 = vrot.lane.b32.xlu0 %v816, 4
      %v1014 = vpop.permute.xlu0 %1013
      %1015 = vrot.lane.b32.xlu0 %v817, 4
      %v1016 = vpop.permute.xlu0 %1015
      %1017 = vrot.lane.b32.xlu0 %v818, 4
      %v1018 = vpop.permute.xlu0 %1017
      %1019 = vrot.lane.b32.xlu0 %v819, 4
      %v1020 = vpop.permute.xlu0 %1019
      %1021 = vrot.lane.b32.xlu0 %v820, 4
      %v1022 = vpop.permute.xlu0 %1021
      %1023 = vrot.lane.b32.xlu0 %v821, 4
      %v1024 = vpop.permute.xlu0 %1023
      %1025 = vrot.lane.b32.xlu0 %v822, 4
      %v1026 = vpop.permute.xlu0 %1025
      %1027 = vrot.lane.b32.xlu0 %v823, 4
      %v1028 = vpop.permute.xlu0 %1027
      %1029 = vrot.lane.b32.xlu0 %v824, 4
      %v1030 = vpop.permute.xlu0 %1029
      %1031 = vrot.lane.b32.xlu0 %v825, 4
      %v1032 = vpop.permute.xlu0 %1031
      %1033 = vrot.lane.b32.xlu0 %v826, 4
      %v1034 = vpop.permute.xlu0 %1033
      %1035 = vrot.lane.b32.xlu0 %v827, 4
      %v1036 = vpop.permute.xlu0 %1035
      %1037 = vrot.lane.b32.xlu0 %v828, 4
      %v1038 = vpop.permute.xlu0 %1037
      %1039 = vrot.lane.b32.xlu0 %v829, 4
      %v1040 = vpop.permute.xlu0 %1039
      %1041 = vrot.lane.b32.xlu0 %v830, 4
      %v1042 = vpop.permute.xlu0 %1041
      %1043 = vrot.lane.b32.xlu0 %v831, 4
      %v1044 = vpop.permute.xlu0 %1043
      %1045 = vrot.lane.b32.xlu0 %v832, 4
      %v1046 = vpop.permute.xlu0 %1045
      %1047 = vrot.lane.b32.xlu0 %v833, 4
      %v1048 = vpop.permute.xlu0 %1047
      %1049 = vrot.lane.b32.xlu0 %v834, 4
      %v1050 = vpop.permute.xlu0 %1049
      %1051 = vrot.lane.b32.xlu0 %v835, 4
      %v1052 = vpop.permute.xlu0 %1051
      %1053 = vrot.lane.b32.xlu0 %v836, 4
      %v1054 = vpop.permute.xlu0 %1053
      %1055 = vrot.lane.b32.xlu0 %v837, 4
      %v1056 = vpop.permute.xlu0 %1055
      %1057 = vrot.lane.b32.xlu0 %v838, 4
      %v1058 = vpop.permute.xlu0 %1057
      %1059 = vrot.lane.b32.xlu0 %v839, 4
      %v1060 = vpop.permute.xlu0 %1059
      %1061 = vrot.lane.b32.xlu0 %v840, 4
      %v1062 = vpop.permute.xlu0 %1061
      %1063 = vrot.lane.b32.xlu0 %v841, 4
      %v1064 = vpop.permute.xlu0 %1063
      %1065 = vrot.lane.b32.xlu0 %v842, 4
      %v1066 = vpop.permute.xlu0 %1065
      %v1099 = vsel %vm218, %v747, %v876
      %v1100 = vsel %vm218, %v748, %v878
      %v1101 = vsel %vm218, %v749, %v880
      %v1102 = vsel %vm218, %v750, %v882
      %v1103 = vsel %vm218, %v751, %v884
      %v1104 = vsel %vm218, %v752, %v886
      %v1105 = vsel %vm218, %v753, %v888
      %v1106 = vsel %vm218, %v754, %v890
      %v1107 = vsel %vm218, %v755, %v892
      %v1108 = vsel %vm218, %v756, %v894
      %v1109 = vsel %vm218, %v757, %v896
      %v1110 = vsel %vm218, %v758, %v898
      %v1111 = vsel %vm218, %v759, %v900
      %v1112 = vsel %vm218, %v760, %v902
      %v1113 = vsel %vm218, %v761, %v904
      %v1114 = vsel %vm218, %v762, %v906
      %v1115 = vsel %vm218, %v763, %v908
      %v1116 = vsel %vm218, %v764, %v910
      %v1117 = vsel %vm218, %v765, %v912
      %v1118 = vsel %vm218, %v766, %v914
      %v1119 = vsel %vm218, %v767, %v916
      %v1120 = vsel %vm218, %v768, %v918
      %v1121 = vsel %vm218, %v769, %v920
      %v1122 = vsel %vm218, %v770, %v922
      %v1123 = vsel %vm218, %v771, %v924
      %v1124 = vsel %vm218, %v772, %v926
      %v1125 = vsel %vm218, %v773, %v928
      %v1126 = vsel %vm218, %v774, %v930
      %v1127 = vsel %vm218, %v775, %v932
      %v1128 = vsel %vm218, %v776, %v934
      %v1129 = vsel %vm218, %v777, %v936
      %v1130 = vsel %vm218, %v778, %v938
      %v1131 = vsel %vm713, %v1099, %v1004
      %v1132 = vsel %vm713, %v1100, %v1006
      %v1133 = vsel %vm713, %v1101, %v1008
      %v1134 = vsel %vm713, %v1102, %v1010
      %v1135 = vsel %vm713, %v1103, %v1012
      %v1136 = vsel %vm713, %v1104, %v1014
      %v1137 = vsel %vm713, %v1105, %v1016
      %v1138 = vsel %vm713, %v1106, %v1018
      %v1139 = vsel %vm713, %v1107, %v1020
      %v1140 = vsel %vm713, %v1108, %v1022
      %v1141 = vsel %vm713, %v1109, %v1024
      %v1142 = vsel %vm713, %v1110, %v1026
      %v1143 = vsel %vm713, %v1111, %v1028
      %v1144 = vsel %vm713, %v1112, %v1030
      %v1145 = vsel %vm713, %v1113, %v1032
      %v1146 = vsel %vm713, %v1114, %v1034
      %v1147 = vsel %vm713, %v1115, %v1036
      %v1148 = vsel %vm713, %v1116, %v1038
      %v1149 = vsel %vm713, %v1117, %v1040
      %v1150 = vsel %vm713, %v1118, %v1042
      %v1151 = vsel %vm713, %v1119, %v1044
      %v1152 = vsel %vm713, %v1120, %v1046
      %v1153 = vsel %vm713, %v1121, %v1048
      %v1154 = vsel %vm713, %v1122, %v1050
      %v1155 = vsel %vm713, %v1123, %v1052
      %v1156 = vsel %vm713, %v1124, %v1054
      %v1157 = vsel %vm713, %v1125, %v1056
      %v1158 = vsel %vm713, %v1126, %v1058
      %v1159 = vsel %vm713, %v1127, %v1060
      %v1160 = vsel %vm713, %v1128, %v1062
      %v1161 = vsel %vm713, %v1129, %v1064
      %v1162 = vsel %vm713, %v1130, %v1066
      %s1163 = scalar_lea.vmem %s1, 8
      %v1164 = vld [vmem:[%s1163] sm:$0x3f]
      %vm1165 = vcmask 48128
      %v1167 = vsel %vm1165, %v1131, 0
      %v1170 = vsel %vm1165, %v1132, 0
      %v1173 = vsel %vm1165, %v1133, 0
      %v1176 = vsel %vm1165, %v1134, 0
      %v1179 = vsel %vm1165, %v1135, 0
      %v1182 = vsel %vm1165, %v1136, 0
      %v1185 = vsel %vm1165, %v1137, 0
      %v1188 = vsel %vm1165, %v1138, 0
      %v1191 = vsel %vm1165, %v1139, 0
      %v1194 = vsel %vm1165, %v1140, 0
      %v1197 = vsel %vm1165, %v1141, 0
      %v1200 = vsel %vm1165, %v1142, 0
      %v1203 = vsel %vm1165, %v1143, 0
      %v1206 = vsel %vm1165, %v1144, 0
      %v1209 = vsel %vm1165, %v1145, 0
      %v1212 = vsel %vm1165, %v1146, 0
      %v1215 = vsel %vm1165, %v1147, 0
      %v1218 = vsel %vm1165, %v1148, 0
      %v1221 = vsel %vm1165, %v1149, 0
      %v1224 = vsel %vm1165, %v1150, 0
      %v1227 = vsel %vm1165, %v1151, 0
      %v1230 = vsel %vm1165, %v1152, 0
      %v1233 = vsel %vm1165, %v1153, 0
      %v1236 = vsel %vm1165, %v1154, 0
      %v1239 = vsel %vm1165, %v1155, 0
      %v1242 = vsel %vm1165, %v1156, 0
      %v1245 = vsel %vm1165, %v1157, 0
      %v1248 = vsel %vm1165, %v1158, 0
      %v1251 = vsel %vm1165, %v1159, 0
      %v1254 = vsel %vm1165, %v1160, 0
      %v1257 = vsel %vm1165, %v1161, 0
      %v1260 = vsel %vm1165, %v1162, 0
      %vm1262 = vcmask 1045504
      %v1264 = vsel %vm1262, %v1164, 0
      %1266 = vmatprep.subr.mxu0 0.0
      %1267 = vmatpush1.msra.mxu0 0.0
      %1268 = vmatprep.subr.mxu0 0.0
      %1269 = vmatpush1.msra.mxu0 0.0
      %1270 = vmatprep.subr.mxu0 0.0
      %1271 = vmatpush1.msra.mxu0 0.0
      %1272 = vmatprep.subr.mxu0 0.0
      %1273 = vmatpush1.msra.mxu0 0.0
      %1274 = vmatprep.subr.mxu0 0.0
      %1275 = vmatpush1.msra.mxu0 0.0
      %1276 = vmatprep.subr.mxu0 0.0
      %1277 = vmatpush1.msra.mxu0 0.0
      %1278 = vmatprep.subr.mxu0 0.0
      %1279 = vmatpush1.msra.mxu0 0.0
      %1280 = vmatprep.subr.mxu0 0.0
      %1281 = vmatpush1.msra.mxu0 0.0
      %1282 = vmatprep.subr.mxu0 0.0
      %1283 = vmatpush1.msra.mxu0 0.0
      %1284 = vmatprep.subr.mxu0 0.0
      %1285 = vmatpush1.msra.mxu0 0.0
      %1286 = vmatprep.subr.mxu0 0.0
      %1287 = vmatpush1.msra.mxu0 0.0
      %1288 = vmatprep.subr.mxu0 0.0
      %1289 = vmatpush1.msra.mxu0 0.0
      %1290 = vmatprep.subr.mxu0 0.0
      %1291 = vmatpush1.msra.mxu0 0.0
      %1292 = vmatprep.subr.mxu0 0.0
      %1293 = vmatpush1.msra.mxu0 0.0
      %1294 = vmatprep.subr.mxu0 0.0
      %1295 = vmatpush1.msra.mxu0 0.0
      %1296 = vmatprep.subr.mxu0 0.0
      %1297 = vmatpush1.msra.mxu0 %v1264
      %1298 = vmatprep.subr.mxu0 0.0
      %1299 = vmatpush2.msra.mxu0 0.0
      %1300 = vmatprep.subr.mxu0 0.0
      %1301 = vmatpush2.msra.mxu0 0.0
      %1302 = vmatprep.subr.mxu0 0.0
      %1303 = vmatpush2.msra.mxu0 0.0
      %1304 = vmatprep.subr.mxu0 0.0
      %1305 = vmatpush2.msra.mxu0 0.0
      %1306 = vmatprep.subr.mxu0 0.0
      %1307 = vmatpush2.msra.mxu0 0.0
      %1308 = vmatprep.subr.mxu0 0.0
      %1309 = vmatpush2.msra.mxu0 0.0
      %1310 = vmatprep.subr.mxu0 0.0
      %1311 = vmatpush2.msra.mxu0 0.0
      %1312 = vmatprep.subr.mxu0 0.0
      %1313 = vmatpush2.msra.mxu0 0.0
      %1314 = vmatprep.subr.mxu0 0.0
      %1315 = vmatpush2.msra.mxu0 0.0
      %1316 = vmatprep.subr.mxu0 0.0
      %1317 = vmatpush2.msra.mxu0 0.0
      %1318 = vmatprep.subr.mxu0 0.0
      %1319 = vmatpush2.msra.mxu0 0.0
      %1320 = vmatprep.subr.mxu0 0.0
      %1321 = vmatpush2.msra.mxu0 0.0
      %1322 = vmatprep.subr.mxu0 0.0
      %1323 = vmatpush2.msra.mxu0 0.0
      %1324 = vmatprep.subr.mxu0 0.0
      %1325 = vmatpush2.msra.mxu0 0.0
      %1326 = vmatprep.subr.mxu0 0.0
      %1327 = vmatpush2.msra.mxu0 0.0
      %1328 = vmatprep.subr.mxu0 0.0
      %1329 = vmatpush2.msra.mxu0 0.0
      %1330 = vmatprep.mubr.f32.mxu0 0.0
      %1331 = vmatmul.mubr.f32.gmra.mxu0 %v1167
      %v1332 = vpop.f32.mrf.mxu0
      %v1333 = vadd.f32 0.0, %v1332
      %v1334 = vpop.f32.mrf.mxu0
      %1335 = vmatprep.mubr.f32.mxu0 0.0
      %1336 = vmatmul.mubr.f32.gmra.mxu0 %v1170
      %v1337 = vpop.f32.mrf.mxu0
      %v1338 = vadd.f32 0.0, %v1337
      %v1339 = vpop.f32.mrf.mxu0
      %1340 = vmatprep.mubr.f32.mxu0 0.0
      %1341 = vmatmul.mubr.f32.gmra.mxu0 %v1173
      %v1342 = vpop.f32.mrf.mxu0
      %v1343 = vadd.f32 0.0, %v1342
      %v1344 = vpop.f32.mrf.mxu0
      %1345 = vmatprep.mubr.f32.mxu0 0.0
      %1346 = vmatmul.mubr.f32.gmra.mxu0 %v1176
      %v1347 = vpop.f32.mrf.mxu0
      %v1348 = vadd.f32 0.0, %v1347
      %v1349 = vpop.f32.mrf.mxu0
      %1350 = vmatprep.mubr.f32.mxu0 0.0
      %1351 = vmatmul.mubr.f32.gmra.mxu0 %v1179
      %v1352 = vpop.f32.mrf.mxu0
      %v1353 = vadd.f32 0.0, %v1352
      %v1354 = vpop.f32.mrf.mxu0
      %1355 = vmatprep.mubr.f32.mxu0 0.0
      %1356 = vmatmul.mubr.f32.gmra.mxu0 %v1182
      %v1357 = vpop.f32.mrf.mxu0
      %v1358 = vadd.f32 0.0, %v1357
      %v1359 = vpop.f32.mrf.mxu0
      %1360 = vmatprep.mubr.f32.mxu0 0.0
      %1361 = vmatmul.mubr.f32.gmra.mxu0 %v1185
      %v1362 = vpop.f32.mrf.mxu0
      %v1363 = vadd.f32 0.0, %v1362
      %v1364 = vpop.f32.mrf.mxu0
      %1365 = vmatprep.mubr.f32.mxu0 0.0
      %1366 = vmatmul.mubr.f32.gmra.mxu0 %v1188
      %v1367 = vpop.f32.mrf.mxu0
      %v1368 = vadd.f32 0.0, %v1367
      %v1369 = vpop.f32.mrf.mxu0
      %1370 = vmatprep.mubr.f32.mxu0 0.0
      %1371 = vmatmul.mubr.f32.gmra.mxu0 %v1191
      %v1372 = vpop.f32.mrf.mxu0
      %v1373 = vadd.f32 0.0, %v1372
      %v1374 = vpop.f32.mrf.mxu0
      %1375 = vmatprep.mubr.f32.mxu0 0.0
      %1376 = vmatmul.mubr.f32.gmra.mxu0 %v1194
      %v1377 = vpop.f32.mrf.mxu0
      %v1378 = vadd.f32 0.0, %v1377
      %v1379 = vpop.f32.mrf.mxu0
      %1380 = vmatprep.mubr.f32.mxu0 0.0
      %1381 = vmatmul.mubr.f32.gmra.mxu0 %v1197
      %v1382 = vpop.f32.mrf.mxu0
      %v1383 = vadd.f32 0.0, %v1382
      %v1384 = vpop.f32.mrf.mxu0
      %1385 = vmatprep.mubr.f32.mxu0 0.0
      %1386 = vmatmul.mubr.f32.gmra.mxu0 %v1200
      %v1387 = vpop.f32.mrf.mxu0
      %v1388 = vadd.f32 0.0, %v1387
      %v1389 = vpop.f32.mrf.mxu0
      %1390 = vmatprep.mubr.f32.mxu0 0.0
      %1391 = vmatmul.mubr.f32.gmra.mxu0 %v1203
      %v1392 = vpop.f32.mrf.mxu0
      %v1393 = vadd.f32 0.0, %v1392
      %v1394 = vpop.f32.mrf.mxu0
      %1395 = vmatprep.mubr.f32.mxu0 0.0
      %1396 = vmatmul.mubr.f32.gmra.mxu0 %v1206
      %v1397 = vpop.f32.mrf.mxu0
      %v1398 = vadd.f32 0.0, %v1397
      %v1399 = vpop.f32.mrf.mxu0
      %1400 = vmatprep.mubr.f32.mxu0 0.0
      %1401 = vmatmul.mubr.f32.gmra.mxu0 %v1209
      %v1402 = vpop.f32.mrf.mxu0
      %v1403 = vadd.f32 0.0, %v1402
      %v1404 = vpop.f32.mrf.mxu0
      %1405 = vmatprep.mubr.f32.mxu0 0.0
      %1406 = vmatmul.mubr.f32.gmra.mxu0 %v1212
      %v1407 = vpop.f32.mrf.mxu0
      %v1408 = vadd.f32 0.0, %v1407
      %v1409 = vpop.f32.mrf.mxu0
      %1410 = vmatprep.mubr.f32.mxu0 0.0
      %1411 = vmatmul.mubr.f32.gmra.mxu0 %v1215
      %v1412 = vpop.f32.mrf.mxu0
      %v1413 = vadd.f32 0.0, %v1412
      %v1414 = vpop.f32.mrf.mxu0
      %1415 = vmatprep.mubr.f32.mxu0 0.0
      %1416 = vmatmul.mubr.f32.gmra.mxu0 %v1218
      %v1417 = vpop.f32.mrf.mxu0
      %v1418 = vadd.f32 0.0, %v1417
      %v1419 = vpop.f32.mrf.mxu0
      %1420 = vmatprep.mubr.f32.mxu0 0.0
      %1421 = vmatmul.mubr.f32.gmra.mxu0 %v1221
      %v1422 = vpop.f32.mrf.mxu0
      %v1423 = vadd.f32 0.0, %v1422
      %v1424 = vpop.f32.mrf.mxu0
      %1425 = vmatprep.mubr.f32.mxu0 0.0
      %1426 = vmatmul.mubr.f32.gmra.mxu0 %v1224
      %v1427 = vpop.f32.mrf.mxu0
      %v1428 = vadd.f32 0.0, %v1427
      %v1429 = vpop.f32.mrf.mxu0
      %1430 = vmatprep.mubr.f32.mxu0 0.0
      %1431 = vmatmul.mubr.f32.gmra.mxu0 %v1227
      %v1432 = vpop.f32.mrf.mxu0
      %v1433 = vadd.f32 0.0, %v1432
      %v1434 = vpop.f32.mrf.mxu0
      %1435 = vmatprep.mubr.f32.mxu0 0.0
      %1436 = vmatmul.mubr.f32.gmra.mxu0 %v1230
      %v1437 = vpop.f32.mrf.mxu0
      %v1438 = vadd.f32 0.0, %v1437
      %v1439 = vpop.f32.mrf.mxu0
      %1440 = vmatprep.mubr.f32.mxu0 0.0
      %1441 = vmatmul.mubr.f32.gmra.mxu0 %v1233
      %v1442 = vpop.f32.mrf.mxu0
      %v1443 = vadd.f32 0.0, %v1442
      %v1444 = vpop.f32.mrf.mxu0
      %1445 = vmatprep.mubr.f32.mxu0 0.0
      %1446 = vmatmul.mubr.f32.gmra.mxu0 %v1236
      %v1447 = vpop.f32.mrf.mxu0
      %v1448 = vadd.f32 0.0, %v1447
      %v1449 = vpop.f32.mrf.mxu0
      %1450 = vmatprep.mubr.f32.mxu0 0.0
      %1451 = vmatmul.mubr.f32.gmra.mxu0 %v1239
      %v1452 = vpop.f32.mrf.mxu0
      %v1453 = vadd.f32 0.0, %v1452
      %v1454 = vpop.f32.mrf.mxu0
      %1455 = vmatprep.mubr.f32.mxu0 0.0
      %1456 = vmatmul.mubr.f32.gmra.mxu0 %v1242
      %v1457 = vpop.f32.mrf.mxu0
      %v1458 = vadd.f32 0.0, %v1457
      %v1459 = vpop.f32.mrf.mxu0
      %1460 = vmatprep.mubr.f32.mxu0 0.0
      %1461 = vmatmul.mubr.f32.gmra.mxu0 %v1245
      %v1462 = vpop.f32.mrf.mxu0
      %v1463 = vadd.f32 0.0, %v1462
      %v1464 = vpop.f32.mrf.mxu0
      %1465 = vmatprep.mubr.f32.mxu0 0.0
      %1466 = vmatmul.mubr.f32.gmra.mxu0 %v1248
      %v1467 = vpop.f32.mrf.mxu0
      %v1468 = vadd.f32 0.0, %v1467
      %v1469 = vpop.f32.mrf.mxu0
      %1470 = vmatprep.mubr.f32.mxu0 0.0
      %1471 = vmatmul.mubr.f32.gmra.mxu0 %v1251
      %v1472 = vpop.f32.mrf.mxu0
      %v1473 = vadd.f32 0.0, %v1472
      %v1474 = vpop.f32.mrf.mxu0
      %1475 = vmatprep.mubr.f32.mxu0 0.0
      %1476 = vmatmul.mubr.f32.gmra.mxu0 %v1254
      %v1477 = vpop.f32.mrf.mxu0
      %v1478 = vadd.f32 0.0, %v1477
      %v1479 = vpop.f32.mrf.mxu0
      %1480 = vmatprep.mubr.f32.mxu0 0.0
      %1481 = vmatmul.mubr.f32.gmra.mxu0 %v1257
      %v1482 = vpop.f32.mrf.mxu0
      %v1483 = vadd.f32 0.0, %v1482
      %v1484 = vpop.f32.mrf.mxu0
      %1485 = vmatprep.mubr.f32.mxu0 0.0
      %1486 = vmatmul.mubr.f32.gmra.mxu0 %v1260
      %v1487 = vpop.f32.mrf.mxu0
      %v1488 = vadd.f32 0.0, %v1487
      %v1489 = vpop.f32.mrf.mxu0
      %1490 = vdwg.mxu0
      %v1492 = vsel %vm1165, %v714, 0
      %v1495 = vsel %vm1165, %v715, 0
      %v1498 = vsel %vm1165, %v716, 0
      %v1501 = vsel %vm1165, %v717, 0
      %v1504 = vsel %vm1165, %v718, 0
      %v1507 = vsel %vm1165, %v719, 0
      %v1510 = vsel %vm1165, %v720, 0
      %v1513 = vsel %vm1165, %v721, 0
      %v1516 = vsel %vm1165, %v722, 0
      %v1519 = vsel %vm1165, %v723, 0
      %v1522 = vsel %vm1165, %v724, 0
      %v1525 = vsel %vm1165, %v725, 0
      %v1528 = vsel %vm1165, %v726, 0
      %v1531 = vsel %vm1165, %v727, 0
      %v1534 = vsel %vm1165, %v728, 0
      %v1537 = vsel %vm1165, %v729, 0
      %v1540 = vsel %vm1165, %v730, 0
      %v1543 = vsel %vm1165, %v731, 0
      %v1546 = vsel %vm1165, %v732, 0
      %v1549 = vsel %vm1165, %v733, 0
      %v1552 = vsel %vm1165, %v734, 0
      %v1555 = vsel %vm1165, %v735, 0
      %v1558 = vsel %vm1165, %v736, 0
      %v1561 = vsel %vm1165, %v737, 0
      %v1564 = vsel %vm1165, %v738, 0
      %v1567 = vsel %vm1165, %v739, 0
      %v1570 = vsel %vm1165, %v740, 0
      %v1573 = vsel %vm1165, %v741, 0
      %v1576 = vsel %vm1165, %v742, 0
      %v1579 = vsel %vm1165, %v743, 0
      %v1582 = vsel %vm1165, %v744, 0
      %v1585 = vsel %vm1165, %v745, 0
      %v1588 = vsel %vm1262, %v746, 0
      %1590 = vmatprep.subr.mxu0 0.0
      %1591 = vmatpush1.msra.mxu0 0.0
      %1592 = vmatprep.subr.mxu0 0.0
      %1593 = vmatpush1.msra.mxu0 0.0
      %1594 = vmatprep.subr.mxu0 0.0
      %1595 = vmatpush1.msra.mxu0 0.0
      %1596 = vmatprep.subr.mxu0 0.0
      %1597 = vmatpush1.msra.mxu0 0.0
      %1598 = vmatprep.subr.mxu0 0.0
      %1599 = vmatpush1.msra.mxu0 0.0
      %1600 = vmatprep.subr.mxu0 0.0
      %1601 = vmatpush1.msra.mxu0 0.0
      %1602 = vmatprep.subr.mxu0 0.0
      %1603 = vmatpush1.msra.mxu0 0.0
      %1604 = vmatprep.subr.mxu0 0.0
      %1605 = vmatpush1.msra.mxu0 0.0
      %1606 = vmatprep.subr.mxu0 0.0
      %1607 = vmatpush1.msra.mxu0 0.0
      %1608 = vmatprep.subr.mxu0 0.0
      %1609 = vmatpush1.msra.mxu0 0.0
      %1610 = vmatprep.subr.mxu0 0.0
      %1611 = vmatpush1.msra.mxu0 0.0
      %1612 = vmatprep.subr.mxu0 0.0
      %1613 = vmatpush1.msra.mxu0 0.0
      %1614 = vmatprep.subr.mxu0 0.0
      %1615 = vmatpush1.msra.mxu0 0.0
      %1616 = vmatprep.subr.mxu0 0.0
      %1617 = vmatpush1.msra.mxu0 0.0
      %1618 = vmatprep.subr.mxu0 0.0
      %1619 = vmatpush1.msra.mxu0 0.0
      %1620 = vmatprep.subr.mxu0 0.0
      %1621 = vmatpush1.msra.mxu0 %v1588
      %1622 = vmatprep.subr.mxu0 0.0
      %1623 = vmatpush2.msra.mxu0 0.0
      %1624 = vmatprep.subr.mxu0 0.0
      %1625 = vmatpush2.msra.mxu0 0.0
      %1626 = vmatprep.subr.mxu0 0.0
      %1627 = vmatpush2.msra.mxu0 0.0
      %1628 = vmatprep.subr.mxu0 0.0
      %1629 = vmatpush2.msra.mxu0 0.0
      %1630 = vmatprep.subr.mxu0 0.0
      %1631 = vmatpush2.msra.mxu0 0.0
      %1632 = vmatprep.subr.mxu0 0.0
      %1633 = vmatpush2.msra.mxu0 0.0
      %1634 = vmatprep.subr.mxu0 0.0
      %1635 = vmatpush2.msra.mxu0 0.0
      %1636 = vmatprep.subr.mxu0 0.0
      %1637 = vmatpush2.msra.mxu0 0.0
      %1638 = vmatprep.subr.mxu0 0.0
      %1639 = vmatpush2.msra.mxu0 0.0
      %1640 = vmatprep.subr.mxu0 0.0
      %1641 = vmatpush2.msra.mxu0 0.0
      %1642 = vmatprep.subr.mxu0 0.0
      %1643 = vmatpush2.msra.mxu0 0.0
      %1644 = vmatprep.subr.mxu0 0.0
      %1645 = vmatpush2.msra.mxu0 0.0
      %1646 = vmatprep.subr.mxu0 0.0
      %1647 = vmatpush2.msra.mxu0 0.0
      %1648 = vmatprep.subr.mxu0 0.0
      %1649 = vmatpush2.msra.mxu0 0.0
      %1650 = vmatprep.subr.mxu0 0.0
      %1651 = vmatpush2.msra.mxu0 0.0
      %1652 = vmatprep.subr.mxu0 0.0
      %1653 = vmatpush2.msra.mxu0 0.0
      %1654 = vmatprep.mubr.f32.mxu0 0.0
      %1655 = vmatmul.mubr.f32.gmra.mxu0 %v1492
      %v1656 = vpop.f32.mrf.mxu0
      %v1657 = vadd.f32 %v1333, %v1656
      %v1658 = vpop.f32.mrf.mxu0
      %1659 = vmatprep.mubr.f32.mxu0 0.0
      %1660 = vmatmul.mubr.f32.gmra.mxu0 %v1495
      %v1661 = vpop.f32.mrf.mxu0
      %v1662 = vadd.f32 %v1338, %v1661
      %v1663 = vpop.f32.mrf.mxu0
      %1664 = vmatprep.mubr.f32.mxu0 0.0
      %1665 = vmatmul.mubr.f32.gmra.mxu0 %v1498
      %v1666 = vpop.f32.mrf.mxu0
      %v1667 = vadd.f32 %v1343, %v1666
      %v1668 = vpop.f32.mrf.mxu0
      %1669 = vmatprep.mubr.f32.mxu0 0.0
      %1670 = vmatmul.mubr.f32.gmra.mxu0 %v1501
      %v1671 = vpop.f32.mrf.mxu0
      %v1672 = vadd.f32 %v1348, %v1671
      %v1673 = vpop.f32.mrf.mxu0
      %1674 = vmatprep.mubr.f32.mxu0 0.0
      %1675 = vmatmul.mubr.f32.gmra.mxu0 %v1504
      %v1676 = vpop.f32.mrf.mxu0
      %v1677 = vadd.f32 %v1353, %v1676
      %v1678 = vpop.f32.mrf.mxu0
      %1679 = vmatprep.mubr.f32.mxu0 0.0
      %1680 = vmatmul.mubr.f32.gmra.mxu0 %v1507
      %v1681 = vpop.f32.mrf.mxu0
      %v1682 = vadd.f32 %v1358, %v1681
      %v1683 = vpop.f32.mrf.mxu0
      %1684 = vmatprep.mubr.f32.mxu0 0.0
      %1685 = vmatmul.mubr.f32.gmra.mxu0 %v1510
      %v1686 = vpop.f32.mrf.mxu0
      %v1687 = vadd.f32 %v1363, %v1686
      %v1688 = vpop.f32.mrf.mxu0
      %1689 = vmatprep.mubr.f32.mxu0 0.0
      %1690 = vmatmul.mubr.f32.gmra.mxu0 %v1513
      %v1691 = vpop.f32.mrf.mxu0
      %v1692 = vadd.f32 %v1368, %v1691
      %v1693 = vpop.f32.mrf.mxu0
      %1694 = vmatprep.mubr.f32.mxu0 0.0
      %1695 = vmatmul.mubr.f32.gmra.mxu0 %v1516
      %v1696 = vpop.f32.mrf.mxu0
      %v1697 = vadd.f32 %v1373, %v1696
      %v1698 = vpop.f32.mrf.mxu0
      %1699 = vmatprep.mubr.f32.mxu0 0.0
      %1700 = vmatmul.mubr.f32.gmra.mxu0 %v1519
      %v1701 = vpop.f32.mrf.mxu0
      %v1702 = vadd.f32 %v1378, %v1701
      %v1703 = vpop.f32.mrf.mxu0
      %1704 = vmatprep.mubr.f32.mxu0 0.0
      %1705 = vmatmul.mubr.f32.gmra.mxu0 %v1522
      %v1706 = vpop.f32.mrf.mxu0
      %v1707 = vadd.f32 %v1383, %v1706
      %v1708 = vpop.f32.mrf.mxu0
      %1709 = vmatprep.mubr.f32.mxu0 0.0
      %1710 = vmatmul.mubr.f32.gmra.mxu0 %v1525
      %v1711 = vpop.f32.mrf.mxu0
      %v1712 = vadd.f32 %v1388, %v1711
      %v1713 = vpop.f32.mrf.mxu0
      %1714 = vmatprep.mubr.f32.mxu0 0.0
      %1715 = vmatmul.mubr.f32.gmra.mxu0 %v1528
      %v1716 = vpop.f32.mrf.mxu0
      %v1717 = vadd.f32 %v1393, %v1716
      %v1718 = vpop.f32.mrf.mxu0
      %1719 = vmatprep.mubr.f32.mxu0 0.0
      %1720 = vmatmul.mubr.f32.gmra.mxu0 %v1531
      %v1721 = vpop.f32.mrf.mxu0
      %v1722 = vadd.f32 %v1398, %v1721
      %v1723 = vpop.f32.mrf.mxu0
      %1724 = vmatprep.mubr.f32.mxu0 0.0
      %1725 = vmatmul.mubr.f32.gmra.mxu0 %v1534
      %v1726 = vpop.f32.mrf.mxu0
      %v1727 = vadd.f32 %v1403, %v1726
      %v1728 = vpop.f32.mrf.mxu0
      %1729 = vmatprep.mubr.f32.mxu0 0.0
      %1730 = vmatmul.mubr.f32.gmra.mxu0 %v1537
      %v1731 = vpop.f32.mrf.mxu0
      %v1732 = vadd.f32 %v1408, %v1731
      %v1733 = vpop.f32.mrf.mxu0
      %1734 = vmatprep.mubr.f32.mxu0 0.0
      %1735 = vmatmul.mubr.f32.gmra.mxu0 %v1540
      %v1736 = vpop.f32.mrf.mxu0
      %v1737 = vadd.f32 %v1413, %v1736
      %v1738 = vpop.f32.mrf.mxu0
      %1739 = vmatprep.mubr.f32.mxu0 0.0
      %1740 = vmatmul.mubr.f32.gmra.mxu0 %v1543
      %v1741 = vpop.f32.mrf.mxu0
      %v1742 = vadd.f32 %v1418, %v1741
      %v1743 = vpop.f32.mrf.mxu0
      %1744 = vmatprep.mubr.f32.mxu0 0.0
      %1745 = vmatmul.mubr.f32.gmra.mxu0 %v1546
      %v1746 = vpop.f32.mrf.mxu0
      %v1747 = vadd.f32 %v1423, %v1746
      %v1748 = vpop.f32.mrf.mxu0
      %1749 = vmatprep.mubr.f32.mxu0 0.0
      %1750 = vmatmul.mubr.f32.gmra.mxu0 %v1549
      %v1751 = vpop.f32.mrf.mxu0
      %v1752 = vadd.f32 %v1428, %v1751
      %v1753 = vpop.f32.mrf.mxu0
      %1754 = vmatprep.mubr.f32.mxu0 0.0
      %1755 = vmatmul.mubr.f32.gmra.mxu0 %v1552
      %v1756 = vpop.f32.mrf.mxu0
      %v1757 = vadd.f32 %v1433, %v1756
      %v1758 = vpop.f32.mrf.mxu0
      %1759 = vmatprep.mubr.f32.mxu0 0.0
      %1760 = vmatmul.mubr.f32.gmra.mxu0 %v1555
      %v1761 = vpop.f32.mrf.mxu0
      %v1762 = vadd.f32 %v1438, %v1761
      %v1763 = vpop.f32.mrf.mxu0
      %1764 = vmatprep.mubr.f32.mxu0 0.0
      %1765 = vmatmul.mubr.f32.gmra.mxu0 %v1558
      %v1766 = vpop.f32.mrf.mxu0
      %v1767 = vadd.f32 %v1443, %v1766
      %v1768 = vpop.f32.mrf.mxu0
      %1769 = vmatprep.mubr.f32.mxu0 0.0
      %1770 = vmatmul.mubr.f32.gmra.mxu0 %v1561
      %v1771 = vpop.f32.mrf.mxu0
      %v1772 = vadd.f32 %v1448, %v1771
      %v1773 = vpop.f32.mrf.mxu0
      %1774 = vmatprep.mubr.f32.mxu0 0.0
      %1775 = vmatmul.mubr.f32.gmra.mxu0 %v1564
      %v1776 = vpop.f32.mrf.mxu0
      %v1777 = vadd.f32 %v1453, %v1776
      %v1778 = vpop.f32.mrf.mxu0
      %1779 = vmatprep.mubr.f32.mxu0 0.0
      %1780 = vmatmul.mubr.f32.gmra.mxu0 %v1567
      %v1781 = vpop.f32.mrf.mxu0
      %v1782 = vadd.f32 %v1458, %v1781
      %v1783 = vpop.f32.mrf.mxu0
      %1784 = vmatprep.mubr.f32.mxu0 0.0
      %1785 = vmatmul.mubr.f32.gmra.mxu0 %v1570
      %v1786 = vpop.f32.mrf.mxu0
      %v1787 = vadd.f32 %v1463, %v1786
      %v1788 = vpop.f32.mrf.mxu0
      %1789 = vmatprep.mubr.f32.mxu0 0.0
      %1790 = vmatmul.mubr.f32.gmra.mxu0 %v1573
      %v1791 = vpop.f32.mrf.mxu0
      %v1792 = vadd.f32 %v1468, %v1791
      %v1793 = vpop.f32.mrf.mxu0
      %1794 = vmatprep.mubr.f32.mxu0 0.0
      %1795 = vmatmul.mubr.f32.gmra.mxu0 %v1576
      %v1796 = vpop.f32.mrf.mxu0
      %v1797 = vadd.f32 %v1473, %v1796
      %v1798 = vpop.f32.mrf.mxu0
      %1799 = vmatprep.mubr.f32.mxu0 0.0
      %1800 = vmatmul.mubr.f32.gmra.mxu0 %v1579
      %v1801 = vpop.f32.mrf.mxu0
      %v1802 = vadd.f32 %v1478, %v1801
      %v1803 = vpop.f32.mrf.mxu0
      %1804 = vmatprep.mubr.f32.mxu0 0.0
      %1805 = vmatmul.mubr.f32.gmra.mxu0 %v1582
      %v1806 = vpop.f32.mrf.mxu0
      %v1807 = vadd.f32 %v1483, %v1806
      %v1808 = vpop.f32.mrf.mxu0
      %1809 = vmatprep.mubr.f32.mxu0 0.0
      %1810 = vmatmul.mubr.f32.gmra.mxu0 %v1585
      %v1811 = vpop.f32.mrf.mxu0
      %v1812 = vadd.f32 %v1488, %v1811
      %v1813 = vpop.f32.mrf.mxu0
      %1814 = vdwg.mxu0
      %s1815 = scalar_lea.vmem [#allocation2], 48
      %v1816 = vld [vmem:[%s1815] sm:$0xff]
      %v1817 = vld [vmem:[%s1815 + $0x8] sm:$0xff]
      %v1818 = vld [vmem:[%s1815 + $0x18] sm:$0xff]
      %v1819 = vld [vmem:[%s1815 + $0x20] sm:$0xff]
      %v1820 = vld [vmem:[%s1815 + $0x30] sm:$0xff]
      %v1821 = vld [vmem:[%s1815 + $0x38] sm:$0xff]
      %v1822 = vld [vmem:[%s1815 + $0x48] sm:$0xff]
      %v1823 = vld [vmem:[%s1815 + $0x50] sm:$0xff]
      %v1824 = vld [vmem:[%s1815 + $0x60] sm:$0xff]
      %v1825 = vld [vmem:[%s1815 + $0x68] sm:$0xff]
      %v1826 = vld [vmem:[%s1815 + $0x78] sm:$0xff]
      %v1827 = vld [vmem:[%s1815 + $0x80] sm:$0xff]
      %v1828 = vld [vmem:[%s1815 + $0x90] sm:$0xff]
      %v1829 = vld [vmem:[%s1815 + $0x98] sm:$0xff]
      %v1830 = vld [vmem:[%s1815 + $0xa8] sm:$0xff]
      %v1831 = vld [vmem:[%s1815 + $0xb0] sm:$0xff]
      %v1832 = vld [vmem:[%s1815 + $0xc0] sm:$0xff]
      %v1833 = vld [vmem:[%s1815 + $0xc8] sm:$0xff]
      %v1834 = vld [vmem:[%s1815 + $0xd8] sm:$0xff]
      %v1835 = vld [vmem:[%s1815 + $0xe0] sm:$0xff]
      %v1836 = vld [vmem:[%s1815 + $0xf0] sm:$0xff]
      %v1837 = vld [vmem:[%s1815 + $0xf8] sm:$0xff]
      %v1838 = vld [vmem:[%s1815 + $0x108] sm:$0xff]
      %v1839 = vld [vmem:[%s1815 + $0x110] sm:$0xff]
      %v1840 = vld [vmem:[%s1815 + $0x120] sm:$0xff]
      %v1841 = vld [vmem:[%s1815 + $0x128] sm:$0xff]
      %v1842 = vld [vmem:[%s1815 + $0x138] sm:$0xff]
      %v1843 = vld [vmem:[%s1815 + $0x140] sm:$0xff]
      %v1844 = vld [vmem:[%s1815 + $0x150] sm:$0xff]
      %v1845 = vld [vmem:[%s1815 + $0x158] sm:$0xff]
      %v1846 = vld [vmem:[%s1815 + $0x168] sm:$0xff]
      %v1847 = vld [vmem:[%s1815 + $0x170] sm:$0xff]
      %v1848 = vld [vmem:[%s1815 + $0x1] sm:$0xff]
      %v1849 = vld [vmem:[%s1815 + $0x9] sm:$0xff]
      %v1850 = vld [vmem:[%s1815 + $0x19] sm:$0xff]
      %v1851 = vld [vmem:[%s1815 + $0x21] sm:$0xff]
      %v1852 = vld [vmem:[%s1815 + $0x31] sm:$0xff]
      %v1853 = vld [vmem:[%s1815 + $0x39] sm:$0xff]
      %v1854 = vld [vmem:[%s1815 + $0x49] sm:$0xff]
      %v1855 = vld [vmem:[%s1815 + $0x51] sm:$0xff]
      %v1856 = vld [vmem:[%s1815 + $0x61] sm:$0xff]
      %v1857 = vld [vmem:[%s1815 + $0x69] sm:$0xff]
      %v1858 = vld [vmem:[%s1815 + $0x79] sm:$0xff]
      %v1859 = vld [vmem:[%s1815 + $0x81] sm:$0xff]
      %v1860 = vld [vmem:[%s1815 + $0x91] sm:$0xff]
      %v1861 = vld [vmem:[%s1815 + $0x99] sm:$0xff]
      %v1862 = vld [vmem:[%s1815 + $0xa9] sm:$0xff]
      %v1863 = vld [vmem:[%s1815 + $0xb1] sm:$0xff]
      %v1864 = vld [vmem:[%s1815 + $0xc1] sm:$0xff]
      %v1865 = vld [vmem:[%s1815 + $0xc9] sm:$0xff]
      %v1866 = vld [vmem:[%s1815 + $0xd9] sm:$0xff]
      %v1867 = vld [vmem:[%s1815 + $0xe1] sm:$0xff]
      %v1868 = vld [vmem:[%s1815 + $0xf1] sm:$0xff]
      %v1869 = vld [vmem:[%s1815 + $0xf9] sm:$0xff]
      %v1870 = vld [vmem:[%s1815 + $0x109] sm:$0xff]
      %v1871 = vld [vmem:[%s1815 + $0x111] sm:$0xff]
      %v1872 = vld [vmem:[%s1815 + $0x121] sm:$0xff]
      %v1873 = vld [vmem:[%s1815 + $0x129] sm:$0xff]
      %v1874 = vld [vmem:[%s1815 + $0x139] sm:$0xff]
      %v1875 = vld [vmem:[%s1815 + $0x141] sm:$0xff]
      %v1876 = vld [vmem:[%s1815 + $0x151] sm:$0xff]
      %v1877 = vld [vmem:[%s1815 + $0x159] sm:$0xff]
      %v1878 = vld [vmem:[%s1815 + $0x169] sm:$0xff]
      %v1879 = vld [vmem:[%s1815 + $0x171] sm:$0xff]
      %v1880 = vld [vmem:[%s1815 + $0x2] sm:$0xff]
      %v1881 = vld [vmem:[%s1815 + $0xa] sm:$0xff]
      %v1882 = vld [vmem:[%s1815 + $0x1a] sm:$0xff]
      %v1883 = vld [vmem:[%s1815 + $0x22] sm:$0xff]
      %v1884 = vld [vmem:[%s1815 + $0x32] sm:$0xff]
      %v1885 = vld [vmem:[%s1815 + $0x3a] sm:$0xff]
      %v1886 = vld [vmem:[%s1815 + $0x4a] sm:$0xff]
      %v1887 = vld [vmem:[%s1815 + $0x52] sm:$0xff]
      %v1888 = vld [vmem:[%s1815 + $0x62] sm:$0xff]
      %v1889 = vld [vmem:[%s1815 + $0x6a] sm:$0xff]
      %v1890 = vld [vmem:[%s1815 + $0x7a] sm:$0xff]
      %v1891 = vld [vmem:[%s1815 + $0x82] sm:$0xff]
      %v1892 = vld [vmem:[%s1815 + $0x92] sm:$0xff]
      %v1893 = vld [vmem:[%s1815 + $0x9a] sm:$0xff]
      %v1894 = vld [vmem:[%s1815 + $0xaa] sm:$0xff]
      %v1895 = vld [vmem:[%s1815 + $0xb2] sm:$0xff]
      %v1896 = vld [vmem:[%s1815 + $0xc2] sm:$0xff]
      %v1897 = vld [vmem:[%s1815 + $0xca] sm:$0xff]
      %v1898 = vld [vmem:[%s1815 + $0xda] sm:$0xff]
      %v1899 = vld [vmem:[%s1815 + $0xe2] sm:$0xff]
      %v1900 = vld [vmem:[%s1815 + $0xf2] sm:$0xff]
      %v1901 = vld [vmem:[%s1815 + $0xfa] sm:$0xff]
      %v1902 = vld [vmem:[%s1815 + $0x10a] sm:$0xff]
      %v1903 = vld [vmem:[%s1815 + $0x112] sm:$0xff]
      %v1904 = vld [vmem:[%s1815 + $0x122] sm:$0xff]
      %v1905 = vld [vmem:[%s1815 + $0x12a] sm:$0xff]
      %v1906 = vld [vmem:[%s1815 + $0x13a] sm:$0xff]
      %v1907 = vld [vmem:[%s1815 + $0x142] sm:$0xff]
      %v1908 = vld [vmem:[%s1815 + $0x152] sm:$0xff]
      %v1909 = vld [vmem:[%s1815 + $0x15a] sm:$0xff]
      %v1910 = vld [vmem:[%s1815 + $0x16a] sm:$0xff]
      %v1911 = vld [vmem:[%s1815 + $0x172] sm:$0xff]
      %1944 = vrot.lane.b32.xlu0 %v1848, 2
      %v1945 = vpop.permute.xlu0 %1944
      %1946 = vrot.lane.b32.xlu0 %v1849, 2
      %v1947 = vpop.permute.xlu0 %1946
      %1948 = vrot.lane.b32.xlu0 %v1850, 2
      %v1949 = vpop.permute.xlu0 %1948
      %1950 = vrot.lane.b32.xlu0 %v1851, 2
      %v1951 = vpop.permute.xlu0 %1950
      %1952 = vrot.lane.b32.xlu0 %v1852, 2
      %v1953 = vpop.permute.xlu0 %1952
      %1954 = vrot.lane.b32.xlu0 %v1853, 2
      %v1955 = vpop.permute.xlu0 %1954
      %1956 = vrot.lane.b32.xlu0 %v1854, 2
      %v1957 = vpop.permute.xlu0 %1956
      %1958 = vrot.lane.b32.xlu0 %v1855, 2
      %v1959 = vpop.permute.xlu0 %1958
      %1960 = vrot.lane.b32.xlu0 %v1856, 2
      %v1961 = vpop.permute.xlu0 %1960
      %1962 = vrot.lane.b32.xlu0 %v1857, 2
      %v1963 = vpop.permute.xlu0 %1962
      %1964 = vrot.lane.b32.xlu0 %v1858, 2
      %v1965 = vpop.permute.xlu0 %1964
      %1966 = vrot.lane.b32.xlu0 %v1859, 2
      %v1967 = vpop.permute.xlu0 %1966
      %1968 = vrot.lane.b32.xlu0 %v1860, 2
      %v1969 = vpop.permute.xlu0 %1968
      %1970 = vrot.lane.b32.xlu0 %v1861, 2
      %v1971 = vpop.permute.xlu0 %1970
      %1972 = vrot.lane.b32.xlu0 %v1862, 2
      %v1973 = vpop.permute.xlu0 %1972
      %1974 = vrot.lane.b32.xlu0 %v1863, 2
      %v1975 = vpop.permute.xlu0 %1974
      %1976 = vrot.lane.b32.xlu0 %v1864, 2
      %v1977 = vpop.permute.xlu0 %1976
      %1978 = vrot.lane.b32.xlu0 %v1865, 2
      %v1979 = vpop.permute.xlu0 %1978
      %1980 = vrot.lane.b32.xlu0 %v1866, 2
      %v1981 = vpop.permute.xlu0 %1980
      %1982 = vrot.lane.b32.xlu0 %v1867, 2
      %v1983 = vpop.permute.xlu0 %1982
      %1984 = vrot.lane.b32.xlu0 %v1868, 2
      %v1985 = vpop.permute.xlu0 %1984
      %1986 = vrot.lane.b32.xlu0 %v1869, 2
      %v1987 = vpop.permute.xlu0 %1986
      %1988 = vrot.lane.b32.xlu0 %v1870, 2
      %v1989 = vpop.permute.xlu0 %1988
      %1990 = vrot.lane.b32.xlu0 %v1871, 2
      %v1991 = vpop.permute.xlu0 %1990
      %1992 = vrot.lane.b32.xlu0 %v1872, 2
      %v1993 = vpop.permute.xlu0 %1992
      %1994 = vrot.lane.b32.xlu0 %v1873, 2
      %v1995 = vpop.permute.xlu0 %1994
      %1996 = vrot.lane.b32.xlu0 %v1874, 2
      %v1997 = vpop.permute.xlu0 %1996
      %1998 = vrot.lane.b32.xlu0 %v1875, 2
      %v1999 = vpop.permute.xlu0 %1998
      %2000 = vrot.lane.b32.xlu0 %v1876, 2
      %v2001 = vpop.permute.xlu0 %2000
      %2002 = vrot.lane.b32.xlu0 %v1877, 2
      %v2003 = vpop.permute.xlu0 %2002
      %2004 = vrot.lane.b32.xlu0 %v1878, 2
      %v2005 = vpop.permute.xlu0 %2004
      %2006 = vrot.lane.b32.xlu0 %v1879, 2
      %v2007 = vpop.permute.xlu0 %2006
      %2072 = vrot.lane.b32.xlu0 %v1880, 4
      %v2073 = vpop.permute.xlu0 %2072
      %2074 = vrot.lane.b32.xlu0 %v1881, 4
      %v2075 = vpop.permute.xlu0 %2074
      %2076 = vrot.lane.b32.xlu0 %v1882, 4
      %v2077 = vpop.permute.xlu0 %2076
      %2078 = vrot.lane.b32.xlu0 %v1883, 4
      %v2079 = vpop.permute.xlu0 %2078
      %2080 = vrot.lane.b32.xlu0 %v1884, 4
      %v2081 = vpop.permute.xlu0 %2080
      %2082 = vrot.lane.b32.xlu0 %v1885, 4
      %v2083 = vpop.permute.xlu0 %2082
      %2084 = vrot.lane.b32.xlu0 %v1886, 4
      %v2085 = vpop.permute.xlu0 %2084
      %2086 = vrot.lane.b32.xlu0 %v1887, 4
      %v2087 = vpop.permute.xlu0 %2086
      %2088 = vrot.lane.b32.xlu0 %v1888, 4
      %v2089 = vpop.permute.xlu0 %2088
      %2090 = vrot.lane.b32.xlu0 %v1889, 4
      %v2091 = vpop.permute.xlu0 %2090
      %2092 = vrot.lane.b32.xlu0 %v1890, 4
      %v2093 = vpop.permute.xlu0 %2092
      %2094 = vrot.lane.b32.xlu0 %v1891, 4
      %v2095 = vpop.permute.xlu0 %2094
      %2096 = vrot.lane.b32.xlu0 %v1892, 4
      %v2097 = vpop.permute.xlu0 %2096
      %2098 = vrot.lane.b32.xlu0 %v1893, 4
      %v2099 = vpop.permute.xlu0 %2098
      %2100 = vrot.lane.b32.xlu0 %v1894, 4
      %v2101 = vpop.permute.xlu0 %2100
      %2102 = vrot.lane.b32.xlu0 %v1895, 4
      %v2103 = vpop.permute.xlu0 %2102
      %2104 = vrot.lane.b32.xlu0 %v1896, 4
      %v2105 = vpop.permute.xlu0 %2104
      %2106 = vrot.lane.b32.xlu0 %v1897, 4
      %v2107 = vpop.permute.xlu0 %2106
      %2108 = vrot.lane.b32.xlu0 %v1898, 4
      %v2109 = vpop.permute.xlu0 %2108
      %2110 = vrot.lane.b32.xlu0 %v1899, 4
      %v2111 = vpop.permute.xlu0 %2110
      %2112 = vrot.lane.b32.xlu0 %v1900, 4
      %v2113 = vpop.permute.xlu0 %2112
      %2114 = vrot.lane.b32.xlu0 %v1901, 4
      %v2115 = vpop.permute.xlu0 %2114
      %2116 = vrot.lane.b32.xlu0 %v1902, 4
      %v2117 = vpop.permute.xlu0 %2116
      %2118 = vrot.lane.b32.xlu0 %v1903, 4
      %v2119 = vpop.permute.xlu0 %2118
      %2120 = vrot.lane.b32.xlu0 %v1904, 4
      %v2121 = vpop.permute.xlu0 %2120
      %2122 = vrot.lane.b32.xlu0 %v1905, 4
      %v2123 = vpop.permute.xlu0 %2122
      %2124 = vrot.lane.b32.xlu0 %v1906, 4
      %v2125 = vpop.permute.xlu0 %2124
      %2126 = vrot.lane.b32.xlu0 %v1907, 4
      %v2127 = vpop.permute.xlu0 %2126
      %2128 = vrot.lane.b32.xlu0 %v1908, 4
      %v2129 = vpop.permute.xlu0 %2128
      %2130 = vrot.lane.b32.xlu0 %v1909, 4
      %v2131 = vpop.permute.xlu0 %2130
      %2132 = vrot.lane.b32.xlu0 %v1910, 4
      %v2133 = vpop.permute.xlu0 %2132
      %2134 = vrot.lane.b32.xlu0 %v1911, 4
      %v2135 = vpop.permute.xlu0 %2134
      %v2168 = vsel %vm218, %v1816, %v1945
      %v2169 = vsel %vm218, %v1817, %v1947
      %v2170 = vsel %vm218, %v1818, %v1949
      %v2171 = vsel %vm218, %v1819, %v1951
      %v2172 = vsel %vm218, %v1820, %v1953
      %v2173 = vsel %vm218, %v1821, %v1955
      %v2174 = vsel %vm218, %v1822, %v1957
      %v2175 = vsel %vm218, %v1823, %v1959
      %v2176 = vsel %vm218, %v1824, %v1961
      %v2177 = vsel %vm218, %v1825, %v1963
      %v2178 = vsel %vm218, %v1826, %v1965
      %v2179 = vsel %vm218, %v1827, %v1967
      %v2180 = vsel %vm218, %v1828, %v1969
      %v2181 = vsel %vm218, %v1829, %v1971
      %v2182 = vsel %vm218, %v1830, %v1973
      %v2183 = vsel %vm218, %v1831, %v1975
      %v2184 = vsel %vm218, %v1832, %v1977
      %v2185 = vsel %vm218, %v1833, %v1979
      %v2186 = vsel %vm218, %v1834, %v1981
      %v2187 = vsel %vm218, %v1835, %v1983
      %v2188 = vsel %vm218, %v1836, %v1985
      %v2189 = vsel %vm218, %v1837, %v1987
      %v2190 = vsel %vm218, %v1838, %v1989
      %v2191 = vsel %vm218, %v1839, %v1991
      %v2192 = vsel %vm218, %v1840, %v1993
      %v2193 = vsel %vm218, %v1841, %v1995
      %v2194 = vsel %vm218, %v1842, %v1997
      %v2195 = vsel %vm218, %v1843, %v1999
      %v2196 = vsel %vm218, %v1844, %v2001
      %v2197 = vsel %vm218, %v1845, %v2003
      %v2198 = vsel %vm218, %v1846, %v2005
      %v2199 = vsel %vm218, %v1847, %v2007
      %v2200 = vsel %vm713, %v2168, %v2073
      %v2201 = vsel %vm713, %v2169, %v2075
      %v2202 = vsel %vm713, %v2170, %v2077
      %v2203 = vsel %vm713, %v2171, %v2079
      %v2204 = vsel %vm713, %v2172, %v2081
      %v2205 = vsel %vm713, %v2173, %v2083
      %v2206 = vsel %vm713, %v2174, %v2085
      %v2207 = vsel %vm713, %v2175, %v2087
      %v2208 = vsel %vm713, %v2176, %v2089
      %v2209 = vsel %vm713, %v2177, %v2091
      %v2210 = vsel %vm713, %v2178, %v2093
      %v2211 = vsel %vm713, %v2179, %v2095
      %v2212 = vsel %vm713, %v2180, %v2097
      %v2213 = vsel %vm713, %v2181, %v2099
      %v2214 = vsel %vm713, %v2182, %v2101
      %v2215 = vsel %vm713, %v2183, %v2103
      %v2216 = vsel %vm713, %v2184, %v2105
      %v2217 = vsel %vm713, %v2185, %v2107
      %v2218 = vsel %vm713, %v2186, %v2109
      %v2219 = vsel %vm713, %v2187, %v2111
      %v2220 = vsel %vm713, %v2188, %v2113
      %v2221 = vsel %vm713, %v2189, %v2115
      %v2222 = vsel %vm713, %v2190, %v2117
      %v2223 = vsel %vm713, %v2191, %v2119
      %v2224 = vsel %vm713, %v2192, %v2121
      %v2225 = vsel %vm713, %v2193, %v2123
      %v2226 = vsel %vm713, %v2194, %v2125
      %v2227 = vsel %vm713, %v2195, %v2127
      %v2228 = vsel %vm713, %v2196, %v2129
      %v2229 = vsel %vm713, %v2197, %v2131
      %v2230 = vsel %vm713, %v2198, %v2133
      %v2231 = vsel %vm713, %v2199, %v2135
      %s2232 = scalar_lea.vmem %s1, 16
      %v2233 = vld [vmem:[%s2232] sm:$0x3f]
      %v2235 = vsel %vm1165, %v2200, 0
      %v2238 = vsel %vm1165, %v2201, 0
      %v2241 = vsel %vm1165, %v2202, 0
      %v2244 = vsel %vm1165, %v2203, 0
      %v2247 = vsel %vm1165, %v2204, 0
      %v2250 = vsel %vm1165, %v2205, 0
      %v2253 = vsel %vm1165, %v2206, 0
      %v2256 = vsel %vm1165, %v2207, 0
      %v2259 = vsel %vm1165, %v2208, 0
      %v2262 = vsel %vm1165, %v2209, 0
      %v2265 = vsel %vm1165, %v2210, 0
      %v2268 = vsel %vm1165, %v2211, 0
      %v2271 = vsel %vm1165, %v2212, 0
      %v2274 = vsel %vm1165, %v2213, 0
      %v2277 = vsel %vm1165, %v2214, 0
      %v2280 = vsel %vm1165, %v2215, 0
      %v2283 = vsel %vm1165, %v2216, 0
      %v2286 = vsel %vm1165, %v2217, 0
      %v2289 = vsel %vm1165, %v2218, 0
      %v2292 = vsel %vm1165, %v2219, 0
      %v2295 = vsel %vm1165, %v2220, 0
      %v2298 = vsel %vm1165, %v2221, 0
      %v2301 = vsel %vm1165, %v2222, 0
      %v2304 = vsel %vm1165, %v2223, 0
      %v2307 = vsel %vm1165, %v2224, 0
      %v2310 = vsel %vm1165, %v2225, 0
      %v2313 = vsel %vm1165, %v2226, 0
      %v2316 = vsel %vm1165, %v2227, 0
      %v2319 = vsel %vm1165, %v2228, 0
      %v2322 = vsel %vm1165, %v2229, 0
      %v2325 = vsel %vm1165, %v2230, 0
      %v2328 = vsel %vm1165, %v2231, 0
      %v2331 = vsel %vm1262, %v2233, 0
      %2333 = vmatprep.subr.mxu0 0.0
      %2334 = vmatpush1.msra.mxu0 0.0
      %2335 = vmatprep.subr.mxu0 0.0
      %2336 = vmatpush1.msra.mxu0 0.0
      %2337 = vmatprep.subr.mxu0 0.0
      %2338 = vmatpush1.msra.mxu0 0.0
      %2339 = vmatprep.subr.mxu0 0.0
      %2340 = vmatpush1.msra.mxu0 0.0
      %2341 = vmatprep.subr.mxu0 0.0
      %2342 = vmatpush1.msra.mxu0 0.0
      %2343 = vmatprep.subr.mxu0 0.0
      %2344 = vmatpush1.msra.mxu0 0.0
      %2345 = vmatprep.subr.mxu0 0.0
      %2346 = vmatpush1.msra.mxu0 0.0
      %2347 = vmatprep.subr.mxu0 0.0
      %2348 = vmatpush1.msra.mxu0 0.0
      %2349 = vmatprep.subr.mxu0 0.0
      %2350 = vmatpush1.msra.mxu0 0.0
      %2351 = vmatprep.subr.mxu0 0.0
      %2352 = vmatpush1.msra.mxu0 0.0
      %2353 = vmatprep.subr.mxu0 0.0
      %2354 = vmatpush1.msra.mxu0 0.0
      %2355 = vmatprep.subr.mxu0 0.0
      %2356 = vmatpush1.msra.mxu0 0.0
      %2357 = vmatprep.subr.mxu0 0.0
      %2358 = vmatpush1.msra.mxu0 0.0
      %2359 = vmatprep.subr.mxu0 0.0
      %2360 = vmatpush1.msra.mxu0 0.0
      %2361 = vmatprep.subr.mxu0 0.0
      %2362 = vmatpush1.msra.mxu0 0.0
      %2363 = vmatprep.subr.mxu0 0.0
      %2364 = vmatpush1.msra.mxu0 %v2331
      %2365 = vmatprep.subr.mxu0 0.0
      %2366 = vmatpush2.msra.mxu0 0.0
      %2367 = vmatprep.subr.mxu0 0.0
      %2368 = vmatpush2.msra.mxu0 0.0
      %2369 = vmatprep.subr.mxu0 0.0
      %2370 = vmatpush2.msra.mxu0 0.0
      %2371 = vmatprep.subr.mxu0 0.0
      %2372 = vmatpush2.msra.mxu0 0.0
      %2373 = vmatprep.subr.mxu0 0.0
      %2374 = vmatpush2.msra.mxu0 0.0
      %2375 = vmatprep.subr.mxu0 0.0
      %2376 = vmatpush2.msra.mxu0 0.0
      %2377 = vmatprep.subr.mxu0 0.0
      %2378 = vmatpush2.msra.mxu0 0.0
      %2379 = vmatprep.subr.mxu0 0.0
      %2380 = vmatpush2.msra.mxu0 0.0
      %2381 = vmatprep.subr.mxu0 0.0
      %2382 = vmatpush2.msra.mxu0 0.0
      %2383 = vmatprep.subr.mxu0 0.0
      %2384 = vmatpush2.msra.mxu0 0.0
      %2385 = vmatprep.subr.mxu0 0.0
      %2386 = vmatpush2.msra.mxu0 0.0
      %2387 = vmatprep.subr.mxu0 0.0
      %2388 = vmatpush2.msra.mxu0 0.0
      %2389 = vmatprep.subr.mxu0 0.0
      %2390 = vmatpush2.msra.mxu0 0.0
      %2391 = vmatprep.subr.mxu0 0.0
      %2392 = vmatpush2.msra.mxu0 0.0
      %2393 = vmatprep.subr.mxu0 0.0
      %2394 = vmatpush2.msra.mxu0 0.0
      %2395 = vmatprep.subr.mxu0 0.0
      %2396 = vmatpush2.msra.mxu0 0.0
      %2397 = vmatprep.mubr.f32.mxu0 0.0
      %2398 = vmatmul.mubr.f32.gmra.mxu0 %v2235
      %v2399 = vpop.f32.mrf.mxu0
      %v2400 = vadd.f32 0.0, %v2399
      %v2401 = vpop.f32.mrf.mxu0
      %2402 = vmatprep.mubr.f32.mxu0 0.0
      %2403 = vmatmul.mubr.f32.gmra.mxu0 %v2238
      %v2404 = vpop.f32.mrf.mxu0
      %v2405 = vadd.f32 0.0, %v2404
      %v2406 = vpop.f32.mrf.mxu0
      %2407 = vmatprep.mubr.f32.mxu0 0.0
      %2408 = vmatmul.mubr.f32.gmra.mxu0 %v2241
      %v2409 = vpop.f32.mrf.mxu0
      %v2410 = vadd.f32 0.0, %v2409
      %v2411 = vpop.f32.mrf.mxu0
      %2412 = vmatprep.mubr.f32.mxu0 0.0
      %2413 = vmatmul.mubr.f32.gmra.mxu0 %v2244
      %v2414 = vpop.f32.mrf.mxu0
      %v2415 = vadd.f32 0.0, %v2414
      %v2416 = vpop.f32.mrf.mxu0
      %2417 = vmatprep.mubr.f32.mxu0 0.0
      %2418 = vmatmul.mubr.f32.gmra.mxu0 %v2247
      %v2419 = vpop.f32.mrf.mxu0
      %v2420 = vadd.f32 0.0, %v2419
      %v2421 = vpop.f32.mrf.mxu0
      %2422 = vmatprep.mubr.f32.mxu0 0.0
      %2423 = vmatmul.mubr.f32.gmra.mxu0 %v2250
      %v2424 = vpop.f32.mrf.mxu0
      %v2425 = vadd.f32 0.0, %v2424
      %v2426 = vpop.f32.mrf.mxu0
      %2427 = vmatprep.mubr.f32.mxu0 0.0
      %2428 = vmatmul.mubr.f32.gmra.mxu0 %v2253
      %v2429 = vpop.f32.mrf.mxu0
      %v2430 = vadd.f32 0.0, %v2429
      %v2431 = vpop.f32.mrf.mxu0
      %2432 = vmatprep.mubr.f32.mxu0 0.0
      %2433 = vmatmul.mubr.f32.gmra.mxu0 %v2256
      %v2434 = vpop.f32.mrf.mxu0
      %v2435 = vadd.f32 0.0, %v2434
      %v2436 = vpop.f32.mrf.mxu0
      %2437 = vmatprep.mubr.f32.mxu0 0.0
      %2438 = vmatmul.mubr.f32.gmra.mxu0 %v2259
      %v2439 = vpop.f32.mrf.mxu0
      %v2440 = vadd.f32 0.0, %v2439
      %v2441 = vpop.f32.mrf.mxu0
      %2442 = vmatprep.mubr.f32.mxu0 0.0
      %2443 = vmatmul.mubr.f32.gmra.mxu0 %v2262
      %v2444 = vpop.f32.mrf.mxu0
      %v2445 = vadd.f32 0.0, %v2444
      %v2446 = vpop.f32.mrf.mxu0
      %2447 = vmatprep.mubr.f32.mxu0 0.0
      %2448 = vmatmul.mubr.f32.gmra.mxu0 %v2265
      %v2449 = vpop.f32.mrf.mxu0
      %v2450 = vadd.f32 0.0, %v2449
      %v2451 = vpop.f32.mrf.mxu0
      %2452 = vmatprep.mubr.f32.mxu0 0.0
      %2453 = vmatmul.mubr.f32.gmra.mxu0 %v2268
      %v2454 = vpop.f32.mrf.mxu0
      %v2455 = vadd.f32 0.0, %v2454
      %v2456 = vpop.f32.mrf.mxu0
      %2457 = vmatprep.mubr.f32.mxu0 0.0
      %2458 = vmatmul.mubr.f32.gmra.mxu0 %v2271
      %v2459 = vpop.f32.mrf.mxu0
      %v2460 = vadd.f32 0.0, %v2459
      %v2461 = vpop.f32.mrf.mxu0
      %2462 = vmatprep.mubr.f32.mxu0 0.0
      %2463 = vmatmul.mubr.f32.gmra.mxu0 %v2274
      %v2464 = vpop.f32.mrf.mxu0
      %v2465 = vadd.f32 0.0, %v2464
      %v2466 = vpop.f32.mrf.mxu0
      %2467 = vmatprep.mubr.f32.mxu0 0.0
      %2468 = vmatmul.mubr.f32.gmra.mxu0 %v2277
      %v2469 = vpop.f32.mrf.mxu0
      %v2470 = vadd.f32 0.0, %v2469
      %v2471 = vpop.f32.mrf.mxu0
      %2472 = vmatprep.mubr.f32.mxu0 0.0
      %2473 = vmatmul.mubr.f32.gmra.mxu0 %v2280
      %v2474 = vpop.f32.mrf.mxu0
      %v2475 = vadd.f32 0.0, %v2474
      %v2476 = vpop.f32.mrf.mxu0
      %2477 = vmatprep.mubr.f32.mxu0 0.0
      %2478 = vmatmul.mubr.f32.gmra.mxu0 %v2283
      %v2479 = vpop.f32.mrf.mxu0
      %v2480 = vadd.f32 0.0, %v2479
      %v2481 = vpop.f32.mrf.mxu0
      %2482 = vmatprep.mubr.f32.mxu0 0.0
      %2483 = vmatmul.mubr.f32.gmra.mxu0 %v2286
      %v2484 = vpop.f32.mrf.mxu0
      %v2485 = vadd.f32 0.0, %v2484
      %v2486 = vpop.f32.mrf.mxu0
      %2487 = vmatprep.mubr.f32.mxu0 0.0
      %2488 = vmatmul.mubr.f32.gmra.mxu0 %v2289
      %v2489 = vpop.f32.mrf.mxu0
      %v2490 = vadd.f32 0.0, %v2489
      %v2491 = vpop.f32.mrf.mxu0
      %2492 = vmatprep.mubr.f32.mxu0 0.0
      %2493 = vmatmul.mubr.f32.gmra.mxu0 %v2292
      %v2494 = vpop.f32.mrf.mxu0
      %v2495 = vadd.f32 0.0, %v2494
      %v2496 = vpop.f32.mrf.mxu0
      %2497 = vmatprep.mubr.f32.mxu0 0.0
      %2498 = vmatmul.mubr.f32.gmra.mxu0 %v2295
      %v2499 = vpop.f32.mrf.mxu0
      %v2500 = vadd.f32 0.0, %v2499
      %v2501 = vpop.f32.mrf.mxu0
      %2502 = vmatprep.mubr.f32.mxu0 0.0
      %2503 = vmatmul.mubr.f32.gmra.mxu0 %v2298
      %v2504 = vpop.f32.mrf.mxu0
      %v2505 = vadd.f32 0.0, %v2504
      %v2506 = vpop.f32.mrf.mxu0
      %2507 = vmatprep.mubr.f32.mxu0 0.0
      %2508 = vmatmul.mubr.f32.gmra.mxu0 %v2301
      %v2509 = vpop.f32.mrf.mxu0
      %v2510 = vadd.f32 0.0, %v2509
      %v2511 = vpop.f32.mrf.mxu0
      %2512 = vmatprep.mubr.f32.mxu0 0.0
      %2513 = vmatmul.mubr.f32.gmra.mxu0 %v2304
      %v2514 = vpop.f32.mrf.mxu0
      %v2515 = vadd.f32 0.0, %v2514
      %v2516 = vpop.f32.mrf.mxu0
      %2517 = vmatprep.mubr.f32.mxu0 0.0
      %2518 = vmatmul.mubr.f32.gmra.mxu0 %v2307
      %v2519 = vpop.f32.mrf.mxu0
      %v2520 = vadd.f32 0.0, %v2519
      %v2521 = vpop.f32.mrf.mxu0
      %2522 = vmatprep.mubr.f32.mxu0 0.0
      %2523 = vmatmul.mubr.f32.gmra.mxu0 %v2310
      %v2524 = vpop.f32.mrf.mxu0
      %v2525 = vadd.f32 0.0, %v2524
      %v2526 = vpop.f32.mrf.mxu0
      %2527 = vmatprep.mubr.f32.mxu0 0.0
      %2528 = vmatmul.mubr.f32.gmra.mxu0 %v2313
      %v2529 = vpop.f32.mrf.mxu0
      %v2530 = vadd.f32 0.0, %v2529
      %v2531 = vpop.f32.mrf.mxu0
      %2532 = vmatprep.mubr.f32.mxu0 0.0
      %2533 = vmatmul.mubr.f32.gmra.mxu0 %v2316
      %v2534 = vpop.f32.mrf.mxu0
      %v2535 = vadd.f32 0.0, %v2534
      %v2536 = vpop.f32.mrf.mxu0
      %2537 = vmatprep.mubr.f32.mxu0 0.0
      %2538 = vmatmul.mubr.f32.gmra.mxu0 %v2319
      %v2539 = vpop.f32.mrf.mxu0
      %v2540 = vadd.f32 0.0, %v2539
      %v2541 = vpop.f32.mrf.mxu0
      %2542 = vmatprep.mubr.f32.mxu0 0.0
      %2543 = vmatmul.mubr.f32.gmra.mxu0 %v2322
      %v2544 = vpop.f32.mrf.mxu0
      %v2545 = vadd.f32 0.0, %v2544
      %v2546 = vpop.f32.mrf.mxu0
      %2547 = vmatprep.mubr.f32.mxu0 0.0
      %2548 = vmatmul.mubr.f32.gmra.mxu0 %v2325
      %v2549 = vpop.f32.mrf.mxu0
      %v2550 = vadd.f32 0.0, %v2549
      %v2551 = vpop.f32.mrf.mxu0
      %2552 = vmatprep.mubr.f32.mxu0 0.0
      %2553 = vmatmul.mubr.f32.gmra.mxu0 %v2328
      %v2554 = vpop.f32.mrf.mxu0
      %v2555 = vadd.f32 0.0, %v2554
      %v2556 = vpop.f32.mrf.mxu0
      %2557 = vdwg.mxu0
      %v2558 = vadd.f32 %v1657, %v2400
      %v2559 = vadd.f32 %v1662, %v2405
      %v2560 = vadd.f32 %v1667, %v2410
      %v2561 = vadd.f32 %v1672, %v2415
      %v2562 = vadd.f32 %v1677, %v2420
      %v2563 = vadd.f32 %v1682, %v2425
      %v2564 = vadd.f32 %v1687, %v2430
      %v2565 = vadd.f32 %v1692, %v2435
      %v2566 = vadd.f32 %v1697, %v2440
      %v2567 = vadd.f32 %v1702, %v2445
      %v2568 = vadd.f32 %v1707, %v2450
      %v2569 = vadd.f32 %v1712, %v2455
      %v2570 = vadd.f32 %v1717, %v2460
      %v2571 = vadd.f32 %v1722, %v2465
      %v2572 = vadd.f32 %v1727, %v2470
      %v2573 = vadd.f32 %v1732, %v2475
      %v2574 = vadd.f32 %v1737, %v2480
      %v2575 = vadd.f32 %v1742, %v2485
      %v2576 = vadd.f32 %v1747, %v2490
      %v2577 = vadd.f32 %v1752, %v2495
      %v2578 = vadd.f32 %v1757, %v2500
      %v2579 = vadd.f32 %v1762, %v2505
      %v2580 = vadd.f32 %v1767, %v2510
      %v2581 = vadd.f32 %v1772, %v2515
      %v2582 = vadd.f32 %v1777, %v2520
      %v2583 = vadd.f32 %v1782, %v2525
      %v2584 = vadd.f32 %v1787, %v2530
      %v2585 = vadd.f32 %v1792, %v2535
      %v2586 = vadd.f32 %v1797, %v2540
      %v2587 = vadd.f32 %v1802, %v2545
      %v2588 = vadd.f32 %v1807, %v2550
      %v2589 = vadd.f32 %v1812, %v2555
      %v2590 = vld [vmem:[%s2] sm:$0x1]
      %v2592 = vlaneseq
      %v2593 = vshrl.u32 %v2592, 7
      %v2594 = vsub.s32 0, %v2593
      %v2595 = vrot.slane %v2590, %v2594
      %v2597 = vadd.f32 %v2558, %v2595
      %v2598 = vadd.f32 %v2559, %v2595
      %v2599 = vadd.f32 %v2560, %v2595
      %v2600 = vadd.f32 %v2561, %v2595
      %v2601 = vadd.f32 %v2562, %v2595
      %v2602 = vadd.f32 %v2563, %v2595
      %v2603 = vadd.f32 %v2564, %v2595
      %v2604 = vadd.f32 %v2565, %v2595
      %v2605 = vadd.f32 %v2566, %v2595
      %v2606 = vadd.f32 %v2567, %v2595
      %v2607 = vadd.f32 %v2568, %v2595
      %v2608 = vadd.f32 %v2569, %v2595
      %v2609 = vadd.f32 %v2570, %v2595
      %v2610 = vadd.f32 %v2571, %v2595
      %v2611 = vadd.f32 %v2572, %v2595
      %v2612 = vadd.f32 %v2573, %v2595
      %v2613 = vadd.f32 %v2574, %v2595
      %v2614 = vadd.f32 %v2575, %v2595
      %v2615 = vadd.f32 %v2576, %v2595
      %v2616 = vadd.f32 %v2577, %v2595
      %v2617 = vadd.f32 %v2578, %v2595
      %v2618 = vadd.f32 %v2579, %v2595
      %v2619 = vadd.f32 %v2580, %v2595
      %v2620 = vadd.f32 %v2581, %v2595
      %v2621 = vadd.f32 %v2582, %v2595
      %v2622 = vadd.f32 %v2583, %v2595
      %v2623 = vadd.f32 %v2584, %v2595
      %v2624 = vadd.f32 %v2585, %v2595
      %v2625 = vadd.f32 %v2586, %v2595
      %v2626 = vadd.f32 %v2587, %v2595
      %v2627 = vadd.f32 %v2588, %v2595
      %v2628 = vadd.f32 %v2589, %v2595
      %v2629 = vld [vmem:[%s212] sm:$0xff]
      %v2630 = vld [vmem:[%s212 + $0x8] sm:$0xff]
      %v2631 = vld [vmem:[%s212 + $0x10] sm:$0xff]
      %v2632 = vld [vmem:[%s212 + $0x18] sm:$0xff]
      %v2633 = vld [vmem:[%s212 + $0x20] sm:$0xff]
      %v2634 = vld [vmem:[%s212 + $0x28] sm:$0xff]
      %v2635 = vld [vmem:[%s212 + $0x30] sm:$0xff]
      %v2636 = vld [vmem:[%s212 + $0x38] sm:$0xff]
      %v2637 = vld [vmem:[%s212 + $0x40] sm:$0xff]
      %v2638 = vld [vmem:[%s212 + $0x48] sm:$0xff]
      %v2639 = vld [vmem:[%s212 + $0x50] sm:$0xff]
      %v2640 = vld [vmem:[%s212 + $0x58] sm:$0xff]
      %v2641 = vld [vmem:[%s212 + $0x60] sm:$0xff]
      %v2642 = vld [vmem:[%s212 + $0x68] sm:$0xff]
      %v2643 = vld [vmem:[%s212 + $0x70] sm:$0xff]
      %v2644 = vld [vmem:[%s212 + $0x78] sm:$0xff]
      %v2645 = vld [vmem:[%s212 + $0x80] sm:$0xff]
      %v2646 = vld [vmem:[%s212 + $0x88] sm:$0xff]
      %v2647 = vld [vmem:[%s212 + $0x90] sm:$0xff]
      %v2648 = vld [vmem:[%s212 + $0x98] sm:$0xff]
      %v2649 = vld [vmem:[%s212 + $0xa0] sm:$0xff]
      %v2650 = vld [vmem:[%s212 + $0xa8] sm:$0xff]
      %v2651 = vld [vmem:[%s212 + $0xb0] sm:$0xff]
      %v2652 = vld [vmem:[%s212 + $0xb8] sm:$0xff]
      %v2653 = vld [vmem:[%s212 + $0xc0] sm:$0xff]
      %v2654 = vld [vmem:[%s212 + $0xc8] sm:$0xff]
      %v2655 = vld [vmem:[%s212 + $0xd0] sm:$0xff]
      %v2656 = vld [vmem:[%s212 + $0xd8] sm:$0xff]
      %v2657 = vld [vmem:[%s212 + $0xe0] sm:$0xff]
      %v2658 = vld [vmem:[%s212 + $0xe8] sm:$0xff]
      %v2659 = vld [vmem:[%s212 + $0xf0] sm:$0xff]
      %v2660 = vld [vmem:[%s212 + $0xf8] sm:$0xff]
      %v2661 = vadd.f32 %v2597, %v2629
      %v2662 = vadd.f32 %v2598, %v2630
      %v2663 = vadd.f32 %v2599, %v2631
      %v2664 = vadd.f32 %v2600, %v2632
      %v2665 = vadd.f32 %v2601, %v2633
      %v2666 = vadd.f32 %v2602, %v2634
      %v2667 = vadd.f32 %v2603, %v2635
      %v2668 = vadd.f32 %v2604, %v2636
      %v2669 = vadd.f32 %v2605, %v2637
      %v2670 = vadd.f32 %v2606, %v2638
      %v2671 = vadd.f32 %v2607, %v2639
      %v2672 = vadd.f32 %v2608, %v2640
      %v2673 = vadd.f32 %v2609, %v2641
      %v2674 = vadd.f32 %v2610, %v2642
      %v2675 = vadd.f32 %v2611, %v2643
      %v2676 = vadd.f32 %v2612, %v2644
      %v2677 = vadd.f32 %v2613, %v2645
      %v2678 = vadd.f32 %v2614, %v2646
      %v2679 = vadd.f32 %v2615, %v2647
      %v2680 = vadd.f32 %v2616, %v2648
      %v2681 = vadd.f32 %v2617, %v2649
      %v2682 = vadd.f32 %v2618, %v2650
      %v2683 = vadd.f32 %v2619, %v2651
      %v2684 = vadd.f32 %v2620, %v2652
      %v2685 = vadd.f32 %v2621, %v2653
      %v2686 = vadd.f32 %v2622, %v2654
      %v2687 = vadd.f32 %v2623, %v2655
      %v2688 = vadd.f32 %v2624, %v2656
      %v2689 = vadd.f32 %v2625, %v2657
      %v2690 = vadd.f32 %v2626, %v2658
      %v2691 = vadd.f32 %v2627, %v2659
      %v2692 = vadd.f32 %v2628, %v2660
      %2693 = vst.msk [vmem:[%s217] sm:$0xff] %vm218, %v2661
      %2694 = vst.msk [vmem:[%s217 + $0x8] sm:$0xff] %vm218, %v2662
      %2695 = vst.msk [vmem:[%s217 + $0x10] sm:$0xff] %vm218, %v2663
      %2696 = vst.msk [vmem:[%s217 + $0x18] sm:$0xff] %vm218, %v2664
      %2697 = vst.msk [vmem:[%s217 + $0x20] sm:$0xff] %vm218, %v2665
      %2698 = vst.msk [vmem:[%s217 + $0x28] sm:$0xff] %vm218, %v2666
      %2699 = vst.msk [vmem:[%s217 + $0x30] sm:$0xff] %vm218, %v2667
      %2700 = vst.msk [vmem:[%s217 + $0x38] sm:$0xff] %vm218, %v2668
      %2701 = vst.msk [vmem:[%s217 + $0x40] sm:$0xff] %vm218, %v2669
      %2702 = vst.msk [vmem:[%s217 + $0x48] sm:$0xff] %vm218, %v2670
      %2703 = vst.msk [vmem:[%s217 + $0x50] sm:$0xff] %vm218, %v2671
      %2704 = vst.msk [vmem:[%s217 + $0x58] sm:$0xff] %vm218, %v2672
      %2705 = vst.msk [vmem:[%s217 + $0x60] sm:$0xff] %vm218, %v2673
      %2706 = vst.msk [vmem:[%s217 + $0x68] sm:$0xff] %vm218, %v2674
      %2707 = vst.msk [vmem:[%s217 + $0x70] sm:$0xff] %vm218, %v2675
      %2708 = vst.msk [vmem:[%s217 + $0x78] sm:$0xff] %vm218, %v2676
      %2709 = vst.msk [vmem:[%s217 + $0x80] sm:$0xff] %vm218, %v2677
      %2710 = vst.msk [vmem:[%s217 + $0x88] sm:$0xff] %vm218, %v2678
      %2711 = vst.msk [vmem:[%s217 + $0x90] sm:$0xff] %vm218, %v2679
      %2712 = vst.msk [vmem:[%s217 + $0x98] sm:$0xff] %vm218, %v2680
      %2713 = vst.msk [vmem:[%s217 + $0xa0] sm:$0xff] %vm218, %v2681
      %2714 = vst.msk [vmem:[%s217 + $0xa8] sm:$0xff] %vm218, %v2682
      %2715 = vst.msk [vmem:[%s217 + $0xb0] sm:$0xff] %vm218, %v2683
      %2716 = vst.msk [vmem:[%s217 + $0xb8] sm:$0xff] %vm218, %v2684
      %2717 = vst.msk [vmem:[%s217 + $0xc0] sm:$0xff] %vm218, %v2685
      %2718 = vst.msk [vmem:[%s217 + $0xc8] sm:$0xff] %vm218, %v2686
      %2719 = vst.msk [vmem:[%s217 + $0xd0] sm:$0xff] %vm218, %v2687
      %2720 = vst.msk [vmem:[%s217 + $0xd8] sm:$0xff] %vm218, %v2688
      %2721 = vst.msk [vmem:[%s217 + $0xe0] sm:$0xff] %vm218, %v2689
      %2722 = vst.msk [vmem:[%s217 + $0xe8] sm:$0xff] %vm218, %v2690
      %2723 = vst.msk [vmem:[%s217 + $0xf0] sm:$0xff] %vm218, %v2691
      %2724 = vst.msk [vmem:[%s217 + $0xf8] sm:$0xff] %vm218, %v2692
      %p2725 = scmp.lt.s32.totalorder %s15, 1
      %s2726 = scalar_select %p2725, %s15, 1
      %s2727 = smul.addr %s2726, 32
      %s2728 = smul.addr %s2727, 8
      %s2729 = scalar_lea.vmem %s4, %s2728
      // Predicated region
      $region37: #{octave_conv_forward.5} parent=35 // pred_check
        %p2730 = pneg %p127
      $region38: #{octave_conv_forward.5} parent=35 // pred_check_branch
        %2732 = sbr.rel (%p2730) target = $region40
      $region39: #{octave_conv_forward.5} parent=35 // pred_region
        _
      $region40: #{octave_conv_forward.5} parent=35 // pred_fallthru
        _
    $region36: #{octave_conv_forward.5} parent=5 // pred_fallthru
      _
    %p2733 = scmp.le.s32.totalorder 2, %s10
    // Predicated region
    $region41: #{octave_conv_forward.5} parent=5 // pred_check
      %p2734 = pneg %p2733
    $region42: #{octave_conv_forward.5} parent=5 // pred_check_branch
      %2736 = sbr.rel (%p2734) target = $region44
    $region43: #{octave_conv_forward.5} parent=5 // pred_region
      %s2737 = ssub.s32 %s10, 2
      // Predicated region
      $region45: #{octave_conv_forward.5} parent=43 // pred_check
        %p2738 = pneg %p133
      $region46: #{octave_conv_forward.5} parent=43 // pred_check_branch
        %2740 = sbr.rel (%p2738) target = $region48
      $region47: #{octave_conv_forward.5} parent=43 // pred_region
        %p2741 = scmp.lt.s32.totalorder %s16, 1
        %s2742 = scalar_select %p2741, %s16, 1
        %s2743 = smul.addr %s2742, 32
        %s2744 = smul.addr %s2743, 8
        %s2745 = scalar_lea.vmem %s4, %s2744
      $region48: #{octave_conv_forward.5} parent=43 // pred_fallthru
        _
    $region44: #{octave_conv_forward.5} parent=5 // pred_fallthru
      _
  $region6: #{octave_conv_forward.5} parent=0 // loop_footer
    %s14 = sadd.s32 1, %s10
  $region7: #{octave_conv_forward.5} parent=0 // loop_footer_branch
    %9 = sbr.rel target = $region3
  $region8: #{octave_conv_forward.5} parent=0 // loop_exit
    _

// kernel: octave_conv_forward.7
$region0: #{octave_conv_forward.7}
  #allocation0 [shape = 'u32[]', space=smem, size = 0x4, offset = 0x4, fixed_abs, tag = 'smem constant byte address 0x4 - core index']
  #allocation1 [shape = 'u32[144,128]{1,0:T(1,128)}', space=vmem, size = 0x12000, scoped, tag = 'internal scratch']
  #allocation2 [shape = 'f32[10,10,2]{2,1,0:T(8,128)}', space=vmem, size = 0x14000, scoped, tag = 'scratch operand']
  %s0 = inlined_call_operand.vmem [shape: f32[2,8,8,2], index: 0, kind: input, shape index: {}]
  %s1 = inlined_call_operand.vmem [shape: f32[3,6,2], index: 1, kind: input, shape index: {}]
  %s2 = inlined_call_operand.vmem [shape: f32[1,2], index: 2, kind: input, shape index: {}]
  %s3 = inlined_call_operand.vmem [shape: f32[2,8,8,2], index: 3, kind: input, shape index: {}]
  %s4 = inlined_call_operand.vmem [shape: f32[2,8,8,2], index: 4, kind: output, shape index: {}]
  %s5 = sld [smem:[#allocation0]]
  $region49: #{octave_conv_forward.7} parent=0
    _
  %s7 = ssub.s32 1, %s5
  %s8 = scalar_select 0, %s7, %s5
  loop: start=0, step=1, limit=4
  $region2: #{octave_conv_forward.7} parent=0 // loop_pre_header
    _
  $region3: #{octave_conv_forward.7} parent=0 // loop_header
    %s10 = sphi 0, %s14
    %p11 = scmp.ge.s32.totalorder %s10, 4
    %s20 = sphi 0, %s22
    %s23 = sphi 0, %s20
    %s24 = sphi 0, %s23
    %s40 = sphi 0, %s24
    %s44 = sphi 0, %s44
    %s46 = sphi 0, %s44
    %s47 = sphi 0, %s46
    %s61 = sphi 0, %s47
    %s65 = sphi 0, %s65
    %s67 = sphi 0, %s65
    %s68 = sphi 0, %s67
    %s82 = sphi 0, %s68
    %s88 = sphi 0, %s90
    %s91 = sphi 0, %s88
    %s92 = sphi 0, %s91
    %s108 = sphi 0, %s92
    %s114 = sphi 0, %s116
    %s117 = sphi 0, %s114
    %s118 = sphi 0, %s117
    %s134 = sphi 0, %s118
  $region4: #{octave_conv_forward.7} parent=0 // loop_header_branch
    %13 = sbr.rel (%p11) target = $region8
  $region5: #{octave_conv_forward.7} parent=0 // loop_body
    %s15 = ssub.s32 %s10, 1
    %s16 = ssub.s32 %s10, 2
    %s17 = sadd.s32 %s10, 1
    %s18 = ssub.s32 %s10, %s17
    %p19 = scmp.eq.s32.totalorder %s18, 0
    %s21 = sadd.s32 %s20, 1
    %s22 = scalar_select %p19, %s20, %s21
    %p25 = pneg %p19
    %p26 = scmp.eq.s32.totalorder %s10, 1
    %p27 = por %p25, %p26
    %p28 = scmp.ne.s32.totalorder %s20, %s23
    %p29 = scmp.eq.s32.totalorder %s10, 0
    %p30 = por %p28, %p29
    %p31 = scmp.ne.s32.totalorder %s20, %s23
    %p32 = scmp.eq.s32.totalorder %s15, 1
    %p33 = por %p31, %p32
    %p34 = scmp.ne.s32.totalorder %s23, %s24
    %p35 = scmp.eq.s32.totalorder %s15, 0
    %p36 = por %p34, %p35
    %p37 = scmp.ne.s32.totalorder %s23, %s24
    %p38 = scmp.eq.s32.totalorder %s16, 1
    %p39 = por %p37, %p38
    %p41 = scmp.ne.s32.totalorder %s24, %s40
    %p42 = scmp.eq.s32.totalorder %s16, 0
    %p43 = por %p41, %p42
    %s45 = sadd.s32 %s44, 1
    %p48 = scmp.eq.s32.totalorder %s10, 1
    %p49 = scmp.ne.s32.totalorder %s44, %s46
    %p50 = scmp.eq.s32.totalorder %s10, 0
    %p51 = por %p49, %p50
    %p52 = scmp.ne.s32.totalorder %s44, %s46
    %p53 = scmp.eq.s32.totalorder %s15, 1
    %p54 = por %p52, %p53
    %p55 = scmp.ne.s32.totalorder %s46, %s47
    %p56 = scmp.eq.s32.totalorder %s15, 0
    %p57 = por %p55, %p56
    %p58 = scmp.ne.s32.totalorder %s46, %s47
    %p59 = scmp.eq.s32.totalorder %s16, 1
    %p60 = por %p58, %p59
    %p62 = scmp.ne.s32.totalorder %s47, %s61
    %p63 = scmp.eq.s32.totalorder %s16, 0
    %p64 = por %p62, %p63
    %s66 = sadd.s32 %s65, 1
    %p69 = scmp.eq.s32.totalorder %s10, 1
    %p70 = scmp.ne.s32.totalorder %s65, %s67
    %p71 = scmp.eq.s32.totalorder %s10, 0
    %p72 = por %p70, %p71
    %p73 = scmp.ne.s32.totalorder %s65, %s67
    %p74 = scmp.eq.s32.totalorder %s15, 1
    %p75 = por %p73, %p74
    %p76 = scmp.ne.s32.totalorder %s67, %s68
    %p77 = scmp.eq.s32.totalorder %s15, 0
    %p78 = por %p76, %p77
    %p79 = scmp.ne.s32.totalorder %s67, %s68
    %p80 = scmp.eq.s32.totalorder %s16, 1
    %p81 = por %p79, %p80
    %p83 = scmp.ne.s32.totalorder %s68, %s82
    %p84 = scmp.eq.s32.totalorder %s16, 0
    %p85 = por %p83, %p84
    %s86 = ssub.s32 %s10, %s17
    %p87 = scmp.eq.s32.totalorder %s86, 0
    %s89 = sadd.s32 %s88, 1
    %s90 = scalar_select %p87, %s88, %s89
    %p93 = pneg %p87
    %p94 = scmp.eq.s32.totalorder %s10, 1
    %p95 = por %p93, %p94
    %p96 = scmp.ne.s32.totalorder %s88, %s91
    %p97 = scmp.eq.s32.totalorder %s10, 0
    %p98 = por %p96, %p97
    %p99 = scmp.ne.s32.totalorder %s88, %s91
    %p100 = scmp.eq.s32.totalorder %s15, 1
    %p101 = por %p99, %p100
    %p102 = scmp.ne.s32.totalorder %s91, %s92
    %p103 = scmp.eq.s32.totalorder %s15, 0
    %p104 = por %p102, %p103
    %p105 = scmp.ne.s32.totalorder %s91, %s92
    %p106 = scmp.eq.s32.totalorder %s16, 1
    %p107 = por %p105, %p106
    %p109 = scmp.ne.s32.totalorder %s92, %s108
    %p110 = scmp.eq.s32.totalorder %s16, 0
    %p111 = por %p109, %p110
    %s112 = ssub.s32 %s10, %s17
    %p113 = scmp.eq.s32.totalorder %s112, 0
    %s115 = sadd.s32 %s114, 1
    %s116 = scalar_select %p113, %s114, %s115
    %p119 = pneg %p113
    %p120 = scmp.eq.s32.totalorder %s10, 1
    %p121 = por %p119, %p120
    %p122 = scmp.ne.s32.totalorder %s114, %s117
    %p123 = scmp.eq.s32.totalorder %s10, 0
    %p124 = por %p122, %p123
    %p125 = scmp.ne.s32.totalorder %s114, %s117
    %p126 = scmp.eq.s32.totalorder %s15, 1
    %p127 = por %p125, %p126
    %p128 = scmp.ne.s32.totalorder %s117, %s118
    %p129 = scmp.eq.s32.totalorder %s15, 0
    %p130 = por %p128, %p129
    %p131 = scmp.ne.s32.totalorder %s117, %s118
    %p132 = scmp.eq.s32.totalorder %s16, 1
    %p133 = por %p131, %p132
    %p135 = scmp.ne.s32.totalorder %s118, %s134
    %p136 = scmp.eq.s32.totalorder %s16, 0
    %p137 = por %p135, %p136
    %p138 = scmp.le.s32.totalorder 1, %s10
    %p139 = scmp.lt.s32.totalorder %s10, 3
    %p140 = pnand %p138, %p139
    %p141 = pneg %p140
    // Predicated region
    $region9: #{octave_conv_forward.7} parent=5 // pred_check
      _
    $region10: #{octave_conv_forward.7} parent=5 // pred_check_branch
      %143 = sbr.rel (%p140) target = $region12
    $region11: #{octave_conv_forward.7} parent=5 // pred_region
      %s144 = ssub.s32 %s10, 1
      // Predicated region
      $region13: #{octave_conv_forward.7} parent=11 // pred_check
        %p145 = pneg %p57
      $region14: #{octave_conv_forward.7} parent=11 // pred_check_branch
        %147 = sbr.rel (%p145) target = $region16
      $region15: #{octave_conv_forward.7} parent=11 // pred_region
        _
      $region16: #{octave_conv_forward.7} parent=11 // pred_fallthru
        _
      // Predicated region
      $region17: #{octave_conv_forward.7} parent=11 // pred_check
        %p148 = pneg %p78
      $region18: #{octave_conv_forward.7} parent=11 // pred_check_branch
        %150 = sbr.rel (%p148) target = $region20
      $region19: #{octave_conv_forward.7} parent=11 // pred_region
        _
      $region20: #{octave_conv_forward.7} parent=11 // pred_fallthru
        _
    $region12: #{octave_conv_forward.7} parent=5 // pred_fallthru
      _
    %p151 = scmp.lt.s32.totalorder %s10, 2
    // Predicated region
    $region21: #{octave_conv_forward.7} parent=5 // pred_check
      %p152 = pneg %p151
    $region22: #{octave_conv_forward.7} parent=5 // pred_check_branch
      %154 = sbr.rel (%p152) target = $region24
    $region23: #{octave_conv_forward.7} parent=5 // pred_region
      // Predicated region
      $region25: #{octave_conv_forward.7} parent=23 // pred_check
        %p155 = pneg %p30
      $region26: #{octave_conv_forward.7} parent=23 // pred_check_branch
        %157 = sbr.rel (%p155) target = $region28
      $region27: #{octave_conv_forward.7} parent=23 // pred_region
        %p158 = scmp.lt.s32.totalorder %s10, 1
        %s159 = scalar_select %p158, %s10, 1
        %s160 = smul.addr %s159, 8
        %s161 = smul.addr %s160, 8
        %s162 = scalar_lea.vmem %s0, %s161
      $region28: #{octave_conv_forward.7} parent=23 // pred_fallthru
        _
      // Predicated region
      $region29: #{octave_conv_forward.7} parent=23 // pred_check
        %p163 = pneg %p98
      $region30: #{octave_conv_forward.7} parent=23 // pred_check_branch
        %165 = sbr.rel (%p163) target = $region32
      $region31: #{octave_conv_forward.7} parent=23 // pred_region
        %p166 = scmp.lt.s32.totalorder %s10, 1
        %s167 = scalar_select %p166, %s10, 1
        %s168 = smul.addr %s167, 8
        %s169 = smul.addr %s168, 8
        %s170 = scalar_lea.vmem %s3, %s169
      $region32: #{octave_conv_forward.7} parent=23 // pred_fallthru
        _
    $region24: #{octave_conv_forward.7} parent=5 // pred_fallthru
      _
    %p171 = scmp.le.s32.totalorder 1, %s10
    %p172 = scmp.lt.s32.totalorder %s10, 3
    %p173 = pnand %p171, %p172
    %p174 = pneg %p173
    // Predicated region
    $region33: #{octave_conv_forward.7} parent=5 // pred_check
      _
    $region34: #{octave_conv_forward.7} parent=5 // pred_check_branch
      %176 = sbr.rel (%p173) target = $region36
    $region35: #{octave_conv_forward.7} parent=5 // pred_region
      %s177 = ssub.s32 %s10, 1
      %p178 = scmp.lt.s32.totalorder %s15, 1
      %s179 = scalar_select %p178, %s15, 1
      %s180 = smul.addr %s179, 8
      %s181 = smul.addr %s180, 8
      %s182 = scalar_lea.vmem %s0, %s181
      %p183 = pneg %p36
      %p184 = pneg %p33
      %p185 = pneg %p57
      %p186 = pneg %p54
      %p187 = pneg %p78
      %p188 = pneg %p75
      %p189 = scmp.lt.s32.totalorder %s15, 1
      %s190 = scalar_select %p189, %s15, 1
      %s191 = smul.addr %s190, 8
      %s192 = smul.addr %s191, 8
      %s193 = scalar_lea.vmem %s3, %s192
      %p194 = pneg %p104
      %p195 = pneg %p101
      %p196 = pneg %p130
      %p197 = pneg %p127
      %p198 = scmp.lt.s32.totalorder %s15, 1
      %s199 = scalar_select %p198, %s15, 1
      %s200 = smul.addr %s199, 8
      %s201 = smul.addr %s200, 8
      %s202 = scalar_lea.vmem %s4, %s201
      %p203 = scmp.lt.s32.totalorder %s15, 1
      %s204 = scalar_select %p203, %s15, 1
      %s205 = smul.addr %s204, 8
      %s206 = smul.addr %s205, 8
      %s207 = scalar_lea.vmem %s0, %s206
      %p208 = scmp.lt.s32.totalorder %s15, 1
      %s209 = scalar_select %p208, %s15, 1
      %s210 = smul.addr %s209, 8
      %s211 = smul.addr %s210, 8
      %s212 = scalar_lea.vmem %s3, %s211
      %p213 = scmp.lt.s32.totalorder %s15, 1
      %s214 = scalar_select %p213, %s15, 1
      %s215 = smul.addr %s214, 8
      %s216 = smul.addr %s215, 8
      %s217 = scalar_lea.vmem %s4, %s216
      %vm218 = vcmask 15360
      %219 = vst.msk [vmem:[#allocation2] sm:$0xff] %vm218, 0.0
      %vm220 = vcmask 9216
      %221 = vst.msk [vmem:[#allocation2 + $0x8] sm:$0x3] %vm220, 0.0
      %s222 = scalar_lea.vmem [#allocation2], 144
      %223 = vst.msk [vmem:[%s222] sm:$0xff] %vm218, 0.0
      %224 = vst.msk [vmem:[%s222 + $0x8] sm:$0x3] %vm220, 0.0
      %vm225 = vcmask 8192
      %226 = vst.msk [vmem:[#allocation2] sm:$0x1] %vm225, 0.0
      %227 = vst.msk [vmem:[#allocation2 + $0x10] sm:$0x1] %vm225, 0.0
      %228 = vst.msk [vmem:[#allocation2 + $0x20] sm:$0x1] %vm225, 0.0
      %229 = vst.msk [vmem:[#allocation2 + $0x30] sm:$0x1] %vm225, 0.0
      %230 = vst.msk [vmem:[#allocation2 + $0x40] sm:$0x1] %vm225, 0.0
      %231 = vst.msk [vmem:[#allocation2 + $0x50] sm:$0x1] %vm225, 0.0
      %232 = vst.msk [vmem:[#allocation2 + $0x60] sm:$0x1] %vm225, 0.0
      %233 = vst.msk [vmem:[#allocation2 + $0x70] sm:$0x1] %vm225, 0.0
      %234 = vst.msk [vmem:[#allocation2 + $0x80] sm:$0x1] %vm225, 0.0
      %235 = vst.msk [vmem:[#allocation2 + $0x90] sm:$0x1] %vm225, 0.0
      %236 = vst.msk [vmem:[#allocation2 + $0x9] sm:$0x1] %vm225, 0.0
      %237 = vst.msk [vmem:[#allocation2 + $0x19] sm:$0x1] %vm225, 0.0
      %238 = vst.msk [vmem:[#allocation2 + $0x29] sm:$0x1] %vm225, 0.0
      %239 = vst.msk [vmem:[#allocation2 + $0x39] sm:$0x1] %vm225, 0.0
      %240 = vst.msk [vmem:[#allocation2 + $0x49] sm:$0x1] %vm225, 0.0
      %241 = vst.msk [vmem:[#allocation2 + $0x59] sm:$0x1] %vm225, 0.0
      %242 = vst.msk [vmem:[#allocation2 + $0x69] sm:$0x1] %vm225, 0.0
      %243 = vst.msk [vmem:[#allocation2 + $0x79] sm:$0x1] %vm225, 0.0
      %244 = vst.msk [vmem:[#allocation2 + $0x89] sm:$0x1] %vm225, 0.0
      %245 = vst.msk [vmem:[#allocation2 + $0x99] sm:$0x1] %vm225, 0.0
      %v246 = vld [vmem:[%s207] sm:$0xff]
      %v247 = vld [vmem:[%s207 + $0x8] sm:$0xff]
      %v248 = vld [vmem:[%s207 + $0x10] sm:$0xff]
      %v249 = vld [vmem:[%s207 + $0x18] sm:$0xff]
      %v250 = vld [vmem:[%s207 + $0x20] sm:$0xff]
      %v251 = vld [vmem:[%s207 + $0x28] sm:$0xff]
      %v252 = vld [vmem:[%s207 + $0x30] sm:$0xff]
      %v253 = vld [vmem:[%s207 + $0x38] sm:$0xff]
      %s254 = scalar_lea.vmem [#allocation2], 16
      %255 = vst.msk [vmem:[%s254 + $0x1] sm:$0xff] %vm218, %v246
      %256 = vst.msk [vmem:[%s254 + $0x11] sm:$0xff] %vm218, %v247
      %257 = vst.msk [vmem:[%s254 + $0x21] sm:$0xff] %vm218, %v248
      %258 = vst.msk [vmem:[%s254 + $0x31] sm:$0xff] %vm218, %v249
      %259 = vst.msk [vmem:[%s254 + $0x41] sm:$0xff] %vm218, %v250
      %260 = vst.msk [vmem:[%s254 + $0x51] sm:$0xff] %vm218, %v251
      %261 = vst.msk [vmem:[%s254 + $0x61] sm:$0xff] %vm218, %v252
      %262 = vst.msk [vmem:[%s254 + $0x71] sm:$0xff] %vm218, %v253
      %v263 = vld [vmem:[#allocation2] sm:$0xff]
      %v264 = vld [vmem:[#allocation2 + $0x10] sm:$0xff]
      %v265 = vld [vmem:[#allocation2 + $0x20] sm:$0xff]
      %v266 = vld [vmem:[#allocation2 + $0x30] sm:$0xff]
      %v267 = vld [vmem:[#allocation2 + $0x40] sm:$0xff]
      %v268 = vld [vmem:[#allocation2 + $0x50] sm:$0xff]
      %v269 = vld [vmem:[#allocation2 + $0x60] sm:$0xff]
      %v270 = vld [vmem:[#allocation2 + $0x70] sm:$0xff]
      %v271 = vld [vmem:[#allocation2 + $0x1] sm:$0xff]
      %v272 = vld [vmem:[#allocation2 + $0x11] sm:$0xff]
      %v273 = vld [vmem:[#allocation2 + $0x21] sm:$0xff]
      %v274 = vld [vmem:[#allocation2 + $0x31] sm:$0xff]
      %v275 = vld [vmem:[#allocation2 + $0x41] sm:$0xff]
      %v276 = vld [vmem:[#allocation2 + $0x51] sm:$0xff]
      %v277 = vld [vmem:[#allocation2 + $0x61] sm:$0xff]
      %v278 = vld [vmem:[#allocation2 + $0x71] sm:$0xff]
      %v279 = vld [vmem:[#allocation2 + $0x2] sm:$0xff]
      %v280 = vld [vmem:[#allocation2 + $0x12] sm:$0xff]
      %v281 = vld [vmem:[#allocation2 + $0x22] sm:$0xff]
      %v282 = vld [vmem:[#allocation2 + $0x32] sm:$0xff]
      %v283 = vld [vmem:[#allocation2 + $0x42] sm:$0xff]
      %v284 = vld [vmem:[#allocation2 + $0x52] sm:$0xff]
      %v285 = vld [vmem:[#allocation2 + $0x62] sm:$0xff]
      %v286 = vld [vmem:[#allocation2 + $0x72] sm:$0xff]
      %295 = vrot.lane.b32.xlu0 %v271, 2
      %v296 = vpop.permute.xlu0 %295
      %297 = vrot.lane.b32.xlu0 %v272, 2
      %v298 = vpop.permute.xlu0 %297
      %299 = vrot.lane.b32.xlu0 %v273, 2
      %v300 = vpop.permute.xlu0 %299
      %301 = vrot.lane.b32.xlu0 %v274, 2
      %v302 = vpop.permute.xlu0 %301
      %303 = vrot.lane.b32.xlu0 %v275, 2
      %v304 = vpop.permute.xlu0 %303
      %305 = vrot.lane.b32.xlu0 %v276, 2
      %v306 = vpop.permute.xlu0 %305
      %307 = vrot.lane.b32.xlu0 %v277, 2
      %v308 = vpop.permute.xlu0 %307
      %309 = vrot.lane.b32.xlu0 %v278, 2
      %v310 = vpop.permute.xlu0 %309
      %327 = vrot.lane.b32.xlu0 %v279, 4
      %v328 = vpop.permute.xlu0 %327
      %329 = vrot.lane.b32.xlu0 %v280, 4
      %v330 = vpop.permute.xlu0 %329
      %331 = vrot.lane.b32.xlu0 %v281, 4
      %v332 = vpop.permute.xlu0 %331
      %333 = vrot.lane.b32.xlu0 %v282, 4
      %v334 = vpop.permute.xlu0 %333
      %335 = vrot.lane.b32.xlu0 %v283, 4
      %v336 = vpop.permute.xlu0 %335
      %337 = vrot.lane.b32.xlu0 %v284, 4
      %v338 = vpop.permute.xlu0 %337
      %339 = vrot.lane.b32.xlu0 %v285, 4
      %v340 = vpop.permute.xlu0 %339
      %341 = vrot.lane.b32.xlu0 %v286, 4
      %v342 = vpop.permute.xlu0 %341
      %v351 = vsel %vm218, %v263, %v296
      %v352 = vsel %vm218, %v264, %v298
      %v353 = vsel %vm218, %v265, %v300
      %v354 = vsel %vm218, %v266, %v302
      %v355 = vsel %vm218, %v267, %v304
      %v356 = vsel %vm218, %v268, %v306
      %v357 = vsel %vm218, %v269, %v308
      %v358 = vsel %vm218, %v270, %v310
      %vm359 = vcmask 31744
      %v360 = vsel %vm359, %v351, %v328
      %v361 = vsel %vm359, %v352, %v330
      %v362 = vsel %vm359, %v353, %v332
      %v363 = vsel %vm359, %v354, %v334
      %v364 = vsel %vm359, %v355, %v336
      %v365 = vsel %vm359, %v356, %v338
      %v366 = vsel %vm359, %v357, %v340
      %v367 = vsel %vm359, %v358, %v342
      %v368 = vld [vmem:[%s1] sm:$0x3f]
      %v369 = vld [vmem:[%s254] sm:$0xff]
      %v370 = vld [vmem:[%s254 + $0x10] sm:$0xff]
      %v371 = vld [vmem:[%s254 + $0x20] sm:$0xff]
      %v372 = vld [vmem:[%s254 + $0x30] sm:$0xff]
      %v373 = vld [vmem:[%s254 + $0x40] sm:$0xff]
      %v374 = vld [vmem:[%s254 + $0x50] sm:$0xff]
      %v375 = vld [vmem:[%s254 + $0x60] sm:$0xff]
      %v376 = vld [vmem:[%s254 + $0x70] sm:$0xff]
      %v377 = vld [vmem:[%s254 + $0x1] sm:$0xff]
      %v378 = vld [vmem:[%s254 + $0x11] sm:$0xff]
      %v379 = vld [vmem:[%s254 + $0x21] sm:$0xff]
      %v380 = vld [vmem:[%s254 + $0x31] sm:$0xff]
      %v381 = vld [vmem:[%s254 + $0x41] sm:$0xff]
      %v382 = vld [vmem:[%s254 + $0x51] sm:$0xff]
      %v383 = vld [vmem:[%s254 + $0x61] sm:$0xff]
      %v384 = vld [vmem:[%s254 + $0x71] sm:$0xff]
      %v385 = vld [vmem:[%s254 + $0x2] sm:$0xff]
      %v386 = vld [vmem:[%s254 + $0x12] sm:$0xff]
      %v387 = vld [vmem:[%s254 + $0x22] sm:$0xff]
      %v388 = vld [vmem:[%s254 + $0x32] sm:$0xff]
      %v389 = vld [vmem:[%s254 + $0x42] sm:$0xff]
      %v390 = vld [vmem:[%s254 + $0x52] sm:$0xff]
      %v391 = vld [vmem:[%s254 + $0x62] sm:$0xff]
      %v392 = vld [vmem:[%s254 + $0x72] sm:$0xff]
      %401 = vrot.lane.b32.xlu0 %v377, 2
      %v402 = vpop.permute.xlu0 %401
      %403 = vrot.lane.b32.xlu0 %v378, 2
      %v404 = vpop.permute.xlu0 %403
      %405 = vrot.lane.b32.xlu0 %v379, 2
      %v406 = vpop.permute.xlu0 %405
      %407 = vrot.lane.b32.xlu0 %v380, 2
      %v408 = vpop.permute.xlu0 %407
      %409 = vrot.lane.b32.xlu0 %v381, 2
      %v410 = vpop.permute.xlu0 %409
      %411 = vrot.lane.b32.xlu0 %v382, 2
      %v412 = vpop.permute.xlu0 %411
      %413 = vrot.lane.b32.xlu0 %v383, 2
      %v414 = vpop.permute.xlu0 %413
      %415 = vrot.lane.b32.xlu0 %v384, 2
      %v416 = vpop.permute.xlu0 %415
      %433 = vrot.lane.b32.xlu0 %v385, 4
      %v434 = vpop.permute.xlu0 %433
      %435 = vrot.lane.b32.xlu0 %v386, 4
      %v436 = vpop.permute.xlu0 %435
      %437 = vrot.lane.b32.xlu0 %v387, 4
      %v438 = vpop.permute.xlu0 %437
      %439 = vrot.lane.b32.xlu0 %v388, 4
      %v440 = vpop.permute.xlu0 %439
      %441 = vrot.lane.b32.xlu0 %v389, 4
      %v442 = vpop.permute.xlu0 %441
      %443 = vrot.lane.b32.xlu0 %v390, 4
      %v444 = vpop.permute.xlu0 %443
      %445 = vrot.lane.b32.xlu0 %v391, 4
      %v446 = vpop.permute.xlu0 %445
      %447 = vrot.lane.b32.xlu0 %v392, 4
      %v448 = vpop.permute.xlu0 %447
      %v457 = vsel %vm218, %v369, %v402
      %v458 = vsel %vm218, %v370, %v404
      %v459 = vsel %vm218, %v371, %v406
      %v460 = vsel %vm218, %v372, %v408
      %v461 = vsel %vm218, %v373, %v410
      %v462 = vsel %vm218, %v374, %v412
      %v463 = vsel %vm218, %v375, %v414
      %v464 = vsel %vm218, %v376, %v416
      %v465 = vsel %vm359, %v457, %v434
      %v466 = vsel %vm359, %v458, %v436
      %v467 = vsel %vm359, %v459, %v438
      %v468 = vsel %vm359, %v460, %v440
      %v469 = vsel %vm359, %v461, %v442
      %v470 = vsel %vm359, %v462, %v444
      %v471 = vsel %vm359, %v463, %v446
      %v472 = vsel %vm359, %v464, %v448
      %s473 = scalar_lea.vmem %s1, 8
      %v474 = vld [vmem:[%s473] sm:$0x3f]
      %vm475 = vcmask 48128
      %v477 = vsel %vm475, %v465, 0
      %v480 = vsel %vm475, %v466, 0
      %v483 = vsel %vm475, %v467, 0
      %v486 = vsel %vm475, %v468, 0
      %v489 = vsel %vm475, %v469, 0
      %v492 = vsel %vm475, %v470, 0
      %v495 = vsel %vm475, %v471, 0
      %v498 = vsel %vm475, %v472, 0
      %vm500 = vcmask 1045504
      %v502 = vsel %vm500, %v474, 0
      %504 = vmatprep.subr.mxu0 0.0
      %505 = vmatpush1.msra.mxu0 0.0
      %506 = vmatprep.subr.mxu0 0.0
      %507 = vmatpush1.msra.mxu0 0.0
      %508 = vmatprep.subr.mxu0 0.0
      %509 = vmatpush1.msra.mxu0 0.0
      %510 = vmatprep.subr.mxu0 0.0
      %511 = vmatpush1.msra.mxu0 0.0
      %512 = vmatprep.subr.mxu0 0.0
      %513 = vmatpush1.msra.mxu0 0.0
      %514 = vmatprep.subr.mxu0 0.0
      %515 = vmatpush1.msra.mxu0 0.0
      %516 = vmatprep.subr.mxu0 0.0
      %517 = vmatpush1.msra.mxu0 0.0
      %518 = vmatprep.subr.mxu0 0.0
      %519 = vmatpush1.msra.mxu0 0.0
      %520 = vmatprep.subr.mxu0 0.0
      %521 = vmatpush1.msra.mxu0 0.0
      %522 = vmatprep.subr.mxu0 0.0
      %523 = vmatpush1.msra.mxu0 0.0
      %524 = vmatprep.subr.mxu0 0.0
      %525 = vmatpush1.msra.mxu0 0.0
      %526 = vmatprep.subr.mxu0 0.0
      %527 = vmatpush1.msra.mxu0 0.0
      %528 = vmatprep.subr.mxu0 0.0
      %529 = vmatpush1.msra.mxu0 0.0
      %530 = vmatprep.subr.mxu0 0.0
      %531 = vmatpush1.msra.mxu0 0.0
      %532 = vmatprep.subr.mxu0 0.0
      %533 = vmatpush1.msra.mxu0 0.0
      %534 = vmatprep.subr.mxu0 0.0
      %535 = vmatpush1.msra.mxu0 %v502
      %536 = vmatprep.subr.mxu0 0.0
      %537 = vmatpush2.msra.mxu0 0.0
      %538 = vmatprep.subr.mxu0 0.0
      %539 = vmatpush2.msra.mxu0 0.0
      %540 = vmatprep.subr.mxu0 0.0
      %541 = vmatpush2.msra.mxu0 0.0
      %542 = vmatprep.subr.mxu0 0.0
      %543 = vmatpush2.msra.mxu0 0.0
      %544 = vmatprep.subr.mxu0 0.0
      %545 = vmatpush2.msra.mxu0 0.0
      %546 = vmatprep.subr.mxu0 0.0
      %547 = vmatpush2.msra.mxu0 0.0
      %548 = vmatprep.subr.mxu0 0.0
      %549 = vmatpush2.msra.mxu0 0.0
      %550 = vmatprep.subr.mxu0 0.0
      %551 = vmatpush2.msra.mxu0 0.0
      %552 = vmatprep.subr.mxu0 0.0
      %553 = vmatpush2.msra.mxu0 0.0
      %554 = vmatprep.subr.mxu0 0.0
      %555 = vmatpush2.msra.mxu0 0.0
      %556 = vmatprep.subr.mxu0 0.0
      %557 = vmatpush2.msra.mxu0 0.0
      %558 = vmatprep.subr.mxu0 0.0
      %559 = vmatpush2.msra.mxu0 0.0
      %560 = vmatprep.subr.mxu0 0.0
      %561 = vmatpush2.msra.mxu0 0.0
      %562 = vmatprep.subr.mxu0 0.0
      %563 = vmatpush2.msra.mxu0 0.0
      %564 = vmatprep.subr.mxu0 0.0
      %565 = vmatpush2.msra.mxu0 0.0
      %566 = vmatprep.subr.mxu0 0.0
      %567 = vmatpush2.msra.mxu0 0.0
      %568 = vmatprep.mubr.f32.mxu0 0.0
      %569 = vmatmul.mubr.f32.gmra.mxu0 %v477
      %v570 = vpop.f32.mrf.mxu0
      %v571 = vadd.f32 0.0, %v570
      %v572 = vpop.f32.mrf.mxu0
      %573 = vmatprep.mubr.f32.mxu0 0.0
      %574 = vmatmul.mubr.f32.gmra.mxu0 %v480
      %v575 = vpop.f32.mrf.mxu0
      %v576 = vadd.f32 0.0, %v575
      %v577 = vpop.f32.mrf.mxu0
      %578 = vmatprep.mubr.f32.mxu0 0.0
      %579 = vmatmul.mubr.f32.gmra.mxu0 %v483
      %v580 = vpop.f32.mrf.mxu0
      %v581 = vadd.f32 0.0, %v580
      %v582 = vpop.f32.mrf.mxu0
      %583 = vmatprep.mubr.f32.mxu0 0.0
      %584 = vmatmul.mubr.f32.gmra.mxu0 %v486
      %v585 = vpop.f32.mrf.mxu0
      %v586 = vadd.f32 0.0, %v585
      %v587 = vpop.f32.mrf.mxu0
      %588 = vmatprep.mubr.f32.mxu0 0.0
      %589 = vmatmul.mubr.f32.gmra.mxu0 %v489
      %v590 = vpop.f32.mrf.mxu0
      %v591 = vadd.f32 0.0, %v590
      %v592 = vpop.f32.mrf.mxu0
      %593 = vmatprep.mubr.f32.mxu0 0.0
      %594 = vmatmul.mubr.f32.gmra.mxu0 %v492
      %v595 = vpop.f32.mrf.mxu0
      %v596 = vadd.f32 0.0, %v595
      %v597 = vpop.f32.mrf.mxu0
      %598 = vmatprep.mubr.f32.mxu0 0.0
      %599 = vmatmul.mubr.f32.gmra.mxu0 %v495
      %v600 = vpop.f32.mrf.mxu0
      %v601 = vadd.f32 0.0, %v600
      %v602 = vpop.f32.mrf.mxu0
      %603 = vmatprep.mubr.f32.mxu0 0.0
      %604 = vmatmul.mubr.f32.gmra.mxu0 %v498
      %v605 = vpop.f32.mrf.mxu0
      %v606 = vadd.f32 0.0, %v605
      %v607 = vpop.f32.mrf.mxu0
      %608 = vdwg.mxu0
      %v610 = vsel %vm475, %v360, 0
      %v613 = vsel %vm475, %v361, 0
      %v616 = vsel %vm475, %v362, 0
      %v619 = vsel %vm475, %v363, 0
      %v622 = vsel %vm475, %v364, 0
      %v625 = vsel %vm475, %v365, 0
      %v628 = vsel %vm475, %v366, 0
      %v631 = vsel %vm475, %v367, 0
      %v634 = vsel %vm500, %v368, 0
      %636 = vmatprep.subr.mxu0 0.0
      %637 = vmatpush1.msra.mxu0 0.0
      %638 = vmatprep.subr.mxu0 0.0
      %639 = vmatpush1.msra.mxu0 0.0
      %640 = vmatprep.subr.mxu0 0.0
      %641 = vmatpush1.msra.mxu0 0.0
      %642 = vmatprep.subr.mxu0 0.0
      %643 = vmatpush1.msra.mxu0 0.0
      %644 = vmatprep.subr.mxu0 0.0
      %645 = vmatpush1.msra.mxu0 0.0
      %646 = vmatprep.subr.mxu0 0.0
      %647 = vmatpush1.msra.mxu0 0.0
      %648 = vmatprep.subr.mxu0 0.0
      %649 = vmatpush1.msra.mxu0 0.0
      %650 = vmatprep.subr.mxu0 0.0
      %651 = vmatpush1.msra.mxu0 0.0
      %652 = vmatprep.subr.mxu0 0.0
      %653 = vmatpush1.msra.mxu0 0.0
      %654 = vmatprep.subr.mxu0 0.0
      %655 = vmatpush1.msra.mxu0 0.0
      %656 = vmatprep.subr.mxu0 0.0
      %657 = vmatpush1.msra.mxu0 0.0
      %658 = vmatprep.subr.mxu0 0.0
      %659 = vmatpush1.msra.mxu0 0.0
      %660 = vmatprep.subr.mxu0 0.0
      %661 = vmatpush1.msra.mxu0 0.0
      %662 = vmatprep.subr.mxu0 0.0
      %663 = vmatpush1.msra.mxu0 0.0
      %664 = vmatprep.subr.mxu0 0.0
      %665 = vmatpush1.msra.mxu0 0.0
      %666 = vmatprep.subr.mxu0 0.0
      %667 = vmatpush1.msra.mxu0 %v634
      %668 = vmatprep.subr.mxu0 0.0
      %669 = vmatpush2.msra.mxu0 0.0
      %670 = vmatprep.subr.mxu0 0.0
      %671 = vmatpush2.msra.mxu0 0.0
      %672 = vmatprep.subr.mxu0 0.0
      %673 = vmatpush2.msra.mxu0 0.0
      %674 = vmatprep.subr.mxu0 0.0
      %675 = vmatpush2.msra.mxu0 0.0
      %676 = vmatprep.subr.mxu0 0.0
      %677 = vmatpush2.msra.mxu0 0.0
      %678 = vmatprep.subr.mxu0 0.0
      %679 = vmatpush2.msra.mxu0 0.0
      %680 = vmatprep.subr.mxu0 0.0
      %681 = vmatpush2.msra.mxu0 0.0
      %682 = vmatprep.subr.mxu0 0.0
      %683 = vmatpush2.msra.mxu0 0.0
      %684 = vmatprep.subr.mxu0 0.0
      %685 = vmatpush2.msra.mxu0 0.0
      %686 = vmatprep.subr.mxu0 0.0
      %687 = vmatpush2.msra.mxu0 0.0
      %688 = vmatprep.subr.mxu0 0.0
      %689 = vmatpush2.msra.mxu0 0.0
      %690 = vmatprep.subr.mxu0 0.0
      %691 = vmatpush2.msra.mxu0 0.0
      %692 = vmatprep.subr.mxu0 0.0
      %693 = vmatpush2.msra.mxu0 0.0
      %694 = vmatprep.subr.mxu0 0.0
      %695 = vmatpush2.msra.mxu0 0.0
      %696 = vmatprep.subr.mxu0 0.0
      %697 = vmatpush2.msra.mxu0 0.0
      %698 = vmatprep.subr.mxu0 0.0
      %699 = vmatpush2.msra.mxu0 0.0
      %700 = vmatprep.mubr.f32.mxu0 0.0
      %701 = vmatmul.mubr.f32.gmra.mxu0 %v610
      %v702 = vpop.f32.mrf.mxu0
      %v703 = vadd.f32 %v571, %v702
      %v704 = vpop.f32.mrf.mxu0
      %705 = vmatprep.mubr.f32.mxu0 0.0
      %706 = vmatmul.mubr.f32.gmra.mxu0 %v613
      %v707 = vpop.f32.mrf.mxu0
      %v708 = vadd.f32 %v576, %v707
      %v709 = vpop.f32.mrf.mxu0
      %710 = vmatprep.mubr.f32.mxu0 0.0
      %711 = vmatmul.mubr.f32.gmra.mxu0 %v616
      %v712 = vpop.f32.mrf.mxu0
      %v713 = vadd.f32 %v581, %v712
      %v714 = vpop.f32.mrf.mxu0
      %715 = vmatprep.mubr.f32.mxu0 0.0
      %716 = vmatmul.mubr.f32.gmra.mxu0 %v619
      %v717 = vpop.f32.mrf.mxu0
      %v718 = vadd.f32 %v586, %v717
      %v719 = vpop.f32.mrf.mxu0
      %720 = vmatprep.mubr.f32.mxu0 0.0
      %721 = vmatmul.mubr.f32.gmra.mxu0 %v622
      %v722 = vpop.f32.mrf.mxu0
      %v723 = vadd.f32 %v591, %v722
      %v724 = vpop.f32.mrf.mxu0
      %725 = vmatprep.mubr.f32.mxu0 0.0
      %726 = vmatmul.mubr.f32.gmra.mxu0 %v625
      %v727 = vpop.f32.mrf.mxu0
      %v728 = vadd.f32 %v596, %v727
      %v729 = vpop.f32.mrf.mxu0
      %730 = vmatprep.mubr.f32.mxu0 0.0
      %731 = vmatmul.mubr.f32.gmra.mxu0 %v628
      %v732 = vpop.f32.mrf.mxu0
      %v733 = vadd.f32 %v601, %v732
      %v734 = vpop.f32.mrf.mxu0
      %735 = vmatprep.mubr.f32.mxu0 0.0
      %736 = vmatmul.mubr.f32.gmra.mxu0 %v631
      %v737 = vpop.f32.mrf.mxu0
      %v738 = vadd.f32 %v606, %v737
      %v739 = vpop.f32.mrf.mxu0
      %740 = vdwg.mxu0
      %s741 = scalar_lea.vmem [#allocation2], 32
      %v742 = vld [vmem:[%s741] sm:$0xff]
      %v743 = vld [vmem:[%s741 + $0x10] sm:$0xff]
      %v744 = vld [vmem:[%s741 + $0x20] sm:$0xff]
      %v745 = vld [vmem:[%s741 + $0x30] sm:$0xff]
      %v746 = vld [vmem:[%s741 + $0x40] sm:$0xff]
      %v747 = vld [vmem:[%s741 + $0x50] sm:$0xff]
      %v748 = vld [vmem:[%s741 + $0x60] sm:$0xff]
      %v749 = vld [vmem:[%s741 + $0x70] sm:$0xff]
      %v750 = vld [vmem:[%s741 + $0x1] sm:$0xff]
      %v751 = vld [vmem:[%s741 + $0x11] sm:$0xff]
      %v752 = vld [vmem:[%s741 + $0x21] sm:$0xff]
      %v753 = vld [vmem:[%s741 + $0x31] sm:$0xff]
      %v754 = vld [vmem:[%s741 + $0x41] sm:$0xff]
      %v755 = vld [vmem:[%s741 + $0x51] sm:$0xff]
      %v756 = vld [vmem:[%s741 + $0x61] sm:$0xff]
      %v757 = vld [vmem:[%s741 + $0x71] sm:$0xff]
      %v758 = vld [vmem:[%s741 + $0x2] sm:$0xff]
      %v759 = vld [vmem:[%s741 + $0x12] sm:$0xff]
      %v760 = vld [vmem:[%s741 + $0x22] sm:$0xff]
      %v761 = vld [vmem:[%s741 + $0x32] sm:$0xff]
      %v762 = vld [vmem:[%s741 + $0x42] sm:$0xff]
      %v763 = vld [vmem:[%s741 + $0x52] sm:$0xff]
      %v764 = vld [vmem:[%s741 + $0x62] sm:$0xff]
      %v765 = vld [vmem:[%s741 + $0x72] sm:$0xff]
      %774 = vrot.lane.b32.xlu0 %v750, 2
      %v775 = vpop.permute.xlu0 %774
      %776 = vrot.lane.b32.xlu0 %v751, 2
      %v777 = vpop.permute.xlu0 %776
      %778 = vrot.lane.b32.xlu0 %v752, 2
      %v779 = vpop.permute.xlu0 %778
      %780 = vrot.lane.b32.xlu0 %v753, 2
      %v781 = vpop.permute.xlu0 %780
      %782 = vrot.lane.b32.xlu0 %v754, 2
      %v783 = vpop.permute.xlu0 %782
      %784 = vrot.lane.b32.xlu0 %v755, 2
      %v785 = vpop.permute.xlu0 %784
      %786 = vrot.lane.b32.xlu0 %v756, 2
      %v787 = vpop.permute.xlu0 %786
      %788 = vrot.lane.b32.xlu0 %v757, 2
      %v789 = vpop.permute.xlu0 %788
      %806 = vrot.lane.b32.xlu0 %v758, 4
      %v807 = vpop.permute.xlu0 %806
      %808 = vrot.lane.b32.xlu0 %v759, 4
      %v809 = vpop.permute.xlu0 %808
      %810 = vrot.lane.b32.xlu0 %v760, 4
      %v811 = vpop.permute.xlu0 %810
      %812 = vrot.lane.b32.xlu0 %v761, 4
      %v813 = vpop.permute.xlu0 %812
      %814 = vrot.lane.b32.xlu0 %v762, 4
      %v815 = vpop.permute.xlu0 %814
      %816 = vrot.lane.b32.xlu0 %v763, 4
      %v817 = vpop.permute.xlu0 %816
      %818 = vrot.lane.b32.xlu0 %v764, 4
      %v819 = vpop.permute.xlu0 %818
      %820 = vrot.lane.b32.xlu0 %v765, 4
      %v821 = vpop.permute.xlu0 %820
      %v830 = vsel %vm218, %v742, %v775
      %v831 = vsel %vm218, %v743, %v777
      %v832 = vsel %vm218, %v744, %v779
      %v833 = vsel %vm218, %v745, %v781
      %v834 = vsel %vm218, %v746, %v783
      %v835 = vsel %vm218, %v747, %v785
      %v836 = vsel %vm218, %v748, %v787
      %v837 = vsel %vm218, %v749, %v789
      %v838 = vsel %vm359, %v830, %v807
      %v839 = vsel %vm359, %v831, %v809
      %v840 = vsel %vm359, %v832, %v811
      %v841 = vsel %vm359, %v833, %v813
      %v842 = vsel %vm359, %v834, %v815
      %v843 = vsel %vm359, %v835, %v817
      %v844 = vsel %vm359, %v836, %v819
      %v845 = vsel %vm359, %v837, %v821
      %s846 = scalar_lea.vmem %s1, 16
      %v847 = vld [vmem:[%s846] sm:$0x3f]
      %v849 = vsel %vm475, %v838, 0
      %v852 = vsel %vm475, %v839, 0
      %v855 = vsel %vm475, %v840, 0
      %v858 = vsel %vm475, %v841, 0
      %v861 = vsel %vm475, %v842, 0
      %v864 = vsel %vm475, %v843, 0
      %v867 = vsel %vm475, %v844, 0
      %v870 = vsel %vm475, %v845, 0
      %v873 = vsel %vm500, %v847, 0
      %875 = vmatprep.subr.mxu0 0.0
      %876 = vmatpush1.msra.mxu0 0.0
      %877 = vmatprep.subr.mxu0 0.0
      %878 = vmatpush1.msra.mxu0 0.0
      %879 = vmatprep.subr.mxu0 0.0
      %880 = vmatpush1.msra.mxu0 0.0
      %881 = vmatprep.subr.mxu0 0.0
      %882 = vmatpush1.msra.mxu0 0.0
      %883 = vmatprep.subr.mxu0 0.0
      %884 = vmatpush1.msra.mxu0 0.0
      %885 = vmatprep.subr.mxu0 0.0
      %886 = vmatpush1.msra.mxu0 0.0
      %887 = vmatprep.subr.mxu0 0.0
      %888 = vmatpush1.msra.mxu0 0.0
      %889 = vmatprep.subr.mxu0 0.0
      %890 = vmatpush1.msra.mxu0 0.0
      %891 = vmatprep.subr.mxu0 0.0
      %892 = vmatpush1.msra.mxu0 0.0
      %893 = vmatprep.subr.mxu0 0.0
      %894 = vmatpush1.msra.mxu0 0.0
      %895 = vmatprep.subr.mxu0 0.0
      %896 = vmatpush1.msra.mxu0 0.0
      %897 = vmatprep.subr.mxu0 0.0
      %898 = vmatpush1.msra.mxu0 0.0
      %899 = vmatprep.subr.mxu0 0.0
      %900 = vmatpush1.msra.mxu0 0.0
      %901 = vmatprep.subr.mxu0 0.0
      %902 = vmatpush1.msra.mxu0 0.0
      %903 = vmatprep.subr.mxu0 0.0
      %904 = vmatpush1.msra.mxu0 0.0
      %905 = vmatprep.subr.mxu0 0.0
      %906 = vmatpush1.msra.mxu0 %v873
      %907 = vmatprep.subr.mxu0 0.0
      %908 = vmatpush2.msra.mxu0 0.0
      %909 = vmatprep.subr.mxu0 0.0
      %910 = vmatpush2.msra.mxu0 0.0
      %911 = vmatprep.subr.mxu0 0.0
      %912 = vmatpush2.msra.mxu0 0.0
      %913 = vmatprep.subr.mxu0 0.0
      %914 = vmatpush2.msra.mxu0 0.0
      %915 = vmatprep.subr.mxu0 0.0
      %916 = vmatpush2.msra.mxu0 0.0
      %917 = vmatprep.subr.mxu0 0.0
      %918 = vmatpush2.msra.mxu0 0.0
      %919 = vmatprep.subr.mxu0 0.0
      %920 = vmatpush2.msra.mxu0 0.0
      %921 = vmatprep.subr.mxu0 0.0
      %922 = vmatpush2.msra.mxu0 0.0
      %923 = vmatprep.subr.mxu0 0.0
      %924 = vmatpush2.msra.mxu0 0.0
      %925 = vmatprep.subr.mxu0 0.0
      %926 = vmatpush2.msra.mxu0 0.0
      %927 = vmatprep.subr.mxu0 0.0
      %928 = vmatpush2.msra.mxu0 0.0
      %929 = vmatprep.subr.mxu0 0.0
      %930 = vmatpush2.msra.mxu0 0.0
      %931 = vmatprep.subr.mxu0 0.0
      %932 = vmatpush2.msra.mxu0 0.0
      %933 = vmatprep.subr.mxu0 0.0
      %934 = vmatpush2.msra.mxu0 0.0
      %935 = vmatprep.subr.mxu0 0.0
      %936 = vmatpush2.msra.mxu0 0.0
      %937 = vmatprep.subr.mxu0 0.0
      %938 = vmatpush2.msra.mxu0 0.0
      %939 = vmatprep.mubr.f32.mxu0 0.0
      %940 = vmatmul.mubr.f32.gmra.mxu0 %v849
      %v941 = vpop.f32.mrf.mxu0
      %v942 = vadd.f32 0.0, %v941
      %v943 = vpop.f32.mrf.mxu0
      %944 = vmatprep.mubr.f32.mxu0 0.0
      %945 = vmatmul.mubr.f32.gmra.mxu0 %v852
      %v946 = vpop.f32.mrf.mxu0
      %v947 = vadd.f32 0.0, %v946
      %v948 = vpop.f32.mrf.mxu0
      %949 = vmatprep.mubr.f32.mxu0 0.0
      %950 = vmatmul.mubr.f32.gmra.mxu0 %v855
      %v951 = vpop.f32.mrf.mxu0
      %v952 = vadd.f32 0.0, %v951
      %v953 = vpop.f32.mrf.mxu0
      %954 = vmatprep.mubr.f32.mxu0 0.0
      %955 = vmatmul.mubr.f32.gmra.mxu0 %v858
      %v956 = vpop.f32.mrf.mxu0
      %v957 = vadd.f32 0.0, %v956
      %v958 = vpop.f32.mrf.mxu0
      %959 = vmatprep.mubr.f32.mxu0 0.0
      %960 = vmatmul.mubr.f32.gmra.mxu0 %v861
      %v961 = vpop.f32.mrf.mxu0
      %v962 = vadd.f32 0.0, %v961
      %v963 = vpop.f32.mrf.mxu0
      %964 = vmatprep.mubr.f32.mxu0 0.0
      %965 = vmatmul.mubr.f32.gmra.mxu0 %v864
      %v966 = vpop.f32.mrf.mxu0
      %v967 = vadd.f32 0.0, %v966
      %v968 = vpop.f32.mrf.mxu0
      %969 = vmatprep.mubr.f32.mxu0 0.0
      %970 = vmatmul.mubr.f32.gmra.mxu0 %v867
      %v971 = vpop.f32.mrf.mxu0
      %v972 = vadd.f32 0.0, %v971
      %v973 = vpop.f32.mrf.mxu0
      %974 = vmatprep.mubr.f32.mxu0 0.0
      %975 = vmatmul.mubr.f32.gmra.mxu0 %v870
      %v976 = vpop.f32.mrf.mxu0
      %v977 = vadd.f32 0.0, %v976
      %v978 = vpop.f32.mrf.mxu0
      %979 = vdwg.mxu0
      %v980 = vadd.f32 %v703, %v942
      %v981 = vadd.f32 %v708, %v947
      %v982 = vadd.f32 %v713, %v952
      %v983 = vadd.f32 %v718, %v957
      %v984 = vadd.f32 %v723, %v962
      %v985 = vadd.f32 %v728, %v967
      %v986 = vadd.f32 %v733, %v972
      %v987 = vadd.f32 %v738, %v977
      %v988 = vld [vmem:[%s2] sm:$0x1]
      %v990 = vlaneseq
      %v991 = vshrl.u32 %v990, 7
      %v992 = vsub.s32 0, %v991
      %v993 = vrot.slane %v988, %v992
      %v995 = vadd.f32 %v980, %v993
      %v996 = vadd.f32 %v981, %v993
      %v997 = vadd.f32 %v982, %v993
      %v998 = vadd.f32 %v983, %v993
      %v999 = vadd.f32 %v984, %v993
      %v1000 = vadd.f32 %v985, %v993
      %v1001 = vadd.f32 %v986, %v993
      %v1002 = vadd.f32 %v987, %v993
      %v1003 = vld [vmem:[%s212] sm:$0xff]
      %v1004 = vld [vmem:[%s212 + $0x8] sm:$0xff]
      %v1005 = vld [vmem:[%s212 + $0x10] sm:$0xff]
      %v1006 = vld [vmem:[%s212 + $0x18] sm:$0xff]
      %v1007 = vld [vmem:[%s212 + $0x20] sm:$0xff]
      %v1008 = vld [vmem:[%s212 + $0x28] sm:$0xff]
      %v1009 = vld [vmem:[%s212 + $0x30] sm:$0xff]
      %v1010 = vld [vmem:[%s212 + $0x38] sm:$0xff]
      %v1011 = vadd.f32 %v995, %v1003
      %v1012 = vadd.f32 %v996, %v1004
      %v1013 = vadd.f32 %v997, %v1005
      %v1014 = vadd.f32 %v998, %v1006
      %v1015 = vadd.f32 %v999, %v1007
      %v1016 = vadd.f32 %v1000, %v1008
      %v1017 = vadd.f32 %v1001, %v1009
      %v1018 = vadd.f32 %v1002, %v1010
      %1019 = vst.msk [vmem:[%s217] sm:$0xff] %vm218, %v1011
      %1020 = vst.msk [vmem:[%s217 + $0x8] sm:$0xff] %vm218, %v1012
      %1021 = vst.msk [vmem:[%s217 + $0x10] sm:$0xff] %vm218, %v1013
      %1022 = vst.msk [vmem:[%s217 + $0x18] sm:$0xff] %vm218, %v1014
      %1023 = vst.msk [vmem:[%s217 + $0x20] sm:$0xff] %vm218, %v1015
      %1024 = vst.msk [vmem:[%s217 + $0x28] sm:$0xff] %vm218, %v1016
      %1025 = vst.msk [vmem:[%s217 + $0x30] sm:$0xff] %vm218, %v1017
      %1026 = vst.msk [vmem:[%s217 + $0x38] sm:$0xff] %vm218, %v1018
      %p1027 = scmp.lt.s32.totalorder %s15, 1
      %s1028 = scalar_select %p1027, %s15, 1
      %s1029 = smul.addr %s1028, 8
      %s1030 = smul.addr %s1029, 8
      %s1031 = scalar_lea.vmem %s4, %s1030
      // Predicated region
      $region37: #{octave_conv_forward.7} parent=35 // pred_check
        %p1032 = pneg %p127
      $region38: #{octave_conv_forward.7} parent=35 // pred_check_branch
        %1034 = sbr.rel (%p1032) target = $region40
      $region39: #{octave_conv_forward.7} parent=35 // pred_region
        _
      $region40: #{octave_conv_forward.7} parent=35 // pred_fallthru
        _
    $region36: #{octave_conv_forward.7} parent=5 // pred_fallthru
      _
    %p1035 = scmp.le.s32.totalorder 2, %s10
    // Predicated region
    $region41: #{octave_conv_forward.7} parent=5 // pred_check
      %p1036 = pneg %p1035
    $region42: #{octave_conv_forward.7} parent=5 // pred_check_branch
      %1038 = sbr.rel (%p1036) target = $region44
    $region43: #{octave_conv_forward.7} parent=5 // pred_region
      %s1039 = ssub.s32 %s10, 2
      // Predicated region
      $region45: #{octave_conv_forward.7} parent=43 // pred_check
        %p1040 = pneg %p133
      $region46: #{octave_conv_forward.7} parent=43 // pred_check_branch
        %1042 = sbr.rel (%p1040) target = $region48
      $region47: #{octave_conv_forward.7} parent=43 // pred_region
        %p1043 = scmp.lt.s32.totalorder %s16, 1
        %s1044 = scalar_select %p1043, %s16, 1
        %s1045 = smul.addr %s1044, 8
        %s1046 = smul.addr %s1045, 8
        %s1047 = scalar_lea.vmem %s4, %s1046
      $region48: #{octave_conv_forward.7} parent=43 // pred_fallthru
        _
    $region44: #{octave_conv_forward.7} parent=5 // pred_fallthru
      _
  $region6: #{octave_conv_forward.7} parent=0 // loop_footer
    %s14 = sadd.s32 1, %s10
  $region7: #{octave_conv_forward.7} parent=0 // loop_footer_branch
    %9 = sbr.rel target = $region3
  $region8: #{octave_conv_forward.7} parent=0 // loop_exit
    _

</llo_original>
